<compile_context>
chip_gen: v7x
topology: tpu7x:2x2x1
jax: 0.10.0
libtpu: 0.0.40
codegen_flags: <defaults>
</compile_context>

<pallas_src>
import functools

import jax
import jax.numpy as jnp
from jax.experimental import pallas as pl
from jax.experimental.pallas import tpu as pltpu


# ----------------------------------------------------------------------------
# Per-(batch, layer) kernel.  grid = (B, L); the activation is carried across
# the "arbitrary" layer axis in a VMEM scratch buffer.
# ----------------------------------------------------------------------------
def _decoder_layer_kernel(
    x_ref, enc_ref, smask_ref, cmask_ref,
    s_wqkv_ref, s_bqkv_ref, s_wo_ref, s_bo_ref, s_g_ref, s_b_ref,
    c_wq_ref, c_bq_ref, c_wkv_ref, c_bkv_ref, c_wo_ref, c_bo_ref, c_g_ref, c_b_ref,
    f_w1_ref, f_b1_ref, f_w2_ref, f_b2_ref, f_g_ref, f_b_ref,
    out_ref, sattn_ref, cattn_ref,
    x_scr,
    *, num_heads, head_dim, eps, mxu_dtype, approx_recip):
    l = pl.program_id(1)
    S = x_ref.shape[1]
    H = num_heads
    dh = head_dim
    D = H * dh
    scale = jnp.float32(1.0 / (float(dh) ** 0.5))

    # ---- carry init: load the decoder input stream once, at the first layer
    @pl.when(l == 0)
    def _():
        x_scr[...] = x_ref[0].astype(jnp.float32)

    x = x_scr[...]        # (S, D) f32 residual stream
    enc = enc_ref[0]      # (S, D) encoder output

    # Additive masks (0 = visible, -1e9 = masked), computed once per grid step.
    s_add = jnp.where(smask_ref[0, 0] == 0.0, jnp.float32(-1e9), jnp.float32(0.0))
    c_add = jnp.where(cmask_ref[0, 0] == 0.0, jnp.float32(-1e9), jnp.float32(0.0))

    def matmul(a, w_ref, b_ref):
        # Weights already hold mxu_dtype (pre-cast in wrapper); f32 accumulation.
        return jnp.dot(a.astype(mxu_dtype), w_ref[0],
                       preferred_element_type=jnp.float32) + b_ref[0]

    def layer_norm(v, g_ref, b_ref):
        # PyTorch LayerNorm: biased variance, eps inside rsqrt.  All f32.
        m = jnp.mean(v, axis=-1, keepdims=True)
        var = jnp.mean((v - m) ** 2, axis=-1, keepdims=True)
        return (v - m) * jax.lax.rsqrt(var + eps) * g_ref[0] + b_ref[0]

    def split_heads(mat2d):
        # (S, D) -> (H, S, dh): one reshape + one leading-axis transpose
        # (no per-head slice/stack loop).
        return jnp.transpose(mat2d.reshape(S, H, dh), (1, 0, 2))

    def merge_heads(ctx):
        # (H, S, dh) -> (S, D)
        return jnp.transpose(ctx, (1, 0, 2)).reshape(S, D)

    def attention(q, k, v, add_mask):
        q3 = split_heads(q).astype(mxu_dtype)
        k3 = split_heads(k).astype(mxu_dtype)
        v3 = split_heads(v).astype(mxu_dtype)
        # Batched over heads: one MXU contraction for scores, one for context.
        scores = jnp.einsum('hqd,hkd->hqk', q3, k3,
                            preferred_element_type=jnp.float32) * scale
        scores = scores + add_mask[None]
        scores = scores - jnp.max(scores, axis=-1, keepdims=True)
        e = jnp.exp(scores)
        denom = jnp.sum(e, axis=-1, keepdims=True)
        # approx=True moves the divide onto the otherwise idle EUP slot;
        # default False keeps attention rows exactly normalised (torch parity).
        p = e * pl.reciprocal(denom, approx=approx_recip)
        ctx = jnp.einsum('hqk,hkd->hqd', p.astype(mxu_dtype), v3,
                         preferred_element_type=jnp.float32)
        return p, merge_heads(ctx)

    # ---- masked self-attention (fused Q|K|V projection) + residual + LN ----
    qkv = matmul(x, s_wqkv_ref, s_bqkv_ref)                     # (S, 3D)
    p, ctx = attention(qkv[:, :D], qkv[:, D:2 * D], qkv[:, 2 * D:], s_add)
    sattn_ref[0, 0] = p.astype(sattn_ref.dtype)                 # one (H,S,S) store
    x = layer_norm(x + matmul(ctx, s_wo_ref, s_bo_ref), s_g_ref, s_b_ref)

    # ---- cross-attention over encoder output (fused K|V projection) ----
    q = matmul(x, c_wq_ref, c_bq_ref)                           # (S, D)
    kv = matmul(enc, c_wkv_ref, c_bkv_ref)                      # (S, 2D)
    p, ctx = attention(q, kv[:, :D], kv[:, D:], c_add)
    cattn_ref[0, 0] = p.astype(cattn_ref.dtype)
    x = layer_norm(x + matmul(ctx, c_wo_ref, c_bo_ref), c_g_ref, c_b_ref)

    # ---- position-wise FFN (Linear -> ReLU -> Linear) + residual + LN ----
    hidden = jnp.maximum(matmul(x, f_w1_ref, f_b1_ref), 0.0)
    y = matmul(hidden, f_w2_ref, f_b2_ref)
    x = layer_norm(x + y, f_g_ref, f_b_ref)

    # carry to next layer; emit final output at the last layer
    x_scr[...] = x

    @pl.when(l == pl.num_programs(1) - 1)
    def _():
        out_ref[0] = x.astype(out_ref.dtype)


# ----------------------------------------------------------------------------
# Wrapper: one pallas_call, grid over (batch, layer) with per-layer streaming
# ----------------------------------------------------------------------------
_WEIGHT_ORDER = (
    "self_wqkv", "self_bqkv", "self_wo", "self_bo", "self_ln_g", "self_ln_b",
    "cross_wq", "cross_bq", "cross_wkv", "cross_bkv", "cross_wo", "cross_bo",
    "cross_ln_g", "cross_ln_b",
    "ffn_w1", "ffn_b1", "ffn_w2", "ffn_b2", "ffn_ln_g", "ffn_ln_b",
)
_MATRIX_WEIGHTS = frozenset(
    ("self_wqkv", "self_wo", "cross_wq", "cross_wkv", "cross_wo",
     "ffn_w1", "ffn_w2"))


def decoder_forward(x, enc_output, params, self_mask=None, cross_mask=None, *,
                    num_heads, mxu_dtype=jnp.bfloat16, attn_dtype=jnp.float32,
                    approx_recip=False, vmem_limit_bytes=None):
    """Mirrors Decoder.forward: returns (output, self_attn_ws[list], cross_attn_ws[list]).

    mxu_dtype:  dtype of MXU operands (weights pre-cast once in the wrapper,
                activations cast in-kernel).  bfloat16 gives ~4x MXU throughput
                on v6e/v7x; use float32 for bit-faithful torch comparison.
    attn_dtype: dtype of the returned attention-probability tensors (bfloat16
                halves their HBM write traffic).
    """
    B, S, D = x.shape
    L = params["self_wqkv"].shape[0]
    H = num_heads
    head_dim = D // H

    if self_mask is None:
        self_mask = jnp.ones((B, 1, S, S), jnp.float32)
    if cross_mask is None:
        cross_mask = jnp.ones((B, 1, S, S), jnp.float32)
    self_mask = jnp.asarray(self_mask, jnp.float32)
    cross_mask = jnp.asarray(cross_mask, jnp.float32)

    # Pre-cast matrix weights to the MXU dtype ONCE (halves weight DMA bytes
    # and removes per-grid-step VPU casts).  Biases / LN params stay f32.
    weights = [params[k].astype(mxu_dtype) if k in _MATRIX_WEIGHTS else params[k]
               for k in _WEIGHT_ORDER]

    kernel = functools.partial(
        _decoder_layer_kernel, num_heads=H, head_dim=head_dim, eps=1e-5,
        mxu_dtype=mxu_dtype, approx_recip=approx_recip)

    def per_batch(shape):
        n = len(shape)
        return pl.BlockSpec((1,) + tuple(shape[1:]),
                            lambda b, l, _n=n: (b,) + (0,) * (_n - 1))

    def per_layer(shape):
        n = len(shape)
        return pl.BlockSpec((1,) + tuple(shape[1:]),
                            lambda b, l, _n=n: (l,) + (0,) * (_n - 1))

    in_specs = ([per_batch(x.shape), per_batch(enc_output.shape),
                 per_batch(self_mask.shape), per_batch(cross_mask.shape)]
                + [per_layer(w.shape) for w in weights])

    out_shape = (jax.ShapeDtypeStruct((B, S, D), jnp.float32),
                 jax.ShapeDtypeStruct((L, B, H, S, S), attn_dtype),
                 jax.ShapeDtypeStruct((L, B, H, S, S), attn_dtype))
    out_specs = (
        # output block stays resident across the (arbitrary) layer axis and is
        # written only at the last layer
        pl.BlockSpec((1, S, D), lambda b, l: (b, 0, 0)),
        # attention probs: one (H,S,S) block per layer -> per-layer writeback
        pl.BlockSpec((1, 1, H, S, S), lambda b, l: (l, b, 0, 0, 0)),
        pl.BlockSpec((1, 1, H, S, S), lambda b, l: (l, b, 0, 0, 0)),
    )

    out, sattn, cattn = pl.pallas_call(
        kernel,
        grid=(B, L),
        in_specs=in_specs,
        out_specs=out_specs,
        out_shape=out_shape,
        scratch_shapes=[pltpu.VMEM((S, D), jnp.float32)],   # layer-carried activation
        compiler_params=pltpu.CompilerParams(
            # batch axis sharded across v7x's 2 TensorCores (B>=2 keeps both
            # busy); layer axis is a sequential carry.
            dimension_semantics=("parallel", "arbitrary"),
            vmem_limit_bytes=vmem_limit_bytes),
    )(x, enc_output, self_mask, cross_mask, *weights)

    self_ws = [sattn[l] for l in range(L)]
    cross_ws = [cattn[l] for l in range(L)]
    return out, self_ws, cross_ws


# ----------------------------------------------------------------------------
# Deterministic parameter init (weights pre-stacked over layers, QKV/KV fused)
# ----------------------------------------------------------------------------
def init_params(key, d_model, num_heads, d_ff, num_layers):
    ks = jax.random.split(key, 7)
    L = num_layers

    def w(kk, fan_in, fan_out):
        return 0.02 * jax.random.normal(kk, (L, fan_in, fan_out), jnp.float32)

    zeros = lambda n: jnp.zeros((L, 1, n), jnp.float32)
    ones = lambda n: jnp.ones((L, 1, n), jnp.float32)

    return {
        # self-attention: Q|K|V fused along the output dim
        "self_wqkv": w(ks[0], d_model, 3 * d_model),
        "self_bqkv": zeros(3 * d_model),
        "self_wo": w(ks[1], d_model, d_model),
        "self_bo": zeros(d_model),
        "self_ln_g": ones(d_model),
        "self_ln_b": zeros(d_model),
        # cross-attention: Q from decoder stream, K|V fused from encoder stream
        "cross_wq": w(ks[2], d_model, d_model),
        "cross_bq": zeros(d_model),
        "cross_wkv": w(ks[3], d_model, 2 * d_model),
        "cross_bkv": zeros(2 * d_model),
        "cross_wo": w(ks[4], d_model, d_model),
        "cross_bo": zeros(d_model),
        "cross_ln_g": ones(d_model),
        "cross_ln_b": zeros(d_model),
        # position-wise FFN
        "ffn_w1": w(ks[5], d_model, d_ff),
        "ffn_b1": zeros(d_ff),
        "ffn_w2": w(ks[6], d_ff, d_model),
        "ffn_b2": zeros(d_model),
        "ffn_ln_g": ones(d_model),
        "ffn_ln_b": zeros(d_model),
    }


# ----------------------------------------------------------------------------
if __name__ == "__main__":
    # NOTE: demo sizes are tiny (below the (8,128) vreg tile); tune/benchmark
    # with S, D multiples of 128 and head_dim >= 64 for meaningful numbers.
    batch, seq, d_model, num_heads, d_ff, num_layers = 2, 8, 32, 4, 64, 2

    key = jax.random.PRNGKey(0)
    kx, ke, kp = jax.random.split(key, 3)
    x = jax.random.normal(kx, (batch, seq, d_model), jnp.float32)
    enc_out = jax.random.normal(ke, (batch, seq, d_model), jnp.float32)
    params = init_params(kp, d_model, num_heads, d_ff, num_layers)

    # self_mask: causal (0 = masked); cross_mask: None == all-visible
    causal = jnp.tril(jnp.ones((seq, seq), jnp.float32))
    self_mask = jnp.broadcast_to(causal, (batch, 1, seq, seq))
    cross_mask = None

    out, self_ws, cross_ws = decoder_forward(
        x, enc_out, params, self_mask, cross_mask,
        num_heads=num_heads,
        mxu_dtype=jnp.bfloat16,   # jnp.float32 for bit-faithful torch parity
        attn_dtype=jnp.float32,
        approx_recip=False)

    jax.block_until_ready(out)
    for wts in self_ws + cross_ws:
        jax.block_until_ready(wts)

    assert out.shape == (batch, seq, d_model)
    assert len(self_ws) == num_layers and len(cross_ws) == num_layers
    assert self_ws[0].shape == (batch, num_heads, seq, seq)
    # softmax rows must sum to 1
    assert abs(float(jnp.sum(self_ws[0][0, 0, 0, :])) - 1.0) < 1e-4
    assert abs(float(jnp.sum(cross_ws[-1][1, 2, 3, :])) - 1.0) < 1e-4
    # causal mask respected: strictly-upper-triangular self-attn probs are ~0
    upper = jnp.triu(jnp.ones((seq, seq), jnp.float32), k=1)
    assert float(jnp.max(jnp.abs(self_ws[0][0, 0] * upper))) < 1e-6
    print("KERNEL_OK")
</pallas_src>

<mosaic_0001>
module attributes {stable_mosaic.version = 11 : i64} {
  func.func @_decoder_layer_kernel(%arg0: i32, %arg1: i32, %arg2: memref<1x8x32xf32, #tpu.memory_space<vmem>>, %arg3: memref<1x8x32xf32, #tpu.memory_space<vmem>>, %arg4: memref<1x1x8x8xf32, #tpu.memory_space<vmem>>, %arg5: memref<1x1x8x8xf32, #tpu.memory_space<vmem>>, %arg6: memref<1x32x96xbf16, #tpu.memory_space<vmem>>, %arg7: memref<1x1x96xf32, #tpu.memory_space<vmem>>, %arg8: memref<1x32x32xbf16, #tpu.memory_space<vmem>>, %arg9: memref<1x1x32xf32, #tpu.memory_space<vmem>>, %arg10: memref<1x1x32xf32, #tpu.memory_space<vmem>>, %arg11: memref<1x1x32xf32, #tpu.memory_space<vmem>>, %arg12: memref<1x32x32xbf16, #tpu.memory_space<vmem>>, %arg13: memref<1x1x32xf32, #tpu.memory_space<vmem>>, %arg14: memref<1x32x64xbf16, #tpu.memory_space<vmem>>, %arg15: memref<1x1x64xf32, #tpu.memory_space<vmem>>, %arg16: memref<1x32x32xbf16, #tpu.memory_space<vmem>>, %arg17: memref<1x1x32xf32, #tpu.memory_space<vmem>>, %arg18: memref<1x1x32xf32, #tpu.memory_space<vmem>>, %arg19: memref<1x1x32xf32, #tpu.memory_space<vmem>>, %arg20: memref<1x32x64xbf16, #tpu.memory_space<vmem>>, %arg21: memref<1x1x64xf32, #tpu.memory_space<vmem>>, %arg22: memref<1x64x32xbf16, #tpu.memory_space<vmem>>, %arg23: memref<1x1x32xf32, #tpu.memory_space<vmem>>, %arg24: memref<1x1x32xf32, #tpu.memory_space<vmem>>, %arg25: memref<1x1x32xf32, #tpu.memory_space<vmem>>, %arg26: memref<1x8x32xf32, #tpu.memory_space<vmem>>, %arg27: memref<1x1x4x8x8xf32, #tpu.memory_space<vmem>>, %arg28: memref<1x1x4x8x8xf32, #tpu.memory_space<vmem>>, %arg29: memref<8x32xf32, #tpu.memory_space<vmem>>) attributes {dimension_semantics = [#tpu.dimension_semantics<parallel>, #tpu.dimension_semantics<arbitrary>], iteration_bounds = array<i64: 2, 2>, scalar_prefetch = 0 : i64, scratch_operands = 1 : i64, tpu.core_type = #tpu.core_type<tc>, window_params = [{transform_indices = @transform_0, window_bounds = array<i64: 1, 8, 32>}, {transform_indices = @transform_1, window_bounds = array<i64: 1, 8, 32>}, {transform_indices = @transform_2, window_bounds = array<i64: 1, 1, 8, 8>}, {transform_indices = @transform_3, window_bounds = array<i64: 1, 1, 8, 8>}, {transform_indices = @transform_4, window_bounds = array<i64: 1, 32, 96>}, {transform_indices = @transform_5, window_bounds = array<i64: 1, 1, 96>}, {transform_indices = @transform_6, window_bounds = array<i64: 1, 32, 32>}, {transform_indices = @transform_7, window_bounds = array<i64: 1, 1, 32>}, {transform_indices = @transform_8, window_bounds = array<i64: 1, 1, 32>}, {transform_indices = @transform_9, window_bounds = array<i64: 1, 1, 32>}, {transform_indices = @transform_10, window_bounds = array<i64: 1, 32, 32>}, {transform_indices = @transform_11, window_bounds = array<i64: 1, 1, 32>}, {transform_indices = @transform_12, window_bounds = array<i64: 1, 32, 64>}, {transform_indices = @transform_13, window_bounds = array<i64: 1, 1, 64>}, {transform_indices = @transform_14, window_bounds = array<i64: 1, 32, 32>}, {transform_indices = @transform_15, window_bounds = array<i64: 1, 1, 32>}, {transform_indices = @transform_16, window_bounds = array<i64: 1, 1, 32>}, {transform_indices = @transform_17, window_bounds = array<i64: 1, 1, 32>}, {transform_indices = @transform_18, window_bounds = array<i64: 1, 32, 64>}, {transform_indices = @transform_19, window_bounds = array<i64: 1, 1, 64>}, {transform_indices = @transform_20, window_bounds = array<i64: 1, 64, 32>}, {transform_indices = @transform_21, window_bounds = array<i64: 1, 1, 32>}, {transform_indices = @transform_22, window_bounds = array<i64: 1, 1, 32>}, {transform_indices = @transform_23, window_bounds = array<i64: 1, 1, 32>}, {transform_indices = @transform_24, window_bounds = array<i64: 1, 8, 32>}, {transform_indices = @transform_25, window_bounds = array<i64: 1, 1, 4, 8, 8>}, {transform_indices = @transform_26, window_bounds = array<i64: 1, 1, 4, 8, 8>}]} {
    %c0_i32 = arith.constant 0 : i32
    %0 = arith.cmpi eq, %arg1, %c0_i32 : i32
    %1 = arith.extui %0 : i1 to i32
    %c0_i32_0 = arith.constant 0 : i32
    %2 = arith.cmpi ne, %1, %c0_i32_0 : i32
    scf.if %2 {
      %c0_124 = arith.constant 0 : index
      %c0_125 = arith.constant 0 : index
      %c0_126 = arith.constant 0 : index
      %232 = vector.load %arg2[%c0_124, %c0_125, %c0_126] : memref<1x8x32xf32, #tpu.memory_space<vmem>>, vector<1x8x32xf32>
      %233 = vector.shape_cast %232 : vector<1x8x32xf32> to vector<8x32xf32>
      %c0_127 = arith.constant 0 : index
      %c0_128 = arith.constant 0 : index
      %234 = vector.load %arg29[%c0_127, %c0_128] : memref<8x32xf32, #tpu.memory_space<vmem>>, vector<8x32xf32>
      tpu.vector_store %arg29[%c0_127, %c0_128], %233 {strides = array<i32>} : memref<8x32xf32, #tpu.memory_space<vmem>>, vector<8x32xf32>,
    } else {
    }
    %c0 = arith.constant 0 : index
    %c0_1 = arith.constant 0 : index
    %3 = vector.load %arg29[%c0, %c0_1] : memref<8x32xf32, #tpu.memory_space<vmem>>, vector<8x32xf32>
    %c0_2 = arith.constant 0 : index
    %c0_3 = arith.constant 0 : index
    %c0_4 = arith.constant 0 : index
    %4 = vector.load %arg3[%c0_2, %c0_3, %c0_4] : memref<1x8x32xf32, #tpu.memory_space<vmem>>, vector<1x8x32xf32>
    %5 = vector.shape_cast %4 : vector<1x8x32xf32> to vector<8x32xf32>
    %c0_5 = arith.constant 0 : index
    %c0_6 = arith.constant 0 : index
    %c0_7 = arith.constant 0 : index
    %c0_8 = arith.constant 0 : index
    %6 = vector.load %arg4[%c0_5, %c0_6, %c0_7, %c0_8] : memref<1x1x8x8xf32, #tpu.memory_space<vmem>>, vector<1x1x8x8xf32>
    %7 = vector.shape_cast %6 : vector<1x1x8x8xf32> to vector<8x8xf32>
    %cst = arith.constant 0.000000e+00 : f32
    %8 = vector.broadcast %cst : f32 to vector<8x8xf32>
    %9 = arith.cmpf oeq, %7, %8 : vector<8x8xf32>
    %cst_9 = arith.constant -1.000000e+09 : f32
    %cst_10 = arith.constant 0.000000e+00 : f32
    %10 = vector.broadcast %cst_9 : f32 to vector<8x8xf32>
    %11 = vector.broadcast %cst_10 : f32 to vector<8x8xf32>
    %12 = arith.select %9, %10, %11 : vector<8x8xi1>, vector<8x8xf32>
    %c0_11 = arith.constant 0 : index
    %c0_12 = arith.constant 0 : index
    %c0_13 = arith.constant 0 : index
    %c0_14 = arith.constant 0 : index
    %13 = vector.load %arg5[%c0_11, %c0_12, %c0_13, %c0_14] : memref<1x1x8x8xf32, #tpu.memory_space<vmem>>, vector<1x1x8x8xf32>
    %14 = vector.shape_cast %13 : vector<1x1x8x8xf32> to vector<8x8xf32>
    %cst_15 = arith.constant 0.000000e+00 : f32
    %15 = vector.broadcast %cst_15 : f32 to vector<8x8xf32>
    %16 = arith.cmpf oeq, %14, %15 : vector<8x8xf32>
    %cst_16 = arith.constant -1.000000e+09 : f32
    %cst_17 = arith.constant 0.000000e+00 : f32
    %17 = vector.broadcast %cst_16 : f32 to vector<8x8xf32>
    %18 = vector.broadcast %cst_17 : f32 to vector<8x8xf32>
    %19 = arith.select %16, %17, %18 : vector<8x8xi1>, vector<8x8xf32>
    %20 = arith.truncf %3 : vector<8x32xf32> to vector<8x32xbf16>
    %c0_18 = arith.constant 0 : index
    %c0_19 = arith.constant 0 : index
    %c0_20 = arith.constant 0 : index
    %21 = vector.load %arg6[%c0_18, %c0_19, %c0_20] : memref<1x32x96xbf16, #tpu.memory_space<vmem>>, vector<1x32x96xbf16>
    %22 = vector.shape_cast %21 : vector<1x32x96xbf16> to vector<32x96xbf16>
    %cst_21 = arith.constant dense<0.000000e+00> : vector<8x96xf32>
    %23 = tpu.matmul %20, %22, %cst_21 {dimension_numbers = #tpu.dot_dimension_numbers<[1], [0], [0], [1], [0, 0, 1, 1], [], []>} : vector<8x32xbf16>, vector<32x96xbf16>, vector<8x96xf32> -> vector<8x96xf32>
    %c0_22 = arith.constant 0 : index
    %c0_23 = arith.constant 0 : index
    %c0_24 = arith.constant 0 : index
    %24 = vector.load %arg7[%c0_22, %c0_23, %c0_24] : memref<1x1x96xf32, #tpu.memory_space<vmem>>, vector<1x1x96xf32>
    %25 = vector.shape_cast %24 : vector<1x1x96xf32> to vector<1x96xf32>
    %26 = vector.broadcast %25 : vector<1x96xf32> to vector<8x96xf32>
    %27 = arith.addf %23, %26 : vector<8x96xf32>
    %28 = vector.extract_strided_slice %27 {offsets = [0, 0], sizes = [8, 32], strides = [1, 1]} : vector<8x96xf32> to vector<8x32xf32>
    %29 = vector.extract_strided_slice %27 {offsets = [0, 32], sizes = [8, 32], strides = [1, 1]} : vector<8x96xf32> to vector<8x32xf32>
    %30 = vector.extract_strided_slice %27 {offsets = [0, 64], sizes = [8, 32], strides = [1, 1]} : vector<8x96xf32> to vector<8x32xf32>
    %31 = vector.shape_cast %28 : vector<8x32xf32> to vector<8x4x8xf32>
    %32 = tpu.transpose %31, [1, 0, 2] : vector<8x4x8xf32> -> vector<4x8x8xf32>
    %33 = arith.truncf %32 : vector<4x8x8xf32> to vector<4x8x8xbf16>
    %34 = vector.shape_cast %29 : vector<8x32xf32> to vector<8x4x8xf32>
    %35 = tpu.transpose %34, [1, 0, 2] : vector<8x4x8xf32> -> vector<4x8x8xf32>
    %36 = arith.truncf %35 : vector<4x8x8xf32> to vector<4x8x8xbf16>
    %37 = vector.shape_cast %30 : vector<8x32xf32> to vector<8x4x8xf32>
    %38 = tpu.transpose %37, [1, 0, 2] : vector<8x4x8xf32> -> vector<4x8x8xf32>
    %39 = arith.truncf %38 : vector<4x8x8xf32> to vector<4x8x8xbf16>
    "tpu.trace_start"() <{level = 10 : i32, message = "hqd,hkd->hqk"}> : () -> ()
    %cst_25 = arith.constant dense<0.000000e+00> : vector<4x8x8xf32>
    %40 = tpu.matmul %33, %36, %cst_25 {dimension_numbers = #tpu.dot_dimension_numbers<[2], [2], [1], [1], [0, 0, 0, 1, 1, 1], [0], [0]>} : vector<4x8x8xbf16>, vector<4x8x8xbf16>, vector<4x8x8xf32> -> vector<4x8x8xf32>
    "tpu.trace_stop"() : () -> ()
    %cst_26 = arith.constant 0.353553385 : f32
    %41 = vector.broadcast %cst_26 : f32 to vector<4x8x8xf32>
    %42 = arith.mulf %40, %41 : vector<4x8x8xf32>
    %43 = vector.shape_cast %12 : vector<8x8xf32> to vector<1x8x8xf32>
    %44 = vector.broadcast %43 : vector<1x8x8xf32> to vector<4x8x8xf32>
    %45 = arith.addf %42, %44 : vector<4x8x8xf32>
    %cst_27 = arith.constant dense<0xFF800000> : vector<4x8xf32>
    %46 = vector.multi_reduction <maximumf>, %45, %cst_27 [2] : vector<4x8x8xf32> to vector<4x8xf32>
    %47 = vector.shape_cast %46 : vector<4x8xf32> to vector<4x8x1xf32>
    %48 = vector.broadcast %47 : vector<4x8x1xf32> to vector<4x8x8xf32>
    %49 = arith.subf %45, %48 : vector<4x8x8xf32>
    %50 = math.exp %49 : vector<4x8x8xf32>
    %cst_28 = arith.constant dense<0.000000e+00> : vector<4x8xf32>
    %51 = vector.multi_reduction <add>, %50, %cst_28 [2] : vector<4x8x8xf32> to vector<4x8xf32>
    %52 = vector.shape_cast %51 : vector<4x8xf32> to vector<4x8x1xf32>
    %53 = tpu.reciprocal %52 : vector<4x8x1xf32> -> vector<4x8x1xf32>
    %54 = vector.broadcast %53 : vector<4x8x1xf32> to vector<4x8x8xf32>
    %55 = arith.mulf %50, %54 : vector<4x8x8xf32>
    %56 = arith.truncf %55 : vector<4x8x8xf32> to vector<4x8x8xbf16>
    "tpu.trace_start"() <{level = 10 : i32, message = "hqk,hkd->hqd"}> : () -> ()
    %cst_29 = arith.constant dense<0.000000e+00> : vector<4x8x8xf32>
    %57 = tpu.matmul %56, %39, %cst_29 {dimension_numbers = #tpu.dot_dimension_numbers<[2], [1], [1], [2], [0, 0, 0, 1, 1, 2], [0], [0]>} : vector<4x8x8xbf16>, vector<4x8x8xbf16>, vector<4x8x8xf32> -> vector<4x8x8xf32>
    "tpu.trace_stop"() : () -> ()
    %58 = tpu.transpose %57, [1, 0, 2] : vector<4x8x8xf32> -> vector<8x4x8xf32>
    %59 = vector.shape_cast %58 : vector<8x4x8xf32> to vector<8x32xf32>
    %c0_30 = arith.constant 0 : index
    %c0_31 = arith.constant 0 : index
    %c0_32 = arith.constant 0 : index
    %c0_33 = arith.constant 0 : index
    %c0_34 = arith.constant 0 : index
    %60 = vector.load %arg27[%c0_30, %c0_31, %c0_32, %c0_33, %c0_34] : memref<1x1x4x8x8xf32, #tpu.memory_space<vmem>>, vector<1x1x4x8x8xf32>
    %61 = vector.shape_cast %60 : vector<1x1x4x8x8xf32> to vector<4x8x8xf32>
    %62 = vector.shape_cast %55 : vector<4x8x8xf32> to vector<1x1x4x8x8xf32>
    tpu.vector_store %arg27[%c0_30, %c0_31, %c0_32, %c0_33, %c0_34], %62 {strides = array<i32>} : memref<1x1x4x8x8xf32, #tpu.memory_space<vmem>>, vector<1x1x4x8x8xf32>,
    %63 = arith.truncf %59 : vector<8x32xf32> to vector<8x32xbf16>
    %c0_35 = arith.constant 0 : index
    %c0_36 = arith.constant 0 : index
    %c0_37 = arith.constant 0 : index
    %64 = vector.load %arg8[%c0_35, %c0_36, %c0_37] : memref<1x32x32xbf16, #tpu.memory_space<vmem>>, vector<1x32x32xbf16>
    %65 = vector.shape_cast %64 : vector<1x32x32xbf16> to vector<32x32xbf16>
    %cst_38 = arith.constant dense<0.000000e+00> : vector<8x32xf32>
    %66 = tpu.matmul %63, %65, %cst_38 {dimension_numbers = #tpu.dot_dimension_numbers<[1], [0], [0], [1], [0, 0, 1, 1], [], []>} : vector<8x32xbf16>, vector<32x32xbf16>, vector<8x32xf32> -> vector<8x32xf32>
    %c0_39 = arith.constant 0 : index
    %c0_40 = arith.constant 0 : index
    %c0_41 = arith.constant 0 : index
    %67 = vector.load %arg9[%c0_39, %c0_40, %c0_41] : memref<1x1x32xf32, #tpu.memory_space<vmem>>, vector<1x1x32xf32>
    %68 = vector.shape_cast %67 : vector<1x1x32xf32> to vector<1x32xf32>
    %69 = vector.broadcast %68 : vector<1x32xf32> to vector<8x32xf32>
    %70 = arith.addf %66, %69 : vector<8x32xf32>
    %71 = arith.addf %3, %70 : vector<8x32xf32>
    %cst_42 = arith.constant dense<0.000000e+00> : vector<8xf32>
    %72 = vector.multi_reduction <add>, %71, %cst_42 [1] : vector<8x32xf32> to vector<8xf32>
    %73 = vector.shape_cast %72 : vector<8xf32> to vector<8x1xf32>
    %cst_43 = arith.constant 3.200000e+01 : f32
    %74 = vector.broadcast %cst_43 : f32 to vector<8x1xf32>
    %75 = arith.divf %73, %74 : vector<8x1xf32>
    %76 = vector.broadcast %75 : vector<8x1xf32> to vector<8x32xf32>
    %77 = arith.subf %71, %76 : vector<8x32xf32>
    %78 = arith.mulf %77, %77 : vector<8x32xf32>
    %cst_44 = arith.constant dense<0.000000e+00> : vector<8xf32>
    %79 = vector.multi_reduction <add>, %78, %cst_44 [1] : vector<8x32xf32> to vector<8xf32>
    %80 = vector.shape_cast %79 : vector<8xf32> to vector<8x1xf32>
    %cst_45 = arith.constant 3.200000e+01 : f32
    %81 = vector.broadcast %cst_45 : f32 to vector<8x1xf32>
    %82 = arith.divf %80, %81 : vector<8x1xf32>
    %83 = vector.broadcast %75 : vector<8x1xf32> to vector<8x32xf32>
    %84 = arith.subf %71, %83 : vector<8x32xf32>
    %cst_46 = arith.constant 9.99999974E-6 : f32
    %85 = vector.broadcast %cst_46 : f32 to vector<8x1xf32>
    %86 = arith.addf %82, %85 : vector<8x1xf32>
    %87 = math.rsqrt %86 : vector<8x1xf32>
    %88 = vector.broadcast %87 : vector<8x1xf32> to vector<8x32xf32>
    %89 = arith.mulf %84, %88 : vector<8x32xf32>
    %c0_47 = arith.constant 0 : index
    %c0_48 = arith.constant 0 : index
    %c0_49 = arith.constant 0 : index
    %90 = vector.load %arg10[%c0_47, %c0_48, %c0_49] : memref<1x1x32xf32, #tpu.memory_space<vmem>>, vector<1x1x32xf32>
    %91 = vector.shape_cast %90 : vector<1x1x32xf32> to vector<1x32xf32>
    %92 = vector.broadcast %91 : vector<1x32xf32> to vector<8x32xf32>
    %93 = arith.mulf %89, %92 : vector<8x32xf32>
    %c0_50 = arith.constant 0 : index
    %c0_51 = arith.constant 0 : index
    %c0_52 = arith.constant 0 : index
    %94 = vector.load %arg11[%c0_50, %c0_51, %c0_52] : memref<1x1x32xf32, #tpu.memory_space<vmem>>, vector<1x1x32xf32>
    %95 = vector.shape_cast %94 : vector<1x1x32xf32> to vector<1x32xf32>
    %96 = vector.broadcast %95 : vector<1x32xf32> to vector<8x32xf32>
    %97 = arith.addf %93, %96 : vector<8x32xf32>
    %98 = arith.truncf %97 : vector<8x32xf32> to vector<8x32xbf16>
    %c0_53 = arith.constant 0 : index
    %c0_54 = arith.constant 0 : index
    %c0_55 = arith.constant 0 : index
    %99 = vector.load %arg12[%c0_53, %c0_54, %c0_55] : memref<1x32x32xbf16, #tpu.memory_space<vmem>>, vector<1x32x32xbf16>
    %100 = vector.shape_cast %99 : vector<1x32x32xbf16> to vector<32x32xbf16>
    %cst_56 = arith.constant dense<0.000000e+00> : vector<8x32xf32>
    %101 = tpu.matmul %98, %100, %cst_56 {dimension_numbers = #tpu.dot_dimension_numbers<[1], [0], [0], [1], [0, 0, 1, 1], [], []>} : vector<8x32xbf16>, vector<32x32xbf16>, vector<8x32xf32> -> vector<8x32xf32>
    %c0_57 = arith.constant 0 : index
    %c0_58 = arith.constant 0 : index
    %c0_59 = arith.constant 0 : index
    %102 = vector.load %arg13[%c0_57, %c0_58, %c0_59] : memref<1x1x32xf32, #tpu.memory_space<vmem>>, vector<1x1x32xf32>
    %103 = vector.shape_cast %102 : vector<1x1x32xf32> to vector<1x32xf32>
    %104 = vector.broadcast %103 : vector<1x32xf32> to vector<8x32xf32>
    %105 = arith.addf %101, %104 : vector<8x32xf32>
    %106 = arith.truncf %5 : vector<8x32xf32> to vector<8x32xbf16>
    %c0_60 = arith.constant 0 : index
    %c0_61 = arith.constant 0 : index
    %c0_62 = arith.constant 0 : index
    %107 = vector.load %arg14[%c0_60, %c0_61, %c0_62] : memref<1x32x64xbf16, #tpu.memory_space<vmem>>, vector<1x32x64xbf16>
    %108 = vector.shape_cast %107 : vector<1x32x64xbf16> to vector<32x64xbf16>
    %cst_63 = arith.constant dense<0.000000e+00> : vector<8x64xf32>
    %109 = tpu.matmul %106, %108, %cst_63 {dimension_numbers = #tpu.dot_dimension_numbers<[1], [0], [0], [1], [0, 0, 1, 1], [], []>} : vector<8x32xbf16>, vector<32x64xbf16>, vector<8x64xf32> -> vector<8x64xf32>
    %c0_64 = arith.constant 0 : index
    %c0_65 = arith.constant 0 : index
    %c0_66 = arith.constant 0 : index
    %110 = vector.load %arg15[%c0_64, %c0_65, %c0_66] : memref<1x1x64xf32, #tpu.memory_space<vmem>>, vector<1x1x64xf32>
    %111 = vector.shape_cast %110 : vector<1x1x64xf32> to vector<1x64xf32>
    %112 = vector.broadcast %111 : vector<1x64xf32> to vector<8x64xf32>
    %113 = arith.addf %109, %112 : vector<8x64xf32>
    %114 = vector.extract_strided_slice %113 {offsets = [0, 0], sizes = [8, 32], strides = [1, 1]} : vector<8x64xf32> to vector<8x32xf32>
    %115 = vector.extract_strided_slice %113 {offsets = [0, 32], sizes = [8, 32], strides = [1, 1]} : vector<8x64xf32> to vector<8x32xf32>
    %116 = vector.shape_cast %105 : vector<8x32xf32> to vector<8x4x8xf32>
    %117 = tpu.transpose %116, [1, 0, 2] : vector<8x4x8xf32> -> vector<4x8x8xf32>
    %118 = arith.truncf %117 : vector<4x8x8xf32> to vector<4x8x8xbf16>
    %119 = vector.shape_cast %114 : vector<8x32xf32> to vector<8x4x8xf32>
    %120 = tpu.transpose %119, [1, 0, 2] : vector<8x4x8xf32> -> vector<4x8x8xf32>
    %121 = arith.truncf %120 : vector<4x8x8xf32> to vector<4x8x8xbf16>
    %122 = vector.shape_cast %115 : vector<8x32xf32> to vector<8x4x8xf32>
    %123 = tpu.transpose %122, [1, 0, 2] : vector<8x4x8xf32> -> vector<4x8x8xf32>
    %124 = arith.truncf %123 : vector<4x8x8xf32> to vector<4x8x8xbf16>
    "tpu.trace_start"() <{level = 10 : i32, message = "hqd,hkd->hqk"}> : () -> ()
    %cst_67 = arith.constant dense<0.000000e+00> : vector<4x8x8xf32>
    %125 = tpu.matmul %118, %121, %cst_67 {dimension_numbers = #tpu.dot_dimension_numbers<[2], [2], [1], [1], [0, 0, 0, 1, 1, 1], [0], [0]>} : vector<4x8x8xbf16>, vector<4x8x8xbf16>, vector<4x8x8xf32> -> vector<4x8x8xf32>
    "tpu.trace_stop"() : () -> ()
    %cst_68 = arith.constant 0.353553385 : f32
    %126 = vector.broadcast %cst_68 : f32 to vector<4x8x8xf32>
    %127 = arith.mulf %125, %126 : vector<4x8x8xf32>
    %128 = vector.shape_cast %19 : vector<8x8xf32> to vector<1x8x8xf32>
    %129 = vector.broadcast %128 : vector<1x8x8xf32> to vector<4x8x8xf32>
    %130 = arith.addf %127, %129 : vector<4x8x8xf32>
    %cst_69 = arith.constant dense<0xFF800000> : vector<4x8xf32>
    %131 = vector.multi_reduction <maximumf>, %130, %cst_69 [2] : vector<4x8x8xf32> to vector<4x8xf32>
    %132 = vector.shape_cast %131 : vector<4x8xf32> to vector<4x8x1xf32>
    %133 = vector.broadcast %132 : vector<4x8x1xf32> to vector<4x8x8xf32>
    %134 = arith.subf %130, %133 : vector<4x8x8xf32>
    %135 = math.exp %134 : vector<4x8x8xf32>
    %cst_70 = arith.constant dense<0.000000e+00> : vector<4x8xf32>
    %136 = vector.multi_reduction <add>, %135, %cst_70 [2] : vector<4x8x8xf32> to vector<4x8xf32>
    %137 = vector.shape_cast %136 : vector<4x8xf32> to vector<4x8x1xf32>
    %138 = tpu.reciprocal %137 : vector<4x8x1xf32> -> vector<4x8x1xf32>
    %139 = vector.broadcast %138 : vector<4x8x1xf32> to vector<4x8x8xf32>
    %140 = arith.mulf %135, %139 : vector<4x8x8xf32>
    %141 = arith.truncf %140 : vector<4x8x8xf32> to vector<4x8x8xbf16>
    "tpu.trace_start"() <{level = 10 : i32, message = "hqk,hkd->hqd"}> : () -> ()
    %cst_71 = arith.constant dense<0.000000e+00> : vector<4x8x8xf32>
    %142 = tpu.matmul %141, %124, %cst_71 {dimension_numbers = #tpu.dot_dimension_numbers<[2], [1], [1], [2], [0, 0, 0, 1, 1, 2], [0], [0]>} : vector<4x8x8xbf16>, vector<4x8x8xbf16>, vector<4x8x8xf32> -> vector<4x8x8xf32>
    "tpu.trace_stop"() : () -> ()
    %143 = tpu.transpose %142, [1, 0, 2] : vector<4x8x8xf32> -> vector<8x4x8xf32>
    %144 = vector.shape_cast %143 : vector<8x4x8xf32> to vector<8x32xf32>
    %c0_72 = arith.constant 0 : index
    %c0_73 = arith.constant 0 : index
    %c0_74 = arith.constant 0 : index
    %c0_75 = arith.constant 0 : index
    %c0_76 = arith.constant 0 : index
    %145 = vector.load %arg28[%c0_72, %c0_73, %c0_74, %c0_75, %c0_76] : memref<1x1x4x8x8xf32, #tpu.memory_space<vmem>>, vector<1x1x4x8x8xf32>
    %146 = vector.shape_cast %145 : vector<1x1x4x8x8xf32> to vector<4x8x8xf32>
    %147 = vector.shape_cast %140 : vector<4x8x8xf32> to vector<1x1x4x8x8xf32>
    tpu.vector_store %arg28[%c0_72, %c0_73, %c0_74, %c0_75, %c0_76], %147 {strides = array<i32>} : memref<1x1x4x8x8xf32, #tpu.memory_space<vmem>>, vector<1x1x4x8x8xf32>,
    %148 = arith.truncf %144 : vector<8x32xf32> to vector<8x32xbf16>
    %c0_77 = arith.constant 0 : index
    %c0_78 = arith.constant 0 : index
    %c0_79 = arith.constant 0 : index
    %149 = vector.load %arg16[%c0_77, %c0_78, %c0_79] : memref<1x32x32xbf16, #tpu.memory_space<vmem>>, vector<1x32x32xbf16>
    %150 = vector.shape_cast %149 : vector<1x32x32xbf16> to vector<32x32xbf16>
    %cst_80 = arith.constant dense<0.000000e+00> : vector<8x32xf32>
    %151 = tpu.matmul %148, %150, %cst_80 {dimension_numbers = #tpu.dot_dimension_numbers<[1], [0], [0], [1], [0, 0, 1, 1], [], []>} : vector<8x32xbf16>, vector<32x32xbf16>, vector<8x32xf32> -> vector<8x32xf32>
    %c0_81 = arith.constant 0 : index
    %c0_82 = arith.constant 0 : index
    %c0_83 = arith.constant 0 : index
    %152 = vector.load %arg17[%c0_81, %c0_82, %c0_83] : memref<1x1x32xf32, #tpu.memory_space<vmem>>, vector<1x1x32xf32>
    %153 = vector.shape_cast %152 : vector<1x1x32xf32> to vector<1x32xf32>
    %154 = vector.broadcast %153 : vector<1x32xf32> to vector<8x32xf32>
    %155 = arith.addf %151, %154 : vector<8x32xf32>
    %156 = arith.addf %97, %155 : vector<8x32xf32>
    %cst_84 = arith.constant dense<0.000000e+00> : vector<8xf32>
    %157 = vector.multi_reduction <add>, %156, %cst_84 [1] : vector<8x32xf32> to vector<8xf32>
    %158 = vector.shape_cast %157 : vector<8xf32> to vector<8x1xf32>
    %cst_85 = arith.constant 3.200000e+01 : f32
    %159 = vector.broadcast %cst_85 : f32 to vector<8x1xf32>
    %160 = arith.divf %158, %159 : vector<8x1xf32>
    %161 = vector.broadcast %160 : vector<8x1xf32> to vector<8x32xf32>
    %162 = arith.subf %156, %161 : vector<8x32xf32>
    %163 = arith.mulf %162, %162 : vector<8x32xf32>
    %cst_86 = arith.constant dense<0.000000e+00> : vector<8xf32>
    %164 = vector.multi_reduction <add>, %163, %cst_86 [1] : vector<8x32xf32> to vector<8xf32>
    %165 = vector.shape_cast %164 : vector<8xf32> to vector<8x1xf32>
    %cst_87 = arith.constant 3.200000e+01 : f32
    %166 = vector.broadcast %cst_87 : f32 to vector<8x1xf32>
    %167 = arith.divf %165, %166 : vector<8x1xf32>
    %168 = vector.broadcast %160 : vector<8x1xf32> to vector<8x32xf32>
    %169 = arith.subf %156, %168 : vector<8x32xf32>
    %cst_88 = arith.constant 9.99999974E-6 : f32
    %170 = vector.broadcast %cst_88 : f32 to vector<8x1xf32>
    %171 = arith.addf %167, %170 : vector<8x1xf32>
    %172 = math.rsqrt %171 : vector<8x1xf32>
    %173 = vector.broadcast %172 : vector<8x1xf32> to vector<8x32xf32>
    %174 = arith.mulf %169, %173 : vector<8x32xf32>
    %c0_89 = arith.constant 0 : index
    %c0_90 = arith.constant 0 : index
    %c0_91 = arith.constant 0 : index
    %175 = vector.load %arg18[%c0_89, %c0_90, %c0_91] : memref<1x1x32xf32, #tpu.memory_space<vmem>>, vector<1x1x32xf32>
    %176 = vector.shape_cast %175 : vector<1x1x32xf32> to vector<1x32xf32>
    %177 = vector.broadcast %176 : vector<1x32xf32> to vector<8x32xf32>
    %178 = arith.mulf %174, %177 : vector<8x32xf32>
    %c0_92 = arith.constant 0 : index
    %c0_93 = arith.constant 0 : index
    %c0_94 = arith.constant 0 : index
    %179 = vector.load %arg19[%c0_92, %c0_93, %c0_94] : memref<1x1x32xf32, #tpu.memory_space<vmem>>, vector<1x1x32xf32>
    %180 = vector.shape_cast %179 : vector<1x1x32xf32> to vector<1x32xf32>
    %181 = vector.broadcast %180 : vector<1x32xf32> to vector<8x32xf32>
    %182 = arith.addf %178, %181 : vector<8x32xf32>
    %183 = arith.truncf %182 : vector<8x32xf32> to vector<8x32xbf16>
    %c0_95 = arith.constant 0 : index
    %c0_96 = arith.constant 0 : index
    %c0_97 = arith.constant 0 : index
    %184 = vector.load %arg20[%c0_95, %c0_96, %c0_97] : memref<1x32x64xbf16, #tpu.memory_space<vmem>>, vector<1x32x64xbf16>
    %185 = vector.shape_cast %184 : vector<1x32x64xbf16> to vector<32x64xbf16>
    %cst_98 = arith.constant dense<0.000000e+00> : vector<8x64xf32>
    %186 = tpu.matmul %183, %185, %cst_98 {dimension_numbers = #tpu.dot_dimension_numbers<[1], [0], [0], [1], [0, 0, 1, 1], [], []>} : vector<8x32xbf16>, vector<32x64xbf16>, vector<8x64xf32> -> vector<8x64xf32>
    %c0_99 = arith.constant 0 : index
    %c0_100 = arith.constant 0 : index
    %c0_101 = arith.constant 0 : index
    %187 = vector.load %arg21[%c0_99, %c0_100, %c0_101] : memref<1x1x64xf32, #tpu.memory_space<vmem>>, vector<1x1x64xf32>
    %188 = vector.shape_cast %187 : vector<1x1x64xf32> to vector<1x64xf32>
    %189 = vector.broadcast %188 : vector<1x64xf32> to vector<8x64xf32>
    %190 = arith.addf %186, %189 : vector<8x64xf32>
    %cst_102 = arith.constant 0.000000e+00 : f32
    %191 = vector.broadcast %cst_102 : f32 to vector<8x64xf32>
    %192 = arith.maximumf %190, %191 : vector<8x64xf32>
    %193 = arith.truncf %192 : vector<8x64xf32> to vector<8x64xbf16>
    %c0_103 = arith.constant 0 : index
    %c0_104 = arith.constant 0 : index
    %c0_105 = arith.constant 0 : index
    %194 = vector.load %arg22[%c0_103, %c0_104, %c0_105] : memref<1x64x32xbf16, #tpu.memory_space<vmem>>, vector<1x64x32xbf16>
    %195 = vector.shape_cast %194 : vector<1x64x32xbf16> to vector<64x32xbf16>
    %cst_106 = arith.constant dense<0.000000e+00> : vector<8x32xf32>
    %196 = tpu.matmul %193, %195, %cst_106 {dimension_numbers = #tpu.dot_dimension_numbers<[1], [0], [0], [1], [0, 0, 1, 1], [], []>} : vector<8x64xbf16>, vector<64x32xbf16>, vector<8x32xf32> -> vector<8x32xf32>
    %c0_107 = arith.constant 0 : index
    %c0_108 = arith.constant 0 : index
    %c0_109 = arith.constant 0 : index
    %197 = vector.load %arg23[%c0_107, %c0_108, %c0_109] : memref<1x1x32xf32, #tpu.memory_space<vmem>>, vector<1x1x32xf32>
    %198 = vector.shape_cast %197 : vector<1x1x32xf32> to vector<1x32xf32>
    %199 = vector.broadcast %198 : vector<1x32xf32> to vector<8x32xf32>
    %200 = arith.addf %196, %199 : vector<8x32xf32>
    %201 = arith.addf %182, %200 : vector<8x32xf32>
    %cst_110 = arith.constant dense<0.000000e+00> : vector<8xf32>
    %202 = vector.multi_reduction <add>, %201, %cst_110 [1] : vector<8x32xf32> to vector<8xf32>
    %203 = vector.shape_cast %202 : vector<8xf32> to vector<8x1xf32>
    %cst_111 = arith.constant 3.200000e+01 : f32
    %204 = vector.broadcast %cst_111 : f32 to vector<8x1xf32>
    %205 = arith.divf %203, %204 : vector<8x1xf32>
    %206 = vector.broadcast %205 : vector<8x1xf32> to vector<8x32xf32>
    %207 = arith.subf %201, %206 : vector<8x32xf32>
    %208 = arith.mulf %207, %207 : vector<8x32xf32>
    %cst_112 = arith.constant dense<0.000000e+00> : vector<8xf32>
    %209 = vector.multi_reduction <add>, %208, %cst_112 [1] : vector<8x32xf32> to vector<8xf32>
    %210 = vector.shape_cast %209 : vector<8xf32> to vector<8x1xf32>
    %cst_113 = arith.constant 3.200000e+01 : f32
    %211 = vector.broadcast %cst_113 : f32 to vector<8x1xf32>
    %212 = arith.divf %210, %211 : vector<8x1xf32>
    %213 = vector.broadcast %205 : vector<8x1xf32> to vector<8x32xf32>
    %214 = arith.subf %201, %213 : vector<8x32xf32>
    %cst_114 = arith.constant 9.99999974E-6 : f32
    %215 = vector.broadcast %cst_114 : f32 to vector<8x1xf32>
    %216 = arith.addf %212, %215 : vector<8x1xf32>
    %217 = math.rsqrt %216 : vector<8x1xf32>
    %218 = vector.broadcast %217 : vector<8x1xf32> to vector<8x32xf32>
    %219 = arith.mulf %214, %218 : vector<8x32xf32>
    %c0_115 = arith.constant 0 : index
    %c0_116 = arith.constant 0 : index
    %c0_117 = arith.constant 0 : index
    %220 = vector.load %arg24[%c0_115, %c0_116, %c0_117] : memref<1x1x32xf32, #tpu.memory_space<vmem>>, vector<1x1x32xf32>
    %221 = vector.shape_cast %220 : vector<1x1x32xf32> to vector<1x32xf32>
    %222 = vector.broadcast %221 : vector<1x32xf32> to vector<8x32xf32>
    %223 = arith.mulf %219, %222 : vector<8x32xf32>
    %c0_118 = arith.constant 0 : index
    %c0_119 = arith.constant 0 : index
    %c0_120 = arith.constant 0 : index
    %224 = vector.load %arg25[%c0_118, %c0_119, %c0_120] : memref<1x1x32xf32, #tpu.memory_space<vmem>>, vector<1x1x32xf32>
    %225 = vector.shape_cast %224 : vector<1x1x32xf32> to vector<1x32xf32>
    %226 = vector.broadcast %225 : vector<1x32xf32> to vector<8x32xf32>
    %227 = arith.addf %223, %226 : vector<8x32xf32>
    %c0_121 = arith.constant 0 : index
    %c0_122 = arith.constant 0 : index
    %228 = vector.load %arg29[%c0_121, %c0_122] : memref<8x32xf32, #tpu.memory_space<vmem>>, vector<8x32xf32>
    tpu.vector_store %arg29[%c0_121, %c0_122], %227 {strides = array<i32>} : memref<8x32xf32, #tpu.memory_space<vmem>>, vector<8x32xf32>,
    %c1_i32 = arith.constant 1 : i32
    %229 = arith.cmpi eq, %arg1, %c1_i32 : i32
    %230 = arith.extui %229 : i1 to i32
    %c0_i32_123 = arith.constant 0 : i32
    %231 = arith.cmpi ne, %230, %c0_i32_123 : i32
    scf.if %231 {
      %c0_124 = arith.constant 0 : index
      %c0_125 = arith.constant 0 : index
      %c0_126 = arith.constant 0 : index
      %232 = vector.load %arg26[%c0_124, %c0_125, %c0_126] : memref<1x8x32xf32, #tpu.memory_space<vmem>>, vector<1x8x32xf32>
      %233 = vector.shape_cast %232 : vector<1x8x32xf32> to vector<8x32xf32>
      %234 = vector.shape_cast %227 : vector<8x32xf32> to vector<1x8x32xf32>
      tpu.vector_store %arg26[%c0_124, %c0_125, %c0_126], %234 {strides = array<i32>} : memref<1x8x32xf32, #tpu.memory_space<vmem>>, vector<1x8x32xf32>,
    } else {
    }
    return
  }
  func.func @transform_0(%arg0: i32, %arg1: i32) -> (i32, i32, i32) {
    %c0_i32 = arith.constant 0 : i32
    %c0_i32_0 = arith.constant 0 : i32
    %c0_i32_1 = arith.constant 0 : i32
    return %arg0, %c0_i32, %c0_i32_0 : i32, i32, i32
  }
  func.func @transform_1(%arg0: i32, %arg1: i32) -> (i32, i32, i32) {
    %c0_i32 = arith.constant 0 : i32
    %c0_i32_0 = arith.constant 0 : i32
    %c0_i32_1 = arith.constant 0 : i32
    return %arg0, %c0_i32, %c0_i32_0 : i32, i32, i32
  }
  func.func @transform_2(%arg0: i32, %arg1: i32) -> (i32, i32, i32, i32) {
    %c0_i32 = arith.constant 0 : i32
    %c0_i32_0 = arith.constant 0 : i32
    %c0_i32_1 = arith.constant 0 : i32
    %c0_i32_2 = arith.constant 0 : i32
    return %arg0, %c0_i32, %c0_i32_0, %c0_i32_1 : i32, i32, i32, i32
  }
  func.func @transform_3(%arg0: i32, %arg1: i32) -> (i32, i32, i32, i32) {
    %c0_i32 = arith.constant 0 : i32
    %c0_i32_0 = arith.constant 0 : i32
    %c0_i32_1 = arith.constant 0 : i32
    %c0_i32_2 = arith.constant 0 : i32
    return %arg0, %c0_i32, %c0_i32_0, %c0_i32_1 : i32, i32, i32, i32
  }
  func.func @transform_4(%arg0: i32, %arg1: i32) -> (i32, i32, i32) {
    %c0_i32 = arith.constant 0 : i32
    %c0_i32_0 = arith.constant 0 : i32
    %c0_i32_1 = arith.constant 0 : i32
    return %arg1, %c0_i32, %c0_i32_0 : i32, i32, i32
  }
  func.func @transform_5(%arg0: i32, %arg1: i32) -> (i32, i32, i32) {
    %c0_i32 = arith.constant 0 : i32
    %c0_i32_0 = arith.constant 0 : i32
    %c0_i32_1 = arith.constant 0 : i32
    return %arg1, %c0_i32, %c0_i32_0 : i32, i32, i32
  }
  func.func @transform_6(%arg0: i32, %arg1: i32) -> (i32, i32, i32) {
    %c0_i32 = arith.constant 0 : i32
    %c0_i32_0 = arith.constant 0 : i32
    %c0_i32_1 = arith.constant 0 : i32
    return %arg1, %c0_i32, %c0_i32_0 : i32, i32, i32
  }
  func.func @transform_7(%arg0: i32, %arg1: i32) -> (i32, i32, i32) {
    %c0_i32 = arith.constant 0 : i32
    %c0_i32_0 = arith.constant 0 : i32
    %c0_i32_1 = arith.constant 0 : i32
    return %arg1, %c0_i32, %c0_i32_0 : i32, i32, i32
  }
  func.func @transform_8(%arg0: i32, %arg1: i32) -> (i32, i32, i32) {
    %c0_i32 = arith.constant 0 : i32
    %c0_i32_0 = arith.constant 0 : i32
    %c0_i32_1 = arith.constant 0 : i32
    return %arg1, %c0_i32, %c0_i32_0 : i32, i32, i32
  }
  func.func @transform_9(%arg0: i32, %arg1: i32) -> (i32, i32, i32) {
    %c0_i32 = arith.constant 0 : i32
    %c0_i32_0 = arith.constant 0 : i32
    %c0_i32_1 = arith.constant 0 : i32
    return %arg1, %c0_i32, %c0_i32_0 : i32, i32, i32
  }
  func.func @transform_10(%arg0: i32, %arg1: i32) -> (i32, i32, i32) {
    %c0_i32 = arith.constant 0 : i32
    %c0_i32_0 = arith.constant 0 : i32
    %c0_i32_1 = arith.constant 0 : i32
    return %arg1, %c0_i32, %c0_i32_0 : i32, i32, i32
  }
  func.func @transform_11(%arg0: i32, %arg1: i32) -> (i32, i32, i32) {
    %c0_i32 = arith.constant 0 : i32
    %c0_i32_0 = arith.constant 0 : i32
    %c0_i32_1 = arith.constant 0 : i32
    return %arg1, %c0_i32, %c0_i32_0 : i32, i32, i32
  }
  func.func @transform_12(%arg0: i32, %arg1: i32) -> (i32, i32, i32) {
    %c0_i32 = arith.constant 0 : i32
    %c0_i32_0 = arith.constant 0 : i32
    %c0_i32_1 = arith.constant 0 : i32
    return %arg1, %c0_i32, %c0_i32_0 : i32, i32, i32
  }
  func.func @transform_13(%arg0: i32, %arg1: i32) -> (i32, i32, i32) {
    %c0_i32 = arith.constant 0 : i32
    %c0_i32_0 = arith.constant 0 : i32
    %c0_i32_1 = arith.constant 0 : i32
    return %arg1, %c0_i32, %c0_i32_0 : i32, i32, i32
  }
  func.func @transform_14(%arg0: i32, %arg1: i32) -> (i32, i32, i32) {
    %c0_i32 = arith.constant 0 : i32
    %c0_i32_0 = arith.constant 0 : i32
    %c0_i32_1 = arith.constant 0 : i32
    return %arg1, %c0_i32, %c0_i32_0 : i32, i32, i32
  }
  func.func @transform_15(%arg0: i32, %arg1: i32) -> (i32, i32, i32) {
    %c0_i32 = arith.constant 0 : i32
    %c0_i32_0 = arith.constant 0 : i32
    %c0_i32_1 = arith.constant 0 : i32
    return %arg1, %c0_i32, %c0_i32_0 : i32, i32, i32
  }
  func.func @transform_16(%arg0: i32, %arg1: i32) -> (i32, i32, i32) {
    %c0_i32 = arith.constant 0 : i32
    %c0_i32_0 = arith.constant 0 : i32
    %c0_i32_1 = arith.constant 0 : i32
    return %arg1, %c0_i32, %c0_i32_0 : i32, i32, i32
  }
  func.func @transform_17(%arg0: i32, %arg1: i32) -> (i32, i32, i32) {
    %c0_i32 = arith.constant 0 : i32
    %c0_i32_0 = arith.constant 0 : i32
    %c0_i32_1 = arith.constant 0 : i32
    return %arg1, %c0_i32, %c0_i32_0 : i32, i32, i32
  }
  func.func @transform_18(%arg0: i32, %arg1: i32) -> (i32, i32, i32) {
    %c0_i32 = arith.constant 0 : i32
    %c0_i32_0 = arith.constant 0 : i32
    %c0_i32_1 = arith.constant 0 : i32
    return %arg1, %c0_i32, %c0_i32_0 : i32, i32, i32
  }
  func.func @transform_19(%arg0: i32, %arg1: i32) -> (i32, i32, i32) {
    %c0_i32 = arith.constant 0 : i32
    %c0_i32_0 = arith.constant 0 : i32
    %c0_i32_1 = arith.constant 0 : i32
    return %arg1, %c0_i32, %c0_i32_0 : i32, i32, i32
  }
  func.func @transform_20(%arg0: i32, %arg1: i32) -> (i32, i32, i32) {
    %c0_i32 = arith.constant 0 : i32
    %c0_i32_0 = arith.constant 0 : i32
    %c0_i32_1 = arith.constant 0 : i32
    return %arg1, %c0_i32, %c0_i32_0 : i32, i32, i32
  }
  func.func @transform_21(%arg0: i32, %arg1: i32) -> (i32, i32, i32) {
    %c0_i32 = arith.constant 0 : i32
    %c0_i32_0 = arith.constant 0 : i32
    %c0_i32_1 = arith.constant 0 : i32
    return %arg1, %c0_i32, %c0_i32_0 : i32, i32, i32
  }
  func.func @transform_22(%arg0: i32, %arg1: i32) -> (i32, i32, i32) {
    %c0_i32 = arith.constant 0 : i32
    %c0_i32_0 = arith.constant 0 : i32
    %c0_i32_1 = arith.constant 0 : i32
    return %arg1, %c0_i32, %c0_i32_0 : i32, i32, i32
  }
  func.func @transform_23(%arg0: i32, %arg1: i32) -> (i32, i32, i32) {
    %c0_i32 = arith.constant 0 : i32
    %c0_i32_0 = arith.constant 0 : i32
    %c0_i32_1 = arith.constant 0 : i32
    return %arg1, %c0_i32, %c0_i32_0 : i32, i32, i32
  }
  func.func @transform_24(%arg0: i32, %arg1: i32) -> (i32, i32, i32) {
    %c0_i32 = arith.constant 0 : i32
    %c0_i32_0 = arith.constant 0 : i32
    %c0_i32_1 = arith.constant 0 : i32
    return %arg0, %c0_i32, %c0_i32_0 : i32, i32, i32
  }
  func.func @transform_25(%arg0: i32, %arg1: i32) -> (i32, i32, i32, i32, i32) {
    %c0_i32 = arith.constant 0 : i32
    %c0_i32_0 = arith.constant 0 : i32
    %c0_i32_1 = arith.constant 0 : i32
    %c0_i32_2 = arith.constant 0 : i32
    return %arg1, %arg0, %c0_i32, %c0_i32_0, %c0_i32_1 : i32, i32, i32, i32, i32
  }
  func.func @transform_26(%arg0: i32, %arg1: i32) -> (i32, i32, i32, i32, i32) {
    %c0_i32 = arith.constant 0 : i32
    %c0_i32_0 = arith.constant 0 : i32
    %c0_i32_1 = arith.constant 0 : i32
    %c0_i32_2 = arith.constant 0 : i32
    return %arg1, %arg0, %c0_i32, %c0_i32_0, %c0_i32_1 : i32, i32, i32, i32, i32
  }
}

</mosaic_0001>

<llo_original>
// kernel: tpu_custom_call.1
$region0: #{tpu_custom_call.1}
  #allocation0 [shape = 'u32[]', space=smem, size = 0x4, offset = 0x4, fixed_abs, tag = 'smem constant byte address 0x4 - core index']
  #allocation1 [shape = 'u32[144,128]{1,0:T(1,128)}', space=vmem, size = 0x12000, scoped, tag = 'internal scratch']
  #allocation2 [shape = 'f32[8,32]{1,0:T(8,128)}', space=vmem, size = 0x1000, scoped, tag = 'scratch operand']
  %s0 = inlined_call_operand.hbm [shape: f32[2,8,32], index: 0, kind: input, shape index: {}]
  %s1 = inlined_call_operand.hbm [shape: f32[2,8,32], index: 1, kind: input, shape index: {}]
  %s2 = inlined_call_operand.hbm [shape: f32[2,1,8,8], index: 2, kind: input, shape index: {}]
  %s3 = inlined_call_operand.hbm [shape: f32[2,1,8,8], index: 3, kind: input, shape index: {}]
  %s4 = inlined_call_operand.vmem [shape: bf16[2,32,96], index: 4, kind: input, shape index: {}]
  %s5 = inlined_call_operand.hbm [shape: f32[2,1,96], index: 5, kind: input, shape index: {}]
  %s6 = inlined_call_operand.vmem [shape: bf16[2,32,32], index: 6, kind: input, shape index: {}]
  %s7 = inlined_call_operand.hbm [shape: f32[2,1,32], index: 7, kind: input, shape index: {}]
  %s8 = inlined_call_operand.hbm [shape: f32[2,1,32], index: 8, kind: input, shape index: {}]
  %s9 = inlined_call_operand.hbm [shape: f32[2,1,32], index: 9, kind: input, shape index: {}]
  %s10 = inlined_call_operand.vmem [shape: bf16[2,32,32], index: 10, kind: input, shape index: {}]
  %s11 = inlined_call_operand.hbm [shape: f32[2,1,32], index: 11, kind: input, shape index: {}]
  %s12 = inlined_call_operand.vmem [shape: bf16[2,32,64], index: 12, kind: input, shape index: {}]
  %s13 = inlined_call_operand.hbm [shape: f32[2,1,64], index: 13, kind: input, shape index: {}]
  %s14 = inlined_call_operand.hbm [shape: bf16[2,32,32], index: 14, kind: input, shape index: {}]
  %s15 = inlined_call_operand.hbm [shape: f32[2,1,32], index: 15, kind: input, shape index: {}]
  %s16 = inlined_call_operand.hbm [shape: f32[2,1,32], index: 16, kind: input, shape index: {}]
  %s17 = inlined_call_operand.hbm [shape: f32[2,1,32], index: 17, kind: input, shape index: {}]
  %s18 = inlined_call_operand.hbm [shape: bf16[2,32,64], index: 18, kind: input, shape index: {}]
  %s19 = inlined_call_operand.vmem [shape: f32[2,1,64], index: 19, kind: input, shape index: {}]
  %s20 = inlined_call_operand.vmem [shape: bf16[2,64,32], index: 20, kind: input, shape index: {}]
  %s21 = inlined_call_operand.vmem [shape: f32[2,1,32], index: 21, kind: input, shape index: {}]
  %s22 = inlined_call_operand.vmem [shape: f32[2,1,32], index: 22, kind: input, shape index: {}]
  %s23 = inlined_call_operand.vmem [shape: f32[2,1,32], index: 23, kind: input, shape index: {}]
  %s24 = inlined_call_operand.hbm [shape: f32[2,8,32], index: 24, kind: output, shape index: {0}]
  %s25 = inlined_call_operand.hbm [shape: f32[2,2,4,8,8], index: 25, kind: output, shape index: {1}]
  %s26 = inlined_call_operand.hbm [shape: f32[2,2,4,8,8], index: 26, kind: output, shape index: {2}]
  %27 = xla_tuple %s24, %s25, %s26
  %s28 = sld [smem:[#allocation0]]
  $region213: #{tpu_custom_call.1} parent=0
    _
  %s30 = ssub.s32 1, %s28
  %s31 = scalar_select 0, %s30, %s28
  $region1: #{tpu_custom_call.1} parent=0
    #allocation3 [shape = 'u8[8192]{0}', space=vmem, size = 0x2000, scoped, tag = 'input window, operand 0']
    #allocation4 [shape = 's32[2]{0}', space=sflag, size = 0x8, scoped, tag = 'scoped memory for tpu_custom_call.1']
    #allocation5 [shape = 's32[2]{0}', space=sflag, size = 0x8, scoped, tag = 'scoped memory for tpu_custom_call.1']
    #allocation6 [shape = 'u8[8192]{0}', space=vmem, size = 0x2000, scoped, tag = 'input window, operand 1']
    #allocation7 [shape = 's32[2]{0}', space=sflag, size = 0x8, scoped, tag = 'scoped memory for tpu_custom_call.1']
    #allocation8 [shape = 'u8[8192]{0}', space=vmem, size = 0x2000, scoped, tag = 'input window, operand 2']
    #allocation9 [shape = 'u8[8192]{0}', space=vmem, size = 0x2000, scoped, tag = 'input window, operand 3']
    #allocation10 [shape = 's32[2]{0}', space=sflag, size = 0x8, scoped, tag = 'scoped memory for tpu_custom_call.1']
    #allocation11 [shape = 'u8[1024]{0}', space=vmem, size = 0x400, scoped, tag = 'input window, operand 5']
    #allocation12 [shape = 'u8[1024]{0}', space=vmem, size = 0x400, scoped, tag = 'input window, operand 7']
    #allocation13 [shape = 's32[2]{0}', space=sflag, size = 0x8, scoped, tag = 'scoped memory for tpu_custom_call.1']
    #allocation14 [shape = 'u8[1024]{0}', space=vmem, size = 0x400, scoped, tag = 'input window, operand 8']
    #allocation15 [shape = 'u8[1024]{0}', space=vmem, size = 0x400, scoped, tag = 'input window, operand 9']
    #allocation16 [shape = 's32[2]{0}', space=sflag, size = 0x8, scoped, tag = 'scoped memory for tpu_custom_call.1']
    #allocation17 [shape = 'u8[1024]{0}', space=vmem, size = 0x400, scoped, tag = 'input window, operand 11']
    #allocation18 [shape = 'u8[1024]{0}', space=vmem, size = 0x400, scoped, tag = 'input window, operand 13']
    #allocation19 [shape = 's32[2]{0}', space=sflag, size = 0x8, scoped, tag = 'scoped memory for tpu_custom_call.1']
    #allocation20 [shape = 'u8[16384]{0}', space=vmem, size = 0x4000, scoped, tag = 'input window, operand 14']
    #allocation21 [shape = 'u8[1024]{0}', space=vmem, size = 0x400, scoped, tag = 'input window, operand 15']
    #allocation22 [shape = 's32[2]{0}', space=sflag, size = 0x8, scoped, tag = 'scoped memory for tpu_custom_call.1']
    #allocation23 [shape = 'u8[1024]{0}', space=vmem, size = 0x400, scoped, tag = 'input window, operand 16']
    #allocation24 [shape = 'u8[1024]{0}', space=vmem, size = 0x400, scoped, tag = 'input window, operand 17']
    #allocation25 [shape = 's32[2]{0}', space=sflag, size = 0x8, scoped, tag = 'scoped memory for tpu_custom_call.1']
    #allocation26 [shape = 'u8[16384]{0}', space=vmem, size = 0x4000, scoped, tag = 'input window, operand 18']
    #allocation27 [shape = 'u8[8192]{0}', space=vmem, size = 0x2000, scoped, tag = 'output window, operand 0']
    #allocation28 [shape = 'u8[32768]{0}', space=vmem, size = 0x8000, scoped, tag = 'output window, operand 1']
    #allocation29 [shape = 's32[2]{0}', space=sflag, size = 0x8, scoped, tag = 'scoped memory for tpu_custom_call.1']
    #allocation30 [shape = 'u8[32768]{0}', space=vmem, size = 0x8000, scoped, tag = 'output window, operand 2']
    %32 = vsyncpa [#allocation4], 0
    %s33 = scalar_lea.sflag [#allocation4], 1
    %34 = vsyncpa %s33, 0
    %35 = vsyncpa [#allocation7], 0
    %s36 = scalar_lea.sflag [#allocation7], 1
    %37 = vsyncpa %s36, 0
    %38 = vsyncpa [#allocation10], 0
    %s39 = scalar_lea.sflag [#allocation10], 1
    %40 = vsyncpa %s39, 0
    %41 = vsyncpa [#allocation13], 0
    %s42 = scalar_lea.sflag [#allocation13], 1
    %43 = vsyncpa %s42, 0
    %44 = vsyncpa [#allocation16], 0
    %s45 = scalar_lea.sflag [#allocation16], 1
    %46 = vsyncpa %s45, 0
    %47 = vsyncpa [#allocation19], 0
    %s48 = scalar_lea.sflag [#allocation19], 1
    %49 = vsyncpa %s48, 0
    %50 = vsyncpa [#allocation22], 0
    %s51 = scalar_lea.sflag [#allocation22], 1
    %52 = vsyncpa %s51, 0
    %53 = vsyncpa [#allocation25], 0
    %s54 = scalar_lea.sflag [#allocation25], 1
    %55 = vsyncpa %s54, 0
    %56 = vsyncpa [#allocation5], 0
    %s57 = scalar_lea.sflag [#allocation5], 1
    %58 = vsyncpa %s57, 0
    %59 = vsyncpa [#allocation29], 0
    %s60 = scalar_lea.sflag [#allocation29], 1
    %61 = vsyncpa %s60, 0
    loop: start=0, step=1, limit=6
    $region2: #{tpu_custom_call.1} parent=1 // loop_pre_header
      _
    $region3: #{tpu_custom_call.1} parent=1 // loop_header
      %s63 = sphi 0, %s67
      %p64 = scmp.ge.s32.totalorder %s63, 6
      %s70 = sphi 0, %s82
      %s71 = sphi 0, %s78
      %s72 = sphi 0, %s70
      %s73 = sphi 0, %s71
      %s74 = sphi 0, %s72
      %s75 = sphi 0, %s73
      %s85 = sphi 0, %s87
      %s88 = sphi 0, %s85
      %s89 = sphi 0, %s88
      %s105 = sphi 0, %s89
      %s111 = sphi 0, %s113
      %s114 = sphi 0, %s111
      %s115 = sphi 0, %s114
      %s131 = sphi 0, %s115
      %s137 = sphi 0, %s139
      %s140 = sphi 0, %s137
      %s141 = sphi 0, %s140
      %s157 = sphi 0, %s141
      %s163 = sphi 0, %s165
      %s166 = sphi 0, %s163
      %s167 = sphi 0, %s166
      %s183 = sphi 0, %s167
      %s189 = sphi 0, %s191
      %s192 = sphi 0, %s189
      %s193 = sphi 0, %s192
      %s209 = sphi 0, %s193
      %s215 = sphi 0, %s217
      %s218 = sphi 0, %s215
      %s219 = sphi 0, %s218
      %s235 = sphi 0, %s219
      %s241 = sphi 0, %s243
      %s244 = sphi 0, %s241
      %s245 = sphi 0, %s244
      %s261 = sphi 0, %s245
      %s267 = sphi 0, %s269
      %s270 = sphi 0, %s267
      %s271 = sphi 0, %s270
      %s287 = sphi 0, %s271
      %s293 = sphi 0, %s295
      %s296 = sphi 0, %s293
      %s297 = sphi 0, %s296
      %s313 = sphi 0, %s297
      %s319 = sphi 0, %s321
      %s322 = sphi 0, %s319
      %s323 = sphi 0, %s322
      %s339 = sphi 0, %s323
      %s345 = sphi 0, %s347
      %s348 = sphi 0, %s345
      %s349 = sphi 0, %s348
      %s365 = sphi 0, %s349
      %s371 = sphi 0, %s373
      %s374 = sphi 0, %s371
      %s375 = sphi 0, %s374
      %s391 = sphi 0, %s375
      %s397 = sphi 0, %s399
      %s400 = sphi 0, %s397
      %s401 = sphi 0, %s400
      %s417 = sphi 0, %s401
      %s423 = sphi 0, %s425
      %s426 = sphi 0, %s423
      %s427 = sphi 0, %s426
      %s443 = sphi 0, %s427
      %s449 = sphi 0, %s451
      %s452 = sphi 0, %s449
      %s453 = sphi 0, %s452
      %s469 = sphi 0, %s453
      %s475 = sphi 0, %s477
      %s478 = sphi 0, %s475
      %s479 = sphi 0, %s478
      %s495 = sphi 0, %s479
      %s501 = sphi 0, %s503
      %s504 = sphi 0, %s501
      %s505 = sphi 0, %s504
      %s521 = sphi 0, %s505
      %s527 = sphi 0, %s529
      %s530 = sphi 0, %s527
      %s531 = sphi 0, %s530
      %s547 = sphi 0, %s531
      %s553 = sphi 0, %s555
      %s556 = sphi 0, %s553
      %s557 = sphi 0, %s556
      %s573 = sphi 0, %s557
      %s579 = sphi 0, %s581
      %s582 = sphi 0, %s579
      %s583 = sphi 0, %s582
      %s599 = sphi 0, %s583
      %s605 = sphi 0, %s607
      %s608 = sphi 0, %s605
      %s609 = sphi 0, %s608
      %s625 = sphi 0, %s609
      %s631 = sphi 0, %s633
      %s634 = sphi 0, %s631
      %s635 = sphi 0, %s634
      %s651 = sphi 0, %s635
      %s657 = sphi 0, %s659
      %s660 = sphi 0, %s657
      %s661 = sphi 0, %s660
      %s677 = sphi 0, %s661
      %s683 = sphi 0, %s685
      %s686 = sphi 0, %s683
      %s687 = sphi 0, %s686
      %s703 = sphi 0, %s687
      %s709 = sphi 0, %s711
      %s712 = sphi 0, %s709
      %s713 = sphi 0, %s712
      %s729 = sphi 0, %s713
      %s737 = sphi 0, %s739
      %s740 = sphi 0, %s737
      %s741 = sphi 0, %s740
      %s757 = sphi 0, %s741
      %s765 = sphi 0, %s767
      %s768 = sphi 0, %s765
      %s769 = sphi 0, %s768
      %s785 = sphi 0, %s769
    $region4: #{tpu_custom_call.1} parent=1 // loop_header_branch
      %66 = sbr.rel (%p64) target = $region8
    $region5: #{tpu_custom_call.1} parent=1 // loop_body
      %s68 = ssub.s32 %s63, 1
      %s69 = ssub.s32 %s63, 2
      %s76 = sadd.s32 1, %s71
      %p77 = scmp.ge.s32.totalorder %s76, 2
      %s78 = scalar_select %p77, 0, %s76
      %s79 = sadd.s32 1, %s70
      %s80 = scalar_select %p77, %s79, %s70
      %p81 = scmp.ge.s32.totalorder %s80, 2
      %s82 = scalar_select %p81, 0, %s80
      %s83 = ssub.s32 %s70, %s82
      %p84 = scmp.eq.s32.totalorder %s83, 0
      %s86 = sadd.s32 %s85, 1
      %s87 = scalar_select %p84, %s85, %s86
      %p90 = pneg %p84
      %p91 = scmp.eq.s32.totalorder %s63, 3
      %p92 = por %p90, %p91
      %p93 = scmp.ne.s32.totalorder %s85, %s88
      %p94 = scmp.eq.s32.totalorder %s63, 0
      %p95 = por %p93, %p94
      %p96 = scmp.ne.s32.totalorder %s85, %s88
      %p97 = scmp.eq.s32.totalorder %s68, 3
      %p98 = por %p96, %p97
      %p99 = scmp.ne.s32.totalorder %s88, %s89
      %p100 = scmp.eq.s32.totalorder %s68, 0
      %p101 = por %p99, %p100
      %p102 = scmp.ne.s32.totalorder %s88, %s89
      %p103 = scmp.eq.s32.totalorder %s69, 3
      %p104 = por %p102, %p103
      %p106 = scmp.ne.s32.totalorder %s89, %s105
      %p107 = scmp.eq.s32.totalorder %s69, 0
      %p108 = por %p106, %p107
      %s109 = ssub.s32 %s70, %s82
      %p110 = scmp.eq.s32.totalorder %s109, 0
      %s112 = sadd.s32 %s111, 1
      %s113 = scalar_select %p110, %s111, %s112
      %p116 = pneg %p110
      %p117 = scmp.eq.s32.totalorder %s63, 3
      %p118 = por %p116, %p117
      %p119 = scmp.ne.s32.totalorder %s111, %s114
      %p120 = scmp.eq.s32.totalorder %s63, 0
      %p121 = por %p119, %p120
      %p122 = scmp.ne.s32.totalorder %s111, %s114
      %p123 = scmp.eq.s32.totalorder %s68, 3
      %p124 = por %p122, %p123
      %p125 = scmp.ne.s32.totalorder %s114, %s115
      %p126 = scmp.eq.s32.totalorder %s68, 0
      %p127 = por %p125, %p126
      %p128 = scmp.ne.s32.totalorder %s114, %s115
      %p129 = scmp.eq.s32.totalorder %s69, 3
      %p130 = por %p128, %p129
      %p132 = scmp.ne.s32.totalorder %s115, %s131
      %p133 = scmp.eq.s32.totalorder %s69, 0
      %p134 = por %p132, %p133
      %s135 = ssub.s32 %s70, %s82
      %p136 = scmp.eq.s32.totalorder %s135, 0
      %s138 = sadd.s32 %s137, 1
      %s139 = scalar_select %p136, %s137, %s138
      %p142 = pneg %p136
      %p143 = scmp.eq.s32.totalorder %s63, 3
      %p144 = por %p142, %p143
      %p145 = scmp.ne.s32.totalorder %s137, %s140
      %p146 = scmp.eq.s32.totalorder %s63, 0
      %p147 = por %p145, %p146
      %p148 = scmp.ne.s32.totalorder %s137, %s140
      %p149 = scmp.eq.s32.totalorder %s68, 3
      %p150 = por %p148, %p149
      %p151 = scmp.ne.s32.totalorder %s140, %s141
      %p152 = scmp.eq.s32.totalorder %s68, 0
      %p153 = por %p151, %p152
      %p154 = scmp.ne.s32.totalorder %s140, %s141
      %p155 = scmp.eq.s32.totalorder %s69, 3
      %p156 = por %p154, %p155
      %p158 = scmp.ne.s32.totalorder %s141, %s157
      %p159 = scmp.eq.s32.totalorder %s69, 0
      %p160 = por %p158, %p159
      %s161 = ssub.s32 %s70, %s82
      %p162 = scmp.eq.s32.totalorder %s161, 0
      %s164 = sadd.s32 %s163, 1
      %s165 = scalar_select %p162, %s163, %s164
      %p168 = pneg %p162
      %p169 = scmp.eq.s32.totalorder %s63, 3
      %p170 = por %p168, %p169
      %p171 = scmp.ne.s32.totalorder %s163, %s166
      %p172 = scmp.eq.s32.totalorder %s63, 0
      %p173 = por %p171, %p172
      %p174 = scmp.ne.s32.totalorder %s163, %s166
      %p175 = scmp.eq.s32.totalorder %s68, 3
      %p176 = por %p174, %p175
      %p177 = scmp.ne.s32.totalorder %s166, %s167
      %p178 = scmp.eq.s32.totalorder %s68, 0
      %p179 = por %p177, %p178
      %p180 = scmp.ne.s32.totalorder %s166, %s167
      %p181 = scmp.eq.s32.totalorder %s69, 3
      %p182 = por %p180, %p181
      %p184 = scmp.ne.s32.totalorder %s167, %s183
      %p185 = scmp.eq.s32.totalorder %s69, 0
      %p186 = por %p184, %p185
      %s187 = ssub.s32 %s71, %s78
      %p188 = scmp.eq.s32.totalorder %s187, 0
      %s190 = sadd.s32 %s189, 1
      %s191 = scalar_select %p188, %s189, %s190
      %p194 = pneg %p188
      %p195 = scmp.eq.s32.totalorder %s63, 3
      %p196 = por %p194, %p195
      %p197 = scmp.ne.s32.totalorder %s189, %s192
      %p198 = scmp.eq.s32.totalorder %s63, 0
      %p199 = por %p197, %p198
      %p200 = scmp.ne.s32.totalorder %s189, %s192
      %p201 = scmp.eq.s32.totalorder %s68, 3
      %p202 = por %p200, %p201
      %p203 = scmp.ne.s32.totalorder %s192, %s193
      %p204 = scmp.eq.s32.totalorder %s68, 0
      %p205 = por %p203, %p204
      %p206 = scmp.ne.s32.totalorder %s192, %s193
      %p207 = scmp.eq.s32.totalorder %s69, 3
      %p208 = por %p206, %p207
      %p210 = scmp.ne.s32.totalorder %s193, %s209
      %p211 = scmp.eq.s32.totalorder %s69, 0
      %p212 = por %p210, %p211
      %s213 = ssub.s32 %s71, %s78
      %p214 = scmp.eq.s32.totalorder %s213, 0
      %s216 = sadd.s32 %s215, 1
      %s217 = scalar_select %p214, %s215, %s216
      %p220 = pneg %p214
      %p221 = scmp.eq.s32.totalorder %s63, 3
      %p222 = por %p220, %p221
      %p223 = scmp.ne.s32.totalorder %s215, %s218
      %p224 = scmp.eq.s32.totalorder %s63, 0
      %p225 = por %p223, %p224
      %p226 = scmp.ne.s32.totalorder %s215, %s218
      %p227 = scmp.eq.s32.totalorder %s68, 3
      %p228 = por %p226, %p227
      %p229 = scmp.ne.s32.totalorder %s218, %s219
      %p230 = scmp.eq.s32.totalorder %s68, 0
      %p231 = por %p229, %p230
      %p232 = scmp.ne.s32.totalorder %s218, %s219
      %p233 = scmp.eq.s32.totalorder %s69, 3
      %p234 = por %p232, %p233
      %p236 = scmp.ne.s32.totalorder %s219, %s235
      %p237 = scmp.eq.s32.totalorder %s69, 0
      %p238 = por %p236, %p237
      %s239 = ssub.s32 %s71, %s78
      %p240 = scmp.eq.s32.totalorder %s239, 0
      %s242 = sadd.s32 %s241, 1
      %s243 = scalar_select %p240, %s241, %s242
      %p246 = pneg %p240
      %p247 = scmp.eq.s32.totalorder %s63, 3
      %p248 = por %p246, %p247
      %p249 = scmp.ne.s32.totalorder %s241, %s244
      %p250 = scmp.eq.s32.totalorder %s63, 0
      %p251 = por %p249, %p250
      %p252 = scmp.ne.s32.totalorder %s241, %s244
      %p253 = scmp.eq.s32.totalorder %s68, 3
      %p254 = por %p252, %p253
      %p255 = scmp.ne.s32.totalorder %s244, %s245
      %p256 = scmp.eq.s32.totalorder %s68, 0
      %p257 = por %p255, %p256
      %p258 = scmp.ne.s32.totalorder %s244, %s245
      %p259 = scmp.eq.s32.totalorder %s69, 3
      %p260 = por %p258, %p259
      %p262 = scmp.ne.s32.totalorder %s245, %s261
      %p263 = scmp.eq.s32.totalorder %s69, 0
      %p264 = por %p262, %p263
      %s265 = ssub.s32 %s71, %s78
      %p266 = scmp.eq.s32.totalorder %s265, 0
      %s268 = sadd.s32 %s267, 1
      %s269 = scalar_select %p266, %s267, %s268
      %p272 = pneg %p266
      %p273 = scmp.eq.s32.totalorder %s63, 3
      %p274 = por %p272, %p273
      %p275 = scmp.ne.s32.totalorder %s267, %s270
      %p276 = scmp.eq.s32.totalorder %s63, 0
      %p277 = por %p275, %p276
      %p278 = scmp.ne.s32.totalorder %s267, %s270
      %p279 = scmp.eq.s32.totalorder %s68, 3
      %p280 = por %p278, %p279
      %p281 = scmp.ne.s32.totalorder %s270, %s271
      %p282 = scmp.eq.s32.totalorder %s68, 0
      %p283 = por %p281, %p282
      %p284 = scmp.ne.s32.totalorder %s270, %s271
      %p285 = scmp.eq.s32.totalorder %s69, 3
      %p286 = por %p284, %p285
      %p288 = scmp.ne.s32.totalorder %s271, %s287
      %p289 = scmp.eq.s32.totalorder %s69, 0
      %p290 = por %p288, %p289
      %s291 = ssub.s32 %s71, %s78
      %p292 = scmp.eq.s32.totalorder %s291, 0
      %s294 = sadd.s32 %s293, 1
      %s295 = scalar_select %p292, %s293, %s294
      %p298 = pneg %p292
      %p299 = scmp.eq.s32.totalorder %s63, 3
      %p300 = por %p298, %p299
      %p301 = scmp.ne.s32.totalorder %s293, %s296
      %p302 = scmp.eq.s32.totalorder %s63, 0
      %p303 = por %p301, %p302
      %p304 = scmp.ne.s32.totalorder %s293, %s296
      %p305 = scmp.eq.s32.totalorder %s68, 3
      %p306 = por %p304, %p305
      %p307 = scmp.ne.s32.totalorder %s296, %s297
      %p308 = scmp.eq.s32.totalorder %s68, 0
      %p309 = por %p307, %p308
      %p310 = scmp.ne.s32.totalorder %s296, %s297
      %p311 = scmp.eq.s32.totalorder %s69, 3
      %p312 = por %p310, %p311
      %p314 = scmp.ne.s32.totalorder %s297, %s313
      %p315 = scmp.eq.s32.totalorder %s69, 0
      %p316 = por %p314, %p315
      %s317 = ssub.s32 %s71, %s78
      %p318 = scmp.eq.s32.totalorder %s317, 0
      %s320 = sadd.s32 %s319, 1
      %s321 = scalar_select %p318, %s319, %s320
      %p324 = pneg %p318
      %p325 = scmp.eq.s32.totalorder %s63, 3
      %p326 = por %p324, %p325
      %p327 = scmp.ne.s32.totalorder %s319, %s322
      %p328 = scmp.eq.s32.totalorder %s63, 0
      %p329 = por %p327, %p328
      %p330 = scmp.ne.s32.totalorder %s319, %s322
      %p331 = scmp.eq.s32.totalorder %s68, 3
      %p332 = por %p330, %p331
      %p333 = scmp.ne.s32.totalorder %s322, %s323
      %p334 = scmp.eq.s32.totalorder %s68, 0
      %p335 = por %p333, %p334
      %p336 = scmp.ne.s32.totalorder %s322, %s323
      %p337 = scmp.eq.s32.totalorder %s69, 3
      %p338 = por %p336, %p337
      %p340 = scmp.ne.s32.totalorder %s323, %s339
      %p341 = scmp.eq.s32.totalorder %s69, 0
      %p342 = por %p340, %p341
      %s343 = ssub.s32 %s71, %s78
      %p344 = scmp.eq.s32.totalorder %s343, 0
      %s346 = sadd.s32 %s345, 1
      %s347 = scalar_select %p344, %s345, %s346
      %p350 = pneg %p344
      %p351 = scmp.eq.s32.totalorder %s63, 3
      %p352 = por %p350, %p351
      %p353 = scmp.ne.s32.totalorder %s345, %s348
      %p354 = scmp.eq.s32.totalorder %s63, 0
      %p355 = por %p353, %p354
      %p356 = scmp.ne.s32.totalorder %s345, %s348
      %p357 = scmp.eq.s32.totalorder %s68, 3
      %p358 = por %p356, %p357
      %p359 = scmp.ne.s32.totalorder %s348, %s349
      %p360 = scmp.eq.s32.totalorder %s68, 0
      %p361 = por %p359, %p360
      %p362 = scmp.ne.s32.totalorder %s348, %s349
      %p363 = scmp.eq.s32.totalorder %s69, 3
      %p364 = por %p362, %p363
      %p366 = scmp.ne.s32.totalorder %s349, %s365
      %p367 = scmp.eq.s32.totalorder %s69, 0
      %p368 = por %p366, %p367
      %s369 = ssub.s32 %s71, %s78
      %p370 = scmp.eq.s32.totalorder %s369, 0
      %s372 = sadd.s32 %s371, 1
      %s373 = scalar_select %p370, %s371, %s372
      %p376 = pneg %p370
      %p377 = scmp.eq.s32.totalorder %s63, 3
      %p378 = por %p376, %p377
      %p379 = scmp.ne.s32.totalorder %s371, %s374
      %p380 = scmp.eq.s32.totalorder %s63, 0
      %p381 = por %p379, %p380
      %p382 = scmp.ne.s32.totalorder %s371, %s374
      %p383 = scmp.eq.s32.totalorder %s68, 3
      %p384 = por %p382, %p383
      %p385 = scmp.ne.s32.totalorder %s374, %s375
      %p386 = scmp.eq.s32.totalorder %s68, 0
      %p387 = por %p385, %p386
      %p388 = scmp.ne.s32.totalorder %s374, %s375
      %p389 = scmp.eq.s32.totalorder %s69, 3
      %p390 = por %p388, %p389
      %p392 = scmp.ne.s32.totalorder %s375, %s391
      %p393 = scmp.eq.s32.totalorder %s69, 0
      %p394 = por %p392, %p393
      %s395 = ssub.s32 %s71, %s78
      %p396 = scmp.eq.s32.totalorder %s395, 0
      %s398 = sadd.s32 %s397, 1
      %s399 = scalar_select %p396, %s397, %s398
      %p402 = pneg %p396
      %p403 = scmp.eq.s32.totalorder %s63, 3
      %p404 = por %p402, %p403
      %p405 = scmp.ne.s32.totalorder %s397, %s400
      %p406 = scmp.eq.s32.totalorder %s63, 0
      %p407 = por %p405, %p406
      %p408 = scmp.ne.s32.totalorder %s397, %s400
      %p409 = scmp.eq.s32.totalorder %s68, 3
      %p410 = por %p408, %p409
      %p411 = scmp.ne.s32.totalorder %s400, %s401
      %p412 = scmp.eq.s32.totalorder %s68, 0
      %p413 = por %p411, %p412
      %p414 = scmp.ne.s32.totalorder %s400, %s401
      %p415 = scmp.eq.s32.totalorder %s69, 3
      %p416 = por %p414, %p415
      %p418 = scmp.ne.s32.totalorder %s401, %s417
      %p419 = scmp.eq.s32.totalorder %s69, 0
      %p420 = por %p418, %p419
      %s421 = ssub.s32 %s71, %s78
      %p422 = scmp.eq.s32.totalorder %s421, 0
      %s424 = sadd.s32 %s423, 1
      %s425 = scalar_select %p422, %s423, %s424
      %p428 = pneg %p422
      %p429 = scmp.eq.s32.totalorder %s63, 3
      %p430 = por %p428, %p429
      %p431 = scmp.ne.s32.totalorder %s423, %s426
      %p432 = scmp.eq.s32.totalorder %s63, 0
      %p433 = por %p431, %p432
      %p434 = scmp.ne.s32.totalorder %s423, %s426
      %p435 = scmp.eq.s32.totalorder %s68, 3
      %p436 = por %p434, %p435
      %p437 = scmp.ne.s32.totalorder %s426, %s427
      %p438 = scmp.eq.s32.totalorder %s68, 0
      %p439 = por %p437, %p438
      %p440 = scmp.ne.s32.totalorder %s426, %s427
      %p441 = scmp.eq.s32.totalorder %s69, 3
      %p442 = por %p440, %p441
      %p444 = scmp.ne.s32.totalorder %s427, %s443
      %p445 = scmp.eq.s32.totalorder %s69, 0
      %p446 = por %p444, %p445
      %s447 = ssub.s32 %s71, %s78
      %p448 = scmp.eq.s32.totalorder %s447, 0
      %s450 = sadd.s32 %s449, 1
      %s451 = scalar_select %p448, %s449, %s450
      %p454 = pneg %p448
      %p455 = scmp.eq.s32.totalorder %s63, 3
      %p456 = por %p454, %p455
      %p457 = scmp.ne.s32.totalorder %s449, %s452
      %p458 = scmp.eq.s32.totalorder %s63, 0
      %p459 = por %p457, %p458
      %p460 = scmp.ne.s32.totalorder %s449, %s452
      %p461 = scmp.eq.s32.totalorder %s68, 3
      %p462 = por %p460, %p461
      %p463 = scmp.ne.s32.totalorder %s452, %s453
      %p464 = scmp.eq.s32.totalorder %s68, 0
      %p465 = por %p463, %p464
      %p466 = scmp.ne.s32.totalorder %s452, %s453
      %p467 = scmp.eq.s32.totalorder %s69, 3
      %p468 = por %p466, %p467
      %p470 = scmp.ne.s32.totalorder %s453, %s469
      %p471 = scmp.eq.s32.totalorder %s69, 0
      %p472 = por %p470, %p471
      %s473 = ssub.s32 %s71, %s78
      %p474 = scmp.eq.s32.totalorder %s473, 0
      %s476 = sadd.s32 %s475, 1
      %s477 = scalar_select %p474, %s475, %s476
      %p480 = pneg %p474
      %p481 = scmp.eq.s32.totalorder %s63, 3
      %p482 = por %p480, %p481
      %p483 = scmp.ne.s32.totalorder %s475, %s478
      %p484 = scmp.eq.s32.totalorder %s63, 0
      %p485 = por %p483, %p484
      %p486 = scmp.ne.s32.totalorder %s475, %s478
      %p487 = scmp.eq.s32.totalorder %s68, 3
      %p488 = por %p486, %p487
      %p489 = scmp.ne.s32.totalorder %s478, %s479
      %p490 = scmp.eq.s32.totalorder %s68, 0
      %p491 = por %p489, %p490
      %p492 = scmp.ne.s32.totalorder %s478, %s479
      %p493 = scmp.eq.s32.totalorder %s69, 3
      %p494 = por %p492, %p493
      %p496 = scmp.ne.s32.totalorder %s479, %s495
      %p497 = scmp.eq.s32.totalorder %s69, 0
      %p498 = por %p496, %p497
      %s499 = ssub.s32 %s71, %s78
      %p500 = scmp.eq.s32.totalorder %s499, 0
      %s502 = sadd.s32 %s501, 1
      %s503 = scalar_select %p500, %s501, %s502
      %p506 = pneg %p500
      %p507 = scmp.eq.s32.totalorder %s63, 3
      %p508 = por %p506, %p507
      %p509 = scmp.ne.s32.totalorder %s501, %s504
      %p510 = scmp.eq.s32.totalorder %s63, 0
      %p511 = por %p509, %p510
      %p512 = scmp.ne.s32.totalorder %s501, %s504
      %p513 = scmp.eq.s32.totalorder %s68, 3
      %p514 = por %p512, %p513
      %p515 = scmp.ne.s32.totalorder %s504, %s505
      %p516 = scmp.eq.s32.totalorder %s68, 0
      %p517 = por %p515, %p516
      %p518 = scmp.ne.s32.totalorder %s504, %s505
      %p519 = scmp.eq.s32.totalorder %s69, 3
      %p520 = por %p518, %p519
      %p522 = scmp.ne.s32.totalorder %s505, %s521
      %p523 = scmp.eq.s32.totalorder %s69, 0
      %p524 = por %p522, %p523
      %s525 = ssub.s32 %s71, %s78
      %p526 = scmp.eq.s32.totalorder %s525, 0
      %s528 = sadd.s32 %s527, 1
      %s529 = scalar_select %p526, %s527, %s528
      %p532 = pneg %p526
      %p533 = scmp.eq.s32.totalorder %s63, 3
      %p534 = por %p532, %p533
      %p535 = scmp.ne.s32.totalorder %s527, %s530
      %p536 = scmp.eq.s32.totalorder %s63, 0
      %p537 = por %p535, %p536
      %p538 = scmp.ne.s32.totalorder %s527, %s530
      %p539 = scmp.eq.s32.totalorder %s68, 3
      %p540 = por %p538, %p539
      %p541 = scmp.ne.s32.totalorder %s530, %s531
      %p542 = scmp.eq.s32.totalorder %s68, 0
      %p543 = por %p541, %p542
      %p544 = scmp.ne.s32.totalorder %s530, %s531
      %p545 = scmp.eq.s32.totalorder %s69, 3
      %p546 = por %p544, %p545
      %p548 = scmp.ne.s32.totalorder %s531, %s547
      %p549 = scmp.eq.s32.totalorder %s69, 0
      %p550 = por %p548, %p549
      %s551 = ssub.s32 %s71, %s78
      %p552 = scmp.eq.s32.totalorder %s551, 0
      %s554 = sadd.s32 %s553, 1
      %s555 = scalar_select %p552, %s553, %s554
      %p558 = pneg %p552
      %p559 = scmp.eq.s32.totalorder %s63, 3
      %p560 = por %p558, %p559
      %p561 = scmp.ne.s32.totalorder %s553, %s556
      %p562 = scmp.eq.s32.totalorder %s63, 0
      %p563 = por %p561, %p562
      %p564 = scmp.ne.s32.totalorder %s553, %s556
      %p565 = scmp.eq.s32.totalorder %s68, 3
      %p566 = por %p564, %p565
      %p567 = scmp.ne.s32.totalorder %s556, %s557
      %p568 = scmp.eq.s32.totalorder %s68, 0
      %p569 = por %p567, %p568
      %p570 = scmp.ne.s32.totalorder %s556, %s557
      %p571 = scmp.eq.s32.totalorder %s69, 3
      %p572 = por %p570, %p571
      %p574 = scmp.ne.s32.totalorder %s557, %s573
      %p575 = scmp.eq.s32.totalorder %s69, 0
      %p576 = por %p574, %p575
      %s577 = ssub.s32 %s71, %s78
      %p578 = scmp.eq.s32.totalorder %s577, 0
      %s580 = sadd.s32 %s579, 1
      %s581 = scalar_select %p578, %s579, %s580
      %p584 = pneg %p578
      %p585 = scmp.eq.s32.totalorder %s63, 3
      %p586 = por %p584, %p585
      %p587 = scmp.ne.s32.totalorder %s579, %s582
      %p588 = scmp.eq.s32.totalorder %s63, 0
      %p589 = por %p587, %p588
      %p590 = scmp.ne.s32.totalorder %s579, %s582
      %p591 = scmp.eq.s32.totalorder %s68, 3
      %p592 = por %p590, %p591
      %p593 = scmp.ne.s32.totalorder %s582, %s583
      %p594 = scmp.eq.s32.totalorder %s68, 0
      %p595 = por %p593, %p594
      %p596 = scmp.ne.s32.totalorder %s582, %s583
      %p597 = scmp.eq.s32.totalorder %s69, 3
      %p598 = por %p596, %p597
      %p600 = scmp.ne.s32.totalorder %s583, %s599
      %p601 = scmp.eq.s32.totalorder %s69, 0
      %p602 = por %p600, %p601
      %s603 = ssub.s32 %s71, %s78
      %p604 = scmp.eq.s32.totalorder %s603, 0
      %s606 = sadd.s32 %s605, 1
      %s607 = scalar_select %p604, %s605, %s606
      %p610 = pneg %p604
      %p611 = scmp.eq.s32.totalorder %s63, 3
      %p612 = por %p610, %p611
      %p613 = scmp.ne.s32.totalorder %s605, %s608
      %p614 = scmp.eq.s32.totalorder %s63, 0
      %p615 = por %p613, %p614
      %p616 = scmp.ne.s32.totalorder %s605, %s608
      %p617 = scmp.eq.s32.totalorder %s68, 3
      %p618 = por %p616, %p617
      %p619 = scmp.ne.s32.totalorder %s608, %s609
      %p620 = scmp.eq.s32.totalorder %s68, 0
      %p621 = por %p619, %p620
      %p622 = scmp.ne.s32.totalorder %s608, %s609
      %p623 = scmp.eq.s32.totalorder %s69, 3
      %p624 = por %p622, %p623
      %p626 = scmp.ne.s32.totalorder %s609, %s625
      %p627 = scmp.eq.s32.totalorder %s69, 0
      %p628 = por %p626, %p627
      %s629 = ssub.s32 %s71, %s78
      %p630 = scmp.eq.s32.totalorder %s629, 0
      %s632 = sadd.s32 %s631, 1
      %s633 = scalar_select %p630, %s631, %s632
      %p636 = pneg %p630
      %p637 = scmp.eq.s32.totalorder %s63, 3
      %p638 = por %p636, %p637
      %p639 = scmp.ne.s32.totalorder %s631, %s634
      %p640 = scmp.eq.s32.totalorder %s63, 0
      %p641 = por %p639, %p640
      %p642 = scmp.ne.s32.totalorder %s631, %s634
      %p643 = scmp.eq.s32.totalorder %s68, 3
      %p644 = por %p642, %p643
      %p645 = scmp.ne.s32.totalorder %s634, %s635
      %p646 = scmp.eq.s32.totalorder %s68, 0
      %p647 = por %p645, %p646
      %p648 = scmp.ne.s32.totalorder %s634, %s635
      %p649 = scmp.eq.s32.totalorder %s69, 3
      %p650 = por %p648, %p649
      %p652 = scmp.ne.s32.totalorder %s635, %s651
      %p653 = scmp.eq.s32.totalorder %s69, 0
      %p654 = por %p652, %p653
      %s655 = ssub.s32 %s71, %s78
      %p656 = scmp.eq.s32.totalorder %s655, 0
      %s658 = sadd.s32 %s657, 1
      %s659 = scalar_select %p656, %s657, %s658
      %p662 = pneg %p656
      %p663 = scmp.eq.s32.totalorder %s63, 3
      %p664 = por %p662, %p663
      %p665 = scmp.ne.s32.totalorder %s657, %s660
      %p666 = scmp.eq.s32.totalorder %s63, 0
      %p667 = por %p665, %p666
      %p668 = scmp.ne.s32.totalorder %s657, %s660
      %p669 = scmp.eq.s32.totalorder %s68, 3
      %p670 = por %p668, %p669
      %p671 = scmp.ne.s32.totalorder %s660, %s661
      %p672 = scmp.eq.s32.totalorder %s68, 0
      %p673 = por %p671, %p672
      %p674 = scmp.ne.s32.totalorder %s660, %s661
      %p675 = scmp.eq.s32.totalorder %s69, 3
      %p676 = por %p674, %p675
      %p678 = scmp.ne.s32.totalorder %s661, %s677
      %p679 = scmp.eq.s32.totalorder %s69, 0
      %p680 = por %p678, %p679
      %s681 = ssub.s32 %s71, %s78
      %p682 = scmp.eq.s32.totalorder %s681, 0
      %s684 = sadd.s32 %s683, 1
      %s685 = scalar_select %p682, %s683, %s684
      %p688 = pneg %p682
      %p689 = scmp.eq.s32.totalorder %s63, 3
      %p690 = por %p688, %p689
      %p691 = scmp.ne.s32.totalorder %s683, %s686
      %p692 = scmp.eq.s32.totalorder %s63, 0
      %p693 = por %p691, %p692
      %p694 = scmp.ne.s32.totalorder %s683, %s686
      %p695 = scmp.eq.s32.totalorder %s68, 3
      %p696 = por %p694, %p695
      %p697 = scmp.ne.s32.totalorder %s686, %s687
      %p698 = scmp.eq.s32.totalorder %s68, 0
      %p699 = por %p697, %p698
      %p700 = scmp.ne.s32.totalorder %s686, %s687
      %p701 = scmp.eq.s32.totalorder %s69, 3
      %p702 = por %p700, %p701
      %p704 = scmp.ne.s32.totalorder %s687, %s703
      %p705 = scmp.eq.s32.totalorder %s69, 0
      %p706 = por %p704, %p705
      %s707 = ssub.s32 %s70, %s82
      %p708 = scmp.eq.s32.totalorder %s707, 0
      %s710 = sadd.s32 %s709, 1
      %s711 = scalar_select %p708, %s709, %s710
      %p714 = pneg %p708
      %p715 = scmp.eq.s32.totalorder %s63, 3
      %p716 = por %p714, %p715
      %p717 = scmp.ne.s32.totalorder %s709, %s712
      %p718 = scmp.eq.s32.totalorder %s63, 0
      %p719 = por %p717, %p718
      %p720 = scmp.ne.s32.totalorder %s709, %s712
      %p721 = scmp.eq.s32.totalorder %s68, 3
      %p722 = por %p720, %p721
      %p723 = scmp.ne.s32.totalorder %s712, %s713
      %p724 = scmp.eq.s32.totalorder %s68, 0
      %p725 = por %p723, %p724
      %p726 = scmp.ne.s32.totalorder %s712, %s713
      %p727 = scmp.eq.s32.totalorder %s69, 3
      %p728 = por %p726, %p727
      %p730 = scmp.ne.s32.totalorder %s713, %s729
      %p731 = scmp.eq.s32.totalorder %s69, 0
      %p732 = por %p730, %p731
      %s733 = ssub.s32 %s71, %s78
      %s734 = ssub.s32 %s70, %s82
      %s735 = sor.u32 %s733, %s734
      %p736 = scmp.eq.s32.totalorder %s735, 0
      %s738 = sadd.s32 %s737, 1
      %s739 = scalar_select %p736, %s737, %s738
      %p742 = pneg %p736
      %p743 = scmp.eq.s32.totalorder %s63, 3
      %p744 = por %p742, %p743
      %p745 = scmp.ne.s32.totalorder %s737, %s740
      %p746 = scmp.eq.s32.totalorder %s63, 0
      %p747 = por %p745, %p746
      %p748 = scmp.ne.s32.totalorder %s737, %s740
      %p749 = scmp.eq.s32.totalorder %s68, 3
      %p750 = por %p748, %p749
      %p751 = scmp.ne.s32.totalorder %s740, %s741
      %p752 = scmp.eq.s32.totalorder %s68, 0
      %p753 = por %p751, %p752
      %p754 = scmp.ne.s32.totalorder %s740, %s741
      %p755 = scmp.eq.s32.totalorder %s69, 3
      %p756 = por %p754, %p755
      %p758 = scmp.ne.s32.totalorder %s741, %s757
      %p759 = scmp.eq.s32.totalorder %s69, 0
      %p760 = por %p758, %p759
      %s761 = ssub.s32 %s71, %s78
      %s762 = ssub.s32 %s70, %s82
      %s763 = sor.u32 %s761, %s762
      %p764 = scmp.eq.s32.totalorder %s763, 0
      %s766 = sadd.s32 %s765, 1
      %s767 = scalar_select %p764, %s765, %s766
      %p770 = pneg %p764
      %p771 = scmp.eq.s32.totalorder %s63, 3
      %p772 = por %p770, %p771
      %p773 = scmp.ne.s32.totalorder %s765, %s768
      %p774 = scmp.eq.s32.totalorder %s63, 0
      %p775 = por %p773, %p774
      %p776 = scmp.ne.s32.totalorder %s765, %s768
      %p777 = scmp.eq.s32.totalorder %s68, 3
      %p778 = por %p776, %p777
      %p779 = scmp.ne.s32.totalorder %s768, %s769
      %p780 = scmp.eq.s32.totalorder %s68, 0
      %p781 = por %p779, %p780
      %p782 = scmp.ne.s32.totalorder %s768, %s769
      %p783 = scmp.eq.s32.totalorder %s69, 3
      %p784 = por %p782, %p783
      %p786 = scmp.ne.s32.totalorder %s769, %s785
      %p787 = scmp.eq.s32.totalorder %s69, 0
      %p788 = por %p786, %p787
      %p789 = scmp.le.s32.totalorder 1, %s63
      %p790 = scmp.lt.s32.totalorder %s63, 5
      %p791 = pnand %p789, %p790
      %p792 = pneg %p791
      // Predicated region
      $region9: #{tpu_custom_call.1} parent=5 // pred_check
        _
      $region10: #{tpu_custom_call.1} parent=5 // pred_check_branch
        %794 = sbr.rel (%p791) target = $region12
      $region11: #{tpu_custom_call.1} parent=5 // pred_region
        %s795 = ssub.s32 %s63, 1
      $region12: #{tpu_custom_call.1} parent=5 // pred_fallthru
        _
      %p796 = scmp.lt.s32.totalorder %s63, 4
      // Predicated region
      $region13: #{tpu_custom_call.1} parent=5 // pred_check
        %p797 = pneg %p796
      $region14: #{tpu_custom_call.1} parent=5 // pred_check_branch
        %799 = sbr.rel (%p797) target = $region16
      $region15: #{tpu_custom_call.1} parent=5 // pred_region
        // Predicated region
        $region17: #{tpu_custom_call.1} parent=15 // pred_check
          %p800 = pneg %p95
        $region18: #{tpu_custom_call.1} parent=15 // pred_check_branch
          %802 = sbr.rel (%p800) target = $region20
        $region19: #{tpu_custom_call.1} parent=15 // pred_region
          %s803 = sand.u32 %s85, 1
          %s804 = scalar_lea.sflag [#allocation4], %s803
          %s805 = sand.u32 %s85, 1
          %s806 = smul.addr %s805, 8
          %s807 = scalar_lea.vmem [#allocation3], %s806
          %s809 = ssub.s32 128, 128
          %810 = vsyncadd %s804, %s809
          %s811 = smul.addr %s70, 128
          %s812 = scalar_lea.hbm %s0, %s811
          %s814 = sshll.u32 %s807, 4
          %s815 = int_to_ptr.vmem [resolvable:$true] %s814
          %817 = dma.hbm_to_vmem [thread:$0]  %s812, 128, %s815, %s804
        $region20: #{tpu_custom_call.1} parent=15 // pred_fallthru
          _
        // Predicated region
        $region21: #{tpu_custom_call.1} parent=15 // pred_check
          %p818 = pneg %p121
        $region22: #{tpu_custom_call.1} parent=15 // pred_check_branch
          %820 = sbr.rel (%p818) target = $region24
        $region23: #{tpu_custom_call.1} parent=15 // pred_region
          %s821 = sand.u32 %s63, 1
          %s822 = scalar_lea.sflag [#allocation7], %s821
          %s823 = sand.u32 %s111, 1
          %s824 = smul.addr %s823, 8
          %s825 = scalar_lea.vmem [#allocation6], %s824
          %s827 = ssub.s32 128, 128
          %828 = vsyncadd %s822, %s827
          %s829 = smul.addr %s70, 128
          %s830 = scalar_lea.hbm %s1, %s829
          %s832 = sshll.u32 %s825, 4
          %s833 = int_to_ptr.vmem [resolvable:$true] %s832
          %835 = dma.hbm_to_vmem [thread:$0]  %s830, 128, %s833, %s822
        $region24: #{tpu_custom_call.1} parent=15 // pred_fallthru
          _
        // Predicated region
        $region25: #{tpu_custom_call.1} parent=15 // pred_check
          %p836 = pneg %p147
        $region26: #{tpu_custom_call.1} parent=15 // pred_check_branch
          %838 = sbr.rel (%p836) target = $region28
        $region27: #{tpu_custom_call.1} parent=15 // pred_region
          %s839 = sand.u32 %s63, 1
          %s840 = scalar_lea.sflag [#allocation7], %s839
          %s841 = sand.u32 %s137, 1
          %s842 = smul.addr %s841, 8
          %s843 = scalar_lea.vmem [#allocation8], %s842
          %s845 = ssub.s32 128, 128
          %846 = vsyncadd %s840, %s845
          %s847 = smul.addr %s70, 128
          %s848 = scalar_lea.hbm %s2, %s847
          %s850 = sshll.u32 %s843, 4
          %s851 = int_to_ptr.vmem [resolvable:$true] %s850
          %853 = dma.hbm_to_vmem [thread:$0]  %s848, 128, %s851, %s840
        $region28: #{tpu_custom_call.1} parent=15 // pred_fallthru
          _
        // Predicated region
        $region29: #{tpu_custom_call.1} parent=15 // pred_check
          %p854 = pneg %p173
        $region30: #{tpu_custom_call.1} parent=15 // pred_check_branch
          %856 = sbr.rel (%p854) target = $region32
        $region31: #{tpu_custom_call.1} parent=15 // pred_region
          %s857 = sand.u32 %s63, 1
          %s858 = scalar_lea.sflag [#allocation10], %s857
          %s859 = sand.u32 %s163, 1
          %s860 = smul.addr %s859, 8
          %s861 = scalar_lea.vmem [#allocation9], %s860
          %s863 = ssub.s32 128, 128
          %864 = vsyncadd %s858, %s863
          %s865 = smul.addr %s70, 128
          %s866 = scalar_lea.hbm %s3, %s865
          %s868 = sshll.u32 %s861, 4
          %s869 = int_to_ptr.vmem [resolvable:$true] %s868
          %871 = dma.hbm_to_vmem [thread:$0]  %s866, 128, %s869, %s858
        $region32: #{tpu_custom_call.1} parent=15 // pred_fallthru
          _
        // Predicated region
        $region33: #{tpu_custom_call.1} parent=15 // pred_check
          %p872 = pneg %p199
        $region34: #{tpu_custom_call.1} parent=15 // pred_check_branch
          %874 = sbr.rel (%p872) target = $region36
        $region35: #{tpu_custom_call.1} parent=15 // pred_region
          %p875 = scmp.lt.s32.totalorder %s71, 1
          %s876 = scalar_select %p875, %s71, 1
          %s877 = smul.addr %s876, 4
          %s878 = smul.addr %s877, 4
          %s879 = scalar_lea.vmem %s4, %s878
        $region36: #{tpu_custom_call.1} parent=15 // pred_fallthru
          _
        // Predicated region
        $region37: #{tpu_custom_call.1} parent=15 // pred_check
          %p880 = pneg %p225
        $region38: #{tpu_custom_call.1} parent=15 // pred_check_branch
          %882 = sbr.rel (%p880) target = $region40
        $region39: #{tpu_custom_call.1} parent=15 // pred_region
          %s883 = sand.u32 %s63, 1
          %s884 = scalar_lea.sflag [#allocation10], %s883
          %s885 = sand.u32 %s215, 1
          %s886 = scalar_lea.vmem [#allocation11], %s885
          %s888 = ssub.s32 16, 16
          %889 = vsyncadd %s884, %s888
          %s890 = smul.addr %s71, 16
          %s891 = scalar_lea.hbm %s5, %s890
          %s893 = sshll.u32 %s886, 4
          %s894 = int_to_ptr.vmem [resolvable:$true] %s893
          %896 = dma.hbm_to_vmem [thread:$0]  %s891, 16, %s894, %s884
        $region40: #{tpu_custom_call.1} parent=15 // pred_fallthru
          _
        // Predicated region
        $region41: #{tpu_custom_call.1} parent=15 // pred_check
          %p897 = pneg %p251
        $region42: #{tpu_custom_call.1} parent=15 // pred_check_branch
          %899 = sbr.rel (%p897) target = $region44
        $region43: #{tpu_custom_call.1} parent=15 // pred_region
          %p900 = scmp.lt.s32.totalorder %s71, 1
          %s901 = scalar_select %p900, %s71, 1
          %s902 = smul.addr %s901, 4
          %s903 = smul.addr %s902, 4
          %s904 = scalar_lea.vmem %s6, %s903
        $region44: #{tpu_custom_call.1} parent=15 // pred_fallthru
          _
        // Predicated region
        $region45: #{tpu_custom_call.1} parent=15 // pred_check
          %p905 = pneg %p277
        $region46: #{tpu_custom_call.1} parent=15 // pred_check_branch
          %907 = sbr.rel (%p905) target = $region48
        $region47: #{tpu_custom_call.1} parent=15 // pred_region
          %s908 = sand.u32 %s63, 1
          %s909 = scalar_lea.sflag [#allocation13], %s908
          %s910 = sand.u32 %s267, 1
          %s911 = scalar_lea.vmem [#allocation12], %s910
          %s913 = ssub.s32 16, 16
          %914 = vsyncadd %s909, %s913
          %s915 = smul.addr %s71, 16
          %s916 = scalar_lea.hbm %s7, %s915
          %s918 = sshll.u32 %s911, 4
          %s919 = int_to_ptr.vmem [resolvable:$true] %s918
          %921 = dma.hbm_to_vmem [thread:$0]  %s916, 16, %s919, %s909
        $region48: #{tpu_custom_call.1} parent=15 // pred_fallthru
          _
        // Predicated region
        $region49: #{tpu_custom_call.1} parent=15 // pred_check
          %p922 = pneg %p303
        $region50: #{tpu_custom_call.1} parent=15 // pred_check_branch
          %924 = sbr.rel (%p922) target = $region52
        $region51: #{tpu_custom_call.1} parent=15 // pred_region
          %s925 = sand.u32 %s63, 1
          %s926 = scalar_lea.sflag [#allocation13], %s925
          %s927 = sand.u32 %s293, 1
          %s928 = scalar_lea.vmem [#allocation14], %s927
          %s930 = ssub.s32 16, 16
          %931 = vsyncadd %s926, %s930
          %s932 = smul.addr %s71, 16
          %s933 = scalar_lea.hbm %s8, %s932
          %s935 = sshll.u32 %s928, 4
          %s936 = int_to_ptr.vmem [resolvable:$true] %s935
          %938 = dma.hbm_to_vmem [thread:$0]  %s933, 16, %s936, %s926
        $region52: #{tpu_custom_call.1} parent=15 // pred_fallthru
          _
        // Predicated region
        $region53: #{tpu_custom_call.1} parent=15 // pred_check
          %p939 = pneg %p329
        $region54: #{tpu_custom_call.1} parent=15 // pred_check_branch
          %941 = sbr.rel (%p939) target = $region56
        $region55: #{tpu_custom_call.1} parent=15 // pred_region
          %s942 = sand.u32 %s63, 1
          %s943 = scalar_lea.sflag [#allocation16], %s942
          %s944 = sand.u32 %s319, 1
          %s945 = scalar_lea.vmem [#allocation15], %s944
          %s947 = ssub.s32 16, 16
          %948 = vsyncadd %s943, %s947
          %s949 = smul.addr %s71, 16
          %s950 = scalar_lea.hbm %s9, %s949
          %s952 = sshll.u32 %s945, 4
          %s953 = int_to_ptr.vmem [resolvable:$true] %s952
          %955 = dma.hbm_to_vmem [thread:$0]  %s950, 16, %s953, %s943
        $region56: #{tpu_custom_call.1} parent=15 // pred_fallthru
          _
        // Predicated region
        $region57: #{tpu_custom_call.1} parent=15 // pred_check
          %p956 = pneg %p355
        $region58: #{tpu_custom_call.1} parent=15 // pred_check_branch
          %958 = sbr.rel (%p956) target = $region60
        $region59: #{tpu_custom_call.1} parent=15 // pred_region
          %p959 = scmp.lt.s32.totalorder %s71, 1
          %s960 = scalar_select %p959, %s71, 1
          %s961 = smul.addr %s960, 4
          %s962 = smul.addr %s961, 4
          %s963 = scalar_lea.vmem %s10, %s962
        $region60: #{tpu_custom_call.1} parent=15 // pred_fallthru
          _
        // Predicated region
        $region61: #{tpu_custom_call.1} parent=15 // pred_check
          %p964 = pneg %p381
        $region62: #{tpu_custom_call.1} parent=15 // pred_check_branch
          %966 = sbr.rel (%p964) target = $region64
        $region63: #{tpu_custom_call.1} parent=15 // pred_region
          %s967 = sand.u32 %s63, 1
          %s968 = scalar_lea.sflag [#allocation16], %s967
          %s969 = sand.u32 %s371, 1
          %s970 = scalar_lea.vmem [#allocation17], %s969
          %s972 = ssub.s32 16, 16
          %973 = vsyncadd %s968, %s972
          %s974 = smul.addr %s71, 16
          %s975 = scalar_lea.hbm %s11, %s974
          %s977 = sshll.u32 %s970, 4
          %s978 = int_to_ptr.vmem [resolvable:$true] %s977
          %980 = dma.hbm_to_vmem [thread:$0]  %s975, 16, %s978, %s968
        $region64: #{tpu_custom_call.1} parent=15 // pred_fallthru
          _
        // Predicated region
        $region65: #{tpu_custom_call.1} parent=15 // pred_check
          %p981 = pneg %p407
        $region66: #{tpu_custom_call.1} parent=15 // pred_check_branch
          %983 = sbr.rel (%p981) target = $region68
        $region67: #{tpu_custom_call.1} parent=15 // pred_region
          %p984 = scmp.lt.s32.totalorder %s71, 1
          %s985 = scalar_select %p984, %s71, 1
          %s986 = smul.addr %s985, 4
          %s987 = smul.addr %s986, 4
          %s988 = scalar_lea.vmem %s12, %s987
        $region68: #{tpu_custom_call.1} parent=15 // pred_fallthru
          _
        // Predicated region
        $region69: #{tpu_custom_call.1} parent=15 // pred_check
          %p989 = pneg %p433
        $region70: #{tpu_custom_call.1} parent=15 // pred_check_branch
          %991 = sbr.rel (%p989) target = $region72
        $region71: #{tpu_custom_call.1} parent=15 // pred_region
          %s992 = sand.u32 %s63, 1
          %s993 = scalar_lea.sflag [#allocation19], %s992
          %s994 = sand.u32 %s423, 1
          %s995 = scalar_lea.vmem [#allocation18], %s994
          %s997 = ssub.s32 16, 16
          %998 = vsyncadd %s993, %s997
          %s999 = smul.addr %s71, 16
          %s1000 = scalar_lea.hbm %s13, %s999
          %s1002 = sshll.u32 %s995, 4
          %s1003 = int_to_ptr.vmem [resolvable:$true] %s1002
          %1005 = dma.hbm_to_vmem [thread:$0]  %s1000, 16, %s1003, %s993
        $region72: #{tpu_custom_call.1} parent=15 // pred_fallthru
          _
        // Predicated region
        $region73: #{tpu_custom_call.1} parent=15 // pred_check
          %p1006 = pneg %p459
        $region74: #{tpu_custom_call.1} parent=15 // pred_check_branch
          %1008 = sbr.rel (%p1006) target = $region76
        $region75: #{tpu_custom_call.1} parent=15 // pred_region
          %s1009 = sand.u32 %s63, 1
          %s1010 = scalar_lea.sflag [#allocation19], %s1009
          %s1011 = sand.u32 %s449, 1
          %s1012 = smul.addr %s1011, 16
          %s1013 = scalar_lea.vmem [#allocation20], %s1012
          %s1015 = ssub.s32 256, 256
          %1016 = vsyncadd %s1010, %s1015
          %s1017 = smul.addr %s71, 4
          %s1018 = smul.addr %s1017, 64
          %s1019 = scalar_lea.hbm %s14, %s1018
          %s1020 = sshll.u32 %s1013, 4
          %s1021 = int_to_ptr.vmem [resolvable:$true] %s1020
          %1026 = dma.hbm_to_vmem [thread:$0]  %s1019, 256, %s1021, %s1010, 64, 64, 4
        $region76: #{tpu_custom_call.1} parent=15 // pred_fallthru
          _
        // Predicated region
        $region77: #{tpu_custom_call.1} parent=15 // pred_check
          %p1027 = pneg %p485
        $region78: #{tpu_custom_call.1} parent=15 // pred_check_branch
          %1029 = sbr.rel (%p1027) target = $region80
        $region79: #{tpu_custom_call.1} parent=15 // pred_region
          %s1030 = sand.u32 %s63, 1
          %s1031 = scalar_lea.sflag [#allocation22], %s1030
          %s1032 = sand.u32 %s475, 1
          %s1033 = scalar_lea.vmem [#allocation21], %s1032
          %s1035 = ssub.s32 16, 16
          %1036 = vsyncadd %s1031, %s1035
          %s1037 = smul.addr %s71, 16
          %s1038 = scalar_lea.hbm %s15, %s1037
          %s1040 = sshll.u32 %s1033, 4
          %s1041 = int_to_ptr.vmem [resolvable:$true] %s1040
          %1043 = dma.hbm_to_vmem [thread:$0]  %s1038, 16, %s1041, %s1031
        $region80: #{tpu_custom_call.1} parent=15 // pred_fallthru
          _
        // Predicated region
        $region81: #{tpu_custom_call.1} parent=15 // pred_check
          %p1044 = pneg %p511
        $region82: #{tpu_custom_call.1} parent=15 // pred_check_branch
          %1046 = sbr.rel (%p1044) target = $region84
        $region83: #{tpu_custom_call.1} parent=15 // pred_region
          %s1047 = sand.u32 %s63, 1
          %s1048 = scalar_lea.sflag [#allocation22], %s1047
          %s1049 = sand.u32 %s501, 1
          %s1050 = scalar_lea.vmem [#allocation23], %s1049
          %s1052 = ssub.s32 16, 16
          %1053 = vsyncadd %s1048, %s1052
          %s1054 = smul.addr %s71, 16
          %s1055 = scalar_lea.hbm %s16, %s1054
          %s1057 = sshll.u32 %s1050, 4
          %s1058 = int_to_ptr.vmem [resolvable:$true] %s1057
          %1060 = dma.hbm_to_vmem [thread:$0]  %s1055, 16, %s1058, %s1048
        $region84: #{tpu_custom_call.1} parent=15 // pred_fallthru
          _
        // Predicated region
        $region85: #{tpu_custom_call.1} parent=15 // pred_check
          %p1061 = pneg %p537
        $region86: #{tpu_custom_call.1} parent=15 // pred_check_branch
          %1063 = sbr.rel (%p1061) target = $region88
        $region87: #{tpu_custom_call.1} parent=15 // pred_region
          %s1064 = sand.u32 %s63, 1
          %s1065 = scalar_lea.sflag [#allocation25], %s1064
          %s1066 = sand.u32 %s527, 1
          %s1067 = scalar_lea.vmem [#allocation24], %s1066
          %s1069 = ssub.s32 16, 16
          %1070 = vsyncadd %s1065, %s1069
          %s1071 = smul.addr %s71, 16
          %s1072 = scalar_lea.hbm %s17, %s1071
          %s1074 = sshll.u32 %s1067, 4
          %s1075 = int_to_ptr.vmem [resolvable:$true] %s1074
          %1077 = dma.hbm_to_vmem [thread:$0]  %s1072, 16, %s1075, %s1065
        $region88: #{tpu_custom_call.1} parent=15 // pred_fallthru
          _
        // Predicated region
        $region89: #{tpu_custom_call.1} parent=15 // pred_check
          %p1078 = pneg %p563
        $region90: #{tpu_custom_call.1} parent=15 // pred_check_branch
          %1080 = sbr.rel (%p1078) target = $region92
        $region91: #{tpu_custom_call.1} parent=15 // pred_region
          %s1081 = sand.u32 %s63, 1
          %s1082 = scalar_lea.sflag [#allocation25], %s1081
          %s1083 = sand.u32 %s553, 1
          %s1084 = smul.addr %s1083, 16
          %s1085 = scalar_lea.vmem [#allocation26], %s1084
          %s1087 = ssub.s32 256, 256
          %1088 = vsyncadd %s1082, %s1087
          %s1089 = smul.addr %s71, 4
          %s1090 = smul.addr %s1089, 64
          %s1091 = scalar_lea.hbm %s18, %s1090
          %s1092 = sshll.u32 %s1085, 4
          %s1093 = int_to_ptr.vmem [resolvable:$true] %s1092
          %1098 = dma.hbm_to_vmem [thread:$0]  %s1091, 256, %s1093, %s1082, 64, 64, 4
        $region92: #{tpu_custom_call.1} parent=15 // pred_fallthru
          _
        // Predicated region
        $region93: #{tpu_custom_call.1} parent=15 // pred_check
          %p1099 = pneg %p589
        $region94: #{tpu_custom_call.1} parent=15 // pred_check_branch
          %1101 = sbr.rel (%p1099) target = $region96
        $region95: #{tpu_custom_call.1} parent=15 // pred_region
          %p1102 = scmp.lt.s32.totalorder %s71, 1
          %s1103 = scalar_select %p1102, %s71, 1
          %s1104 = scalar_lea.vmem %s19, %s1103
        $region96: #{tpu_custom_call.1} parent=15 // pred_fallthru
          _
        // Predicated region
        $region97: #{tpu_custom_call.1} parent=15 // pred_check
          %p1105 = pneg %p615
        $region98: #{tpu_custom_call.1} parent=15 // pred_check_branch
          %1107 = sbr.rel (%p1105) target = $region100
        $region99: #{tpu_custom_call.1} parent=15 // pred_region
          %p1108 = scmp.lt.s32.totalorder %s71, 1
          %s1109 = scalar_select %p1108, %s71, 1
          %s1110 = smul.addr %s1109, 8
          %s1111 = smul.addr %s1110, 4
          %s1112 = scalar_lea.vmem %s20, %s1111
        $region100: #{tpu_custom_call.1} parent=15 // pred_fallthru
          _
        // Predicated region
        $region101: #{tpu_custom_call.1} parent=15 // pred_check
          %p1113 = pneg %p641
        $region102: #{tpu_custom_call.1} parent=15 // pred_check_branch
          %1115 = sbr.rel (%p1113) target = $region104
        $region103: #{tpu_custom_call.1} parent=15 // pred_region
          %p1116 = scmp.lt.s32.totalorder %s71, 1
          %s1117 = scalar_select %p1116, %s71, 1
          %s1118 = scalar_lea.vmem %s21, %s1117
        $region104: #{tpu_custom_call.1} parent=15 // pred_fallthru
          _
        // Predicated region
        $region105: #{tpu_custom_call.1} parent=15 // pred_check
          %p1119 = pneg %p667
        $region106: #{tpu_custom_call.1} parent=15 // pred_check_branch
          %1121 = sbr.rel (%p1119) target = $region108
        $region107: #{tpu_custom_call.1} parent=15 // pred_region
          %p1122 = scmp.lt.s32.totalorder %s71, 1
          %s1123 = scalar_select %p1122, %s71, 1
          %s1124 = scalar_lea.vmem %s22, %s1123
        $region108: #{tpu_custom_call.1} parent=15 // pred_fallthru
          _
        // Predicated region
        $region109: #{tpu_custom_call.1} parent=15 // pred_check
          %p1125 = pneg %p693
        $region110: #{tpu_custom_call.1} parent=15 // pred_check_branch
          %1127 = sbr.rel (%p1125) target = $region112
        $region111: #{tpu_custom_call.1} parent=15 // pred_region
          %p1128 = scmp.lt.s32.totalorder %s71, 1
          %s1129 = scalar_select %p1128, %s71, 1
          %s1130 = scalar_lea.vmem %s23, %s1129
        $region112: #{tpu_custom_call.1} parent=15 // pred_fallthru
          _
      $region16: #{tpu_custom_call.1} parent=5 // pred_fallthru
        _
      %p1131 = scmp.le.s32.totalorder 1, %s63
      %p1132 = scmp.lt.s32.totalorder %s63, 5
      %p1133 = pnand %p1131, %p1132
      %p1134 = pneg %p1133
      // Predicated region
      $region113: #{tpu_custom_call.1} parent=5 // pred_check
        _
      $region114: #{tpu_custom_call.1} parent=5 // pred_check_branch
        %1136 = sbr.rel (%p1133) target = $region116
      $region115: #{tpu_custom_call.1} parent=5 // pred_region
        %s1137 = ssub.s32 %s63, 1
        %s1138 = sand.u32 %s88, 1
        %s1139 = scalar_lea.sflag [#allocation4], %s1138
        %s1140 = sand.u32 %s88, 1
        %s1141 = smul.addr %s1140, 8
        %s1142 = scalar_lea.vmem [#allocation3], %s1141
        // Predicated region
        $region117: #{tpu_custom_call.1} parent=115 // pred_check
          %p1143 = pneg %p101
        $region118: #{tpu_custom_call.1} parent=115 // pred_check_branch
          %1145 = sbr.rel (%p1143) target = $region120
        $region119: #{tpu_custom_call.1} parent=115 // pred_region
          %1146 = dma.done %s1139, 128
        $region120: #{tpu_custom_call.1} parent=115 // pred_fallthru
          _
        %s1147 = sand.u32 %s68, 1
        %s1148 = scalar_lea.sflag [#allocation7], %s1147
        %s1149 = sand.u32 %s114, 1
        %s1150 = smul.addr %s1149, 8
        %s1151 = scalar_lea.vmem [#allocation6], %s1150
        // Predicated region
        $region121: #{tpu_custom_call.1} parent=115 // pred_check
          %p1152 = pneg %p127
        $region122: #{tpu_custom_call.1} parent=115 // pred_check_branch
          %1154 = sbr.rel (%p1152) target = $region124
        $region123: #{tpu_custom_call.1} parent=115 // pred_region
          %1155 = dma.done %s1148, 128
        $region124: #{tpu_custom_call.1} parent=115 // pred_fallthru
          _
        %s1156 = sand.u32 %s68, 1
        %s1157 = scalar_lea.sflag [#allocation7], %s1156
        %s1158 = sand.u32 %s140, 1
        %s1159 = smul.addr %s1158, 8
        %s1160 = scalar_lea.vmem [#allocation8], %s1159
        // Predicated region
        $region125: #{tpu_custom_call.1} parent=115 // pred_check
          %p1161 = pneg %p153
        $region126: #{tpu_custom_call.1} parent=115 // pred_check_branch
          %1163 = sbr.rel (%p1161) target = $region128
        $region127: #{tpu_custom_call.1} parent=115 // pred_region
          %1164 = dma.done %s1157, 128
        $region128: #{tpu_custom_call.1} parent=115 // pred_fallthru
          _
        %s1165 = sand.u32 %s68, 1
        %s1166 = scalar_lea.sflag [#allocation10], %s1165
        %s1167 = sand.u32 %s166, 1
        %s1168 = smul.addr %s1167, 8
        %s1169 = scalar_lea.vmem [#allocation9], %s1168
        // Predicated region
        $region129: #{tpu_custom_call.1} parent=115 // pred_check
          %p1170 = pneg %p179
        $region130: #{tpu_custom_call.1} parent=115 // pred_check_branch
          %1172 = sbr.rel (%p1170) target = $region132
        $region131: #{tpu_custom_call.1} parent=115 // pred_region
          %1173 = dma.done %s1166, 128
        $region132: #{tpu_custom_call.1} parent=115 // pred_fallthru
          _
        %s1174 = sand.u32 %s68, 1
        %s1175 = scalar_lea.sflag [#allocation10], %s1174
        %s1176 = sand.u32 %s218, 1
        %s1177 = scalar_lea.vmem [#allocation11], %s1176
        // Predicated region
        $region133: #{tpu_custom_call.1} parent=115 // pred_check
          %p1178 = pneg %p231
        $region134: #{tpu_custom_call.1} parent=115 // pred_check_branch
          %1180 = sbr.rel (%p1178) target = $region136
        $region135: #{tpu_custom_call.1} parent=115 // pred_region
          %1181 = dma.done %s1175, 16
        $region136: #{tpu_custom_call.1} parent=115 // pred_fallthru
          _
        %s1182 = sand.u32 %s68, 1
        %s1183 = scalar_lea.sflag [#allocation13], %s1182
        %s1184 = sand.u32 %s270, 1
        %s1185 = scalar_lea.vmem [#allocation12], %s1184
        // Predicated region
        $region137: #{tpu_custom_call.1} parent=115 // pred_check
          %p1186 = pneg %p283
        $region138: #{tpu_custom_call.1} parent=115 // pred_check_branch
          %1188 = sbr.rel (%p1186) target = $region140
        $region139: #{tpu_custom_call.1} parent=115 // pred_region
          %1189 = dma.done %s1183, 16
        $region140: #{tpu_custom_call.1} parent=115 // pred_fallthru
          _
        %s1190 = sand.u32 %s68, 1
        %s1191 = scalar_lea.sflag [#allocation13], %s1190
        %s1192 = sand.u32 %s296, 1
        %s1193 = scalar_lea.vmem [#allocation14], %s1192
        // Predicated region
        $region141: #{tpu_custom_call.1} parent=115 // pred_check
          %p1194 = pneg %p309
        $region142: #{tpu_custom_call.1} parent=115 // pred_check_branch
          %1196 = sbr.rel (%p1194) target = $region144
        $region143: #{tpu_custom_call.1} parent=115 // pred_region
          %1197 = dma.done %s1191, 16
        $region144: #{tpu_custom_call.1} parent=115 // pred_fallthru
          _
        %s1198 = sand.u32 %s68, 1
        %s1199 = scalar_lea.sflag [#allocation16], %s1198
        %s1200 = sand.u32 %s322, 1
        %s1201 = scalar_lea.vmem [#allocation15], %s1200
        // Predicated region
        $region145: #{tpu_custom_call.1} parent=115 // pred_check
          %p1202 = pneg %p335
        $region146: #{tpu_custom_call.1} parent=115 // pred_check_branch
          %1204 = sbr.rel (%p1202) target = $region148
        $region147: #{tpu_custom_call.1} parent=115 // pred_region
          %1205 = dma.done %s1199, 16
        $region148: #{tpu_custom_call.1} parent=115 // pred_fallthru
          _
        %s1206 = sand.u32 %s68, 1
        %s1207 = scalar_lea.sflag [#allocation16], %s1206
        %s1208 = sand.u32 %s374, 1
        %s1209 = scalar_lea.vmem [#allocation17], %s1208
        // Predicated region
        $region149: #{tpu_custom_call.1} parent=115 // pred_check
          %p1210 = pneg %p387
        $region150: #{tpu_custom_call.1} parent=115 // pred_check_branch
          %1212 = sbr.rel (%p1210) target = $region152
        $region151: #{tpu_custom_call.1} parent=115 // pred_region
          %1213 = dma.done %s1207, 16
        $region152: #{tpu_custom_call.1} parent=115 // pred_fallthru
          _
        %s1214 = sand.u32 %s68, 1
        %s1215 = scalar_lea.sflag [#allocation19], %s1214
        %s1216 = sand.u32 %s426, 1
        %s1217 = scalar_lea.vmem [#allocation18], %s1216
        // Predicated region
        $region153: #{tpu_custom_call.1} parent=115 // pred_check
          %p1218 = pneg %p439
        $region154: #{tpu_custom_call.1} parent=115 // pred_check_branch
          %1220 = sbr.rel (%p1218) target = $region156
        $region155: #{tpu_custom_call.1} parent=115 // pred_region
          %1221 = dma.done %s1215, 16
        $region156: #{tpu_custom_call.1} parent=115 // pred_fallthru
          _
        %s1222 = sand.u32 %s68, 1
        %s1223 = scalar_lea.sflag [#allocation19], %s1222
        %s1224 = sand.u32 %s452, 1
        %s1225 = smul.addr %s1224, 16
        %s1226 = scalar_lea.vmem [#allocation20], %s1225
        // Predicated region
        $region157: #{tpu_custom_call.1} parent=115 // pred_check
          %p1227 = pneg %p465
        $region158: #{tpu_custom_call.1} parent=115 // pred_check_branch
          %1229 = sbr.rel (%p1227) target = $region160
        $region159: #{tpu_custom_call.1} parent=115 // pred_region
          %1230 = dma.done %s1223, 256
        $region160: #{tpu_custom_call.1} parent=115 // pred_fallthru
          _
        %s1231 = sand.u32 %s68, 1
        %s1232 = scalar_lea.sflag [#allocation22], %s1231
        %s1233 = sand.u32 %s478, 1
        %s1234 = scalar_lea.vmem [#allocation21], %s1233
        // Predicated region
        $region161: #{tpu_custom_call.1} parent=115 // pred_check
          %p1235 = pneg %p491
        $region162: #{tpu_custom_call.1} parent=115 // pred_check_branch
          %1237 = sbr.rel (%p1235) target = $region164
        $region163: #{tpu_custom_call.1} parent=115 // pred_region
          %1238 = dma.done %s1232, 16
        $region164: #{tpu_custom_call.1} parent=115 // pred_fallthru
          _
        %s1239 = sand.u32 %s68, 1
        %s1240 = scalar_lea.sflag [#allocation22], %s1239
        %s1241 = sand.u32 %s504, 1
        %s1242 = scalar_lea.vmem [#allocation23], %s1241
        // Predicated region
        $region165: #{tpu_custom_call.1} parent=115 // pred_check
          %p1243 = pneg %p517
        $region166: #{tpu_custom_call.1} parent=115 // pred_check_branch
          %1245 = sbr.rel (%p1243) target = $region168
        $region167: #{tpu_custom_call.1} parent=115 // pred_region
          %1246 = dma.done %s1240, 16
        $region168: #{tpu_custom_call.1} parent=115 // pred_fallthru
          _
        %s1247 = sand.u32 %s68, 1
        %s1248 = scalar_lea.sflag [#allocation25], %s1247
        %s1249 = sand.u32 %s530, 1
        %s1250 = scalar_lea.vmem [#allocation24], %s1249
        // Predicated region
        $region169: #{tpu_custom_call.1} parent=115 // pred_check
          %p1251 = pneg %p543
        $region170: #{tpu_custom_call.1} parent=115 // pred_check_branch
          %1253 = sbr.rel (%p1251) target = $region172
        $region171: #{tpu_custom_call.1} parent=115 // pred_region
          %1254 = dma.done %s1248, 16
        $region172: #{tpu_custom_call.1} parent=115 // pred_fallthru
          _
        %s1255 = sand.u32 %s68, 1
        %s1256 = scalar_lea.sflag [#allocation25], %s1255
        %s1257 = sand.u32 %s556, 1
        %s1258 = smul.addr %s1257, 16
        %s1259 = scalar_lea.vmem [#allocation26], %s1258
        // Predicated region
        $region173: #{tpu_custom_call.1} parent=115 // pred_check
          %p1260 = pneg %p569
        $region174: #{tpu_custom_call.1} parent=115 // pred_check_branch
          %1262 = sbr.rel (%p1260) target = $region176
        $region175: #{tpu_custom_call.1} parent=115 // pred_region
          %1263 = dma.done %s1256, 256
        $region176: #{tpu_custom_call.1} parent=115 // pred_fallthru
          _
        %s1264 = sand.u32 %s88, 1
        %s1265 = scalar_lea.sflag [#allocation4], %s1264
        %s1266 = sand.u32 %s88, 1
        %s1267 = smul.addr %s1266, 8
        %s1268 = scalar_lea.vmem [#allocation3], %s1267
        %p1269 = pneg %p101
        %p1270 = pneg %p98
        %s1271 = sand.u32 %s68, 1
        %s1272 = scalar_lea.sflag [#allocation7], %s1271
        %s1273 = sand.u32 %s114, 1
        %s1274 = smul.addr %s1273, 8
        %s1275 = scalar_lea.vmem [#allocation6], %s1274
        %p1276 = pneg %p127
        %p1277 = pneg %p124
        %s1278 = sand.u32 %s68, 1
        %s1279 = scalar_lea.sflag [#allocation7], %s1278
        %s1280 = sand.u32 %s140, 1
        %s1281 = smul.addr %s1280, 8
        %s1282 = scalar_lea.vmem [#allocation8], %s1281
        %p1283 = pneg %p153
        %p1284 = pneg %p150
        %s1285 = sand.u32 %s68, 1
        %s1286 = scalar_lea.sflag [#allocation10], %s1285
        %s1287 = sand.u32 %s166, 1
        %s1288 = smul.addr %s1287, 8
        %s1289 = scalar_lea.vmem [#allocation9], %s1288
        %p1290 = pneg %p179
        %p1291 = pneg %p176
        %p1292 = scmp.lt.s32.totalorder %s73, 1
        %s1293 = scalar_select %p1292, %s73, 1
        %s1294 = smul.addr %s1293, 4
        %s1295 = smul.addr %s1294, 4
        %s1296 = scalar_lea.vmem %s4, %s1295
        %p1297 = pneg %p205
        %p1298 = pneg %p202
        %s1299 = sand.u32 %s68, 1
        %s1300 = scalar_lea.sflag [#allocation10], %s1299
        %s1301 = sand.u32 %s218, 1
        %s1302 = scalar_lea.vmem [#allocation11], %s1301
        %p1303 = pneg %p231
        %p1304 = pneg %p228
        %p1305 = scmp.lt.s32.totalorder %s73, 1
        %s1306 = scalar_select %p1305, %s73, 1
        %s1307 = smul.addr %s1306, 4
        %s1308 = smul.addr %s1307, 4
        %s1309 = scalar_lea.vmem %s6, %s1308
        %p1310 = pneg %p257
        %p1311 = pneg %p254
        %s1312 = sand.u32 %s68, 1
        %s1313 = scalar_lea.sflag [#allocation13], %s1312
        %s1314 = sand.u32 %s270, 1
        %s1315 = scalar_lea.vmem [#allocation12], %s1314
        %p1316 = pneg %p283
        %p1317 = pneg %p280
        %s1318 = sand.u32 %s68, 1
        %s1319 = scalar_lea.sflag [#allocation13], %s1318
        %s1320 = sand.u32 %s296, 1
        %s1321 = scalar_lea.vmem [#allocation14], %s1320
        %p1322 = pneg %p309
        %p1323 = pneg %p306
        %s1324 = sand.u32 %s68, 1
        %s1325 = scalar_lea.sflag [#allocation16], %s1324
        %s1326 = sand.u32 %s322, 1
        %s1327 = scalar_lea.vmem [#allocation15], %s1326
        %p1328 = pneg %p335
        %p1329 = pneg %p332
        %p1330 = scmp.lt.s32.totalorder %s73, 1
        %s1331 = scalar_select %p1330, %s73, 1
        %s1332 = smul.addr %s1331, 4
        %s1333 = smul.addr %s1332, 4
        %s1334 = scalar_lea.vmem %s10, %s1333
        %p1335 = pneg %p361
        %p1336 = pneg %p358
        %s1337 = sand.u32 %s68, 1
        %s1338 = scalar_lea.sflag [#allocation16], %s1337
        %s1339 = sand.u32 %s374, 1
        %s1340 = scalar_lea.vmem [#allocation17], %s1339
        %p1341 = pneg %p387
        %p1342 = pneg %p384
        %p1343 = scmp.lt.s32.totalorder %s73, 1
        %s1344 = scalar_select %p1343, %s73, 1
        %s1345 = smul.addr %s1344, 4
        %s1346 = smul.addr %s1345, 4
        %s1347 = scalar_lea.vmem %s12, %s1346
        %p1348 = pneg %p413
        %p1349 = pneg %p410
        %s1350 = sand.u32 %s68, 1
        %s1351 = scalar_lea.sflag [#allocation19], %s1350
        %s1352 = sand.u32 %s426, 1
        %s1353 = scalar_lea.vmem [#allocation18], %s1352
        %p1354 = pneg %p439
        %p1355 = pneg %p436
        %s1356 = sand.u32 %s68, 1
        %s1357 = scalar_lea.sflag [#allocation19], %s1356
        %s1358 = sand.u32 %s452, 1
        %s1359 = smul.addr %s1358, 16
        %s1360 = scalar_lea.vmem [#allocation20], %s1359
        %p1361 = pneg %p465
        %p1362 = pneg %p462
        %s1363 = sand.u32 %s68, 1
        %s1364 = scalar_lea.sflag [#allocation22], %s1363
        %s1365 = sand.u32 %s478, 1
        %s1366 = scalar_lea.vmem [#allocation21], %s1365
        %p1367 = pneg %p491
        %p1368 = pneg %p488
        %s1369 = sand.u32 %s68, 1
        %s1370 = scalar_lea.sflag [#allocation22], %s1369
        %s1371 = sand.u32 %s504, 1
        %s1372 = scalar_lea.vmem [#allocation23], %s1371
        %p1373 = pneg %p517
        %p1374 = pneg %p514
        %s1375 = sand.u32 %s68, 1
        %s1376 = scalar_lea.sflag [#allocation25], %s1375
        %s1377 = sand.u32 %s530, 1
        %s1378 = scalar_lea.vmem [#allocation24], %s1377
        %p1379 = pneg %p543
        %p1380 = pneg %p540
        %s1381 = sand.u32 %s68, 1
        %s1382 = scalar_lea.sflag [#allocation25], %s1381
        %s1383 = sand.u32 %s556, 1
        %s1384 = smul.addr %s1383, 16
        %s1385 = scalar_lea.vmem [#allocation26], %s1384
        %p1386 = pneg %p569
        %p1387 = pneg %p566
        %p1388 = scmp.lt.s32.totalorder %s73, 1
        %s1389 = scalar_select %p1388, %s73, 1
        %s1390 = scalar_lea.vmem %s19, %s1389
        %p1391 = pneg %p595
        %p1392 = pneg %p592
        %p1393 = scmp.lt.s32.totalorder %s73, 1
        %s1394 = scalar_select %p1393, %s73, 1
        %s1395 = smul.addr %s1394, 8
        %s1396 = smul.addr %s1395, 4
        %s1397 = scalar_lea.vmem %s20, %s1396
        %p1398 = pneg %p621
        %p1399 = pneg %p618
        %p1400 = scmp.lt.s32.totalorder %s73, 1
        %s1401 = scalar_select %p1400, %s73, 1
        %s1402 = scalar_lea.vmem %s21, %s1401
        %p1403 = pneg %p647
        %p1404 = pneg %p644
        %p1405 = scmp.lt.s32.totalorder %s73, 1
        %s1406 = scalar_select %p1405, %s73, 1
        %s1407 = scalar_lea.vmem %s22, %s1406
        %p1408 = pneg %p673
        %p1409 = pneg %p670
        %p1410 = scmp.lt.s32.totalorder %s73, 1
        %s1411 = scalar_select %p1410, %s73, 1
        %s1412 = scalar_lea.vmem %s23, %s1411
        %p1413 = pneg %p699
        %p1414 = pneg %p696
        %p1415 = pneg %p725
        %p1416 = pneg %p722
        %s1417 = sand.u32 %s712, 1
        %s1418 = scalar_lea.sflag [#allocation5], %s1417
        %s1419 = sand.u32 %s712, 1
        %s1420 = smul.addr %s1419, 8
        %s1421 = scalar_lea.vmem [#allocation27], %s1420
        %p1422 = pneg %p753
        %p1423 = pneg %p750
        %s1424 = sand.u32 %s68, 1
        %s1425 = scalar_lea.sflag [#allocation29], %s1424
        %s1426 = sand.u32 %s740, 1
        %s1427 = smul.addr %s1426, 32
        %s1428 = scalar_lea.vmem [#allocation28], %s1427
        %p1429 = pneg %p781
        %p1430 = pneg %p778
        %s1431 = sand.u32 %s68, 1
        %s1432 = scalar_lea.sflag [#allocation29], %s1431
        %s1433 = sand.u32 %s768, 1
        %s1434 = smul.addr %s1433, 32
        %s1435 = scalar_lea.vmem [#allocation30], %s1434
        %p1436 = scmp.lt.s32.totalorder %s73, 1
        %s1437 = scalar_select %p1436, %s73, 1
        %s1438 = smul.addr %s1437, 4
        %s1439 = smul.addr %s1438, 4
        %s1440 = scalar_lea.vmem %s4, %s1439
        %p1441 = scmp.lt.s32.totalorder %s73, 1
        %s1442 = scalar_select %p1441, %s73, 1
        %s1443 = smul.addr %s1442, 4
        %s1444 = smul.addr %s1443, 4
        %s1445 = scalar_lea.vmem %s6, %s1444
        %p1446 = scmp.lt.s32.totalorder %s73, 1
        %s1447 = scalar_select %p1446, %s73, 1
        %s1448 = smul.addr %s1447, 4
        %s1449 = smul.addr %s1448, 4
        %s1450 = scalar_lea.vmem %s10, %s1449
        %p1451 = scmp.lt.s32.totalorder %s73, 1
        %s1452 = scalar_select %p1451, %s73, 1
        %s1453 = smul.addr %s1452, 4
        %s1454 = smul.addr %s1453, 4
        %s1455 = scalar_lea.vmem %s12, %s1454
        %p1456 = scmp.lt.s32.totalorder %s73, 1
        %s1457 = scalar_select %p1456, %s73, 1
        %s1458 = scalar_lea.vmem %s19, %s1457
        %p1459 = scmp.lt.s32.totalorder %s73, 1
        %s1460 = scalar_select %p1459, %s73, 1
        %s1461 = smul.addr %s1460, 8
        %s1462 = smul.addr %s1461, 4
        %s1463 = scalar_lea.vmem %s20, %s1462
        %p1464 = scmp.lt.s32.totalorder %s73, 1
        %s1465 = scalar_select %p1464, %s73, 1
        %s1466 = scalar_lea.vmem %s21, %s1465
        %p1467 = scmp.lt.s32.totalorder %s73, 1
        %s1468 = scalar_select %p1467, %s73, 1
        %s1469 = scalar_lea.vmem %s22, %s1468
        %p1470 = scmp.lt.s32.totalorder %s73, 1
        %s1471 = scalar_select %p1470, %s73, 1
        %s1472 = scalar_lea.vmem %s23, %s1471
        %p1474 = scmp.eq.s32.totalorder %s73, 0
        // Predicated region
        $region177: #{tpu_custom_call.1} parent=115 // pred_check
          %p1475 = pneg %p1474
        $region178: #{tpu_custom_call.1} parent=115 // pred_check_branch
          %1477 = sbr.rel (%p1475) target = $region180
        $region179: #{tpu_custom_call.1} parent=115 // pred_region
          %v1478 = vld [vmem:[%s1142] sm:$0xff]
          %vm1479 = vcmask 261120
          %1480 = vst.msk [vmem:[#allocation2] sm:$0xff] %vm1479, %v1478
        $region180: #{tpu_custom_call.1} parent=115 // pred_fallthru
          _
        %v1481 = vld [vmem:[#allocation2] sm:$0xff]
        %v1482 = vld [vmem:[%s1151] sm:$0xff]
        %v1483 = vld [vmem:[%s1160] sm:$0xff]
        %vm1484 = vcmp.eq.f32.partialorder %v1483, 0.0
        %v1485 = vsel %vm1484, -1e+09, 0.0
        %v1486 = vld [vmem:[%s1169] sm:$0xff]
        %vm1487 = vcmp.eq.f32.partialorder %v1486, 0.0
        %v1488 = vsel %vm1487, -1e+09, 0.0
        %v1489 = vpack.c.bf16 %v1481, %v1481
        %v1490 = vld [vmem:[%s1440] sm:$0xf]
        %v1491 = vld [vmem:[%s1440 + $0x4] sm:$0xf]
        %v1492 = vld [vmem:[%s1440 + $0x8] sm:$0xf]
        %v1493 = vld [vmem:[%s1440 + $0xc] sm:$0xf]
        %v1494 = vld [vmem:[%s1177] sm:$0x1]
        %v1496 = vlaneseq
        %v1497 = vshrl.u32 %v1496, 7
        %v1498 = vsub.s32 0, %v1497
        %v1499 = vrot.slane %v1494, %v1498
        %v1505 = vunpack.c.l.b16 %v1490
        %v1506 = vunpack.c.l.b16 %v1491
        %v1507 = vunpack.c.l.b16 %v1492
        %v1508 = vunpack.c.l.b16 %v1493
        %v1509 = vpack.c.b16 %v1506, %v1505
        %v1510 = vpack.c.b16 %v1508, %v1507
        %vm1513 = vcmask 261120
        %v1515 = vsel %vm1513, %v1489, 0
        %1517 = vmatprep.subr.bf16.mxu0 0
        %1518 = vmatpush1.bf16.msra.mxu0 %v1509
        %1519 = vmatprep.subr.bf16.mxu0 0
        %1520 = vmatpush1.bf16.msra.mxu0 %v1510
        %1521 = vmatprep.subr.bf16.mxu0 0
        %1522 = vmatpush1.bf16.msra.mxu0 0
        %1523 = vmatprep.subr.bf16.mxu0 0
        %1524 = vmatpush1.bf16.msra.mxu0 0
        %1525 = vmatprep.subr.bf16.mxu0 0
        %1526 = vmatpush1.bf16.msra.mxu0 0
        %1527 = vmatprep.subr.bf16.mxu0 0
        %1528 = vmatpush1.bf16.msra.mxu0 0
        %1529 = vmatprep.subr.bf16.mxu0 0
        %1530 = vmatpush1.bf16.msra.mxu0 0
        %1531 = vmatprep.subr.bf16.mxu0 0
        %1532 = vmatpush1.bf16.msra.mxu0 0
        %1533 = vmatprep.subr.bf16.mxu0 0
        %1534 = vmatpush1.bf16.msra.mxu0 0
        %1535 = vmatprep.subr.bf16.mxu0 0
        %1536 = vmatpush1.bf16.msra.mxu0 0
        %1537 = vmatprep.subr.bf16.mxu0 0
        %1538 = vmatpush1.bf16.msra.mxu0 0
        %1539 = vmatprep.subr.bf16.mxu0 0
        %1540 = vmatpush1.bf16.msra.mxu0 0
        %1541 = vmatprep.subr.bf16.mxu0 0
        %1542 = vmatpush1.bf16.msra.mxu0 0
        %1543 = vmatprep.subr.bf16.mxu0 0
        %1544 = vmatpush1.bf16.msra.mxu0 0
        %1545 = vmatprep.subr.bf16.mxu0 0
        %1546 = vmatpush1.bf16.msra.mxu0 0
        %1547 = vmatprep.subr.bf16.mxu0 0
        %1548 = vmatpush1.bf16.msra.mxu0 0
        %1549 = vmatprep.mubr.bf16.mxu0 0
        %1550 = vmatmul.mubr.bf16.gmra.mrb[0].mxu0 %v1515
        %v1551 = vpop.f32.mrb[0].mxu0
        %v1552 = vadd.f32 %v1499, %v1551
        %v1553 = vpop.f32.mrb[0].mxu0
        %v1554 = vpop.f32.mrb[0].mxu0
        %v1555 = vpop.f32.mrb[0].mxu0
        %1556 = vdwg.mxu0
        %1558 = vrot.lane.b32.xlu0 %v1552, 120
        %v1559 = vpop.permute.xlu0 %1558
        %1561 = vrot.lane.b32.xlu0 %v1552, 112
        %v1562 = vpop.permute.xlu0 %1561
        %1564 = vrot.lane.b32.xlu0 %v1552, 104
        %v1565 = vpop.permute.xlu0 %1564
        %v1567 = vcombine.low %v1552, %v1562
        %v1568 = vcombine.high %v1552, %v1562
        %v1570 = vunpack.c.l.s4 1983009808
        %v1571 = vunpack.c.0.s8 %v1570
        %v1572 = vlaneseq
        %v1573 = vshrl.u32 %v1572, 7
        %v1574 = vsub.s32 %v1571, %v1573
        %v1575 = vrot.slane %v1567, %v1574
        %v1577 = vunpack.c.l.s4 1983009808
        %v1578 = vunpack.c.0.s8 %v1577
        %v1579 = vlaneseq
        %v1580 = vshrl.u32 %v1579, 7
        %v1581 = vsub.s32 %v1578, %v1580
        %v1582 = vrot.slane %v1568, %v1581
        %v1583 = vcombine.low %v1559, %v1565
        %v1584 = vcombine.high %v1559, %v1565
        %v1586 = vunpack.c.l.s4 1983009808
        %v1587 = vunpack.c.0.s8 %v1586
        %v1588 = vlaneseq
        %v1589 = vshrl.u32 %v1588, 7
        %v1590 = vsub.s32 %v1587, %v1589
        %v1591 = vrot.slane %v1583, %v1590
        %v1593 = vunpack.c.l.s4 1983009808
        %v1594 = vunpack.c.0.s8 %v1593
        %v1595 = vlaneseq
        %v1596 = vshrl.u32 %v1595, 7
        %v1597 = vsub.s32 %v1594, %v1596
        %v1598 = vrot.slane %v1584, %v1597
        %v1599 = vcombine.low %v1575, %v1591
        %v1600 = vcombine.high %v1575, %v1591
        %v1602 = vunpack.c.l.s4 1934713408
        %v1603 = vunpack.c.0.s8 %v1602
        %v1604 = vlaneseq
        %v1605 = vshrl.u32 %v1604, 7
        %v1606 = vsub.s32 %v1603, %v1605
        %v1607 = vrot.slane %v1599, %v1606
        %v1609 = vunpack.c.l.s4 1934713408
        %v1610 = vunpack.c.0.s8 %v1609
        %v1611 = vlaneseq
        %v1612 = vshrl.u32 %v1611, 7
        %v1613 = vsub.s32 %v1610, %v1612
        %v1614 = vrot.slane %v1600, %v1613
        %v1615 = vcombine.low %v1582, %v1598
        %v1616 = vcombine.high %v1582, %v1598
        %v1618 = vunpack.c.l.s4 1934713408
        %v1619 = vunpack.c.0.s8 %v1618
        %v1620 = vlaneseq
        %v1621 = vshrl.u32 %v1620, 7
        %v1622 = vsub.s32 %v1619, %v1621
        %v1623 = vrot.slane %v1615, %v1622
        %v1625 = vunpack.c.l.s4 1934713408
        %v1626 = vunpack.c.0.s8 %v1625
        %v1627 = vlaneseq
        %v1628 = vshrl.u32 %v1627, 7
        %v1629 = vsub.s32 %v1626, %v1628
        %v1630 = vrot.slane %v1616, %v1629
        %v1631 = vcombine.high %v1607, 0.0
        %v1632 = vcombine.high %v1614, 0.0
        %v1633 = vcombine.high %v1623, 0.0
        %v1634 = vcombine.high %v1630, 0.0
        %v1635 = vcombine.low %v1607, %v1614
        %v1637 = vunpack.c.l.s4 1983009808
        %v1638 = vunpack.c.0.s8 %v1637
        %v1639 = vlaneseq
        %v1640 = vshrl.u32 %v1639, 7
        %v1641 = vsub.s32 %v1638, %v1640
        %v1642 = vrot.slane %v1635, %v1641
        %v1643 = vcombine.low %v1631, %v1632
        %v1645 = vunpack.c.l.s4 1983009808
        %v1646 = vunpack.c.0.s8 %v1645
        %v1647 = vlaneseq
        %v1648 = vshrl.u32 %v1647, 7
        %v1649 = vsub.s32 %v1646, %v1648
        %v1650 = vrot.slane %v1643, %v1649
        %v1651 = vcombine.low %v1623, %v1630
        %v1653 = vunpack.c.l.s4 1983009808
        %v1654 = vunpack.c.0.s8 %v1653
        %v1655 = vlaneseq
        %v1656 = vshrl.u32 %v1655, 7
        %v1657 = vsub.s32 %v1654, %v1656
        %v1658 = vrot.slane %v1651, %v1657
        %v1659 = vcombine.low %v1633, %v1634
        %v1661 = vunpack.c.l.s4 1983009808
        %v1662 = vunpack.c.0.s8 %v1661
        %v1663 = vlaneseq
        %v1664 = vshrl.u32 %v1663, 7
        %v1665 = vsub.s32 %v1662, %v1664
        %v1666 = vrot.slane %v1659, %v1665
        %v1667 = vcombine.low %v1642, %v1650
        %v1668 = vcombine.high %v1642, %v1650
        %v1670 = vunpack.c.l.s4 1934713408
        %v1671 = vunpack.c.0.s8 %v1670
        %v1672 = vlaneseq
        %v1673 = vshrl.u32 %v1672, 7
        %v1674 = vsub.s32 %v1671, %v1673
        %v1675 = vrot.slane %v1667, %v1674
        %v1677 = vunpack.c.l.s4 1934713408
        %v1678 = vunpack.c.0.s8 %v1677
        %v1679 = vlaneseq
        %v1680 = vshrl.u32 %v1679, 7
        %v1681 = vsub.s32 %v1678, %v1680
        %v1682 = vrot.slane %v1668, %v1681
        %v1683 = vcombine.low %v1658, %v1666
        %v1684 = vcombine.high %v1658, %v1666
        %v1686 = vunpack.c.l.s4 1934713408
        %v1687 = vunpack.c.0.s8 %v1686
        %v1688 = vlaneseq
        %v1689 = vshrl.u32 %v1688, 7
        %v1690 = vsub.s32 %v1687, %v1689
        %v1691 = vrot.slane %v1683, %v1690
        %v1693 = vunpack.c.l.s4 1934713408
        %v1694 = vunpack.c.0.s8 %v1693
        %v1695 = vlaneseq
        %v1696 = vshrl.u32 %v1695, 7
        %v1697 = vsub.s32 %v1694, %v1696
        %v1698 = vrot.slane %v1684, %v1697
        %v1699 = vcombine.low %v1675, %v1691
        %v1700 = vcombine.high %v1675, %v1691
        %v1701 = vcombine.low %v1682, %v1698
        %v1702 = vcombine.high %v1682, %v1698
        %v1703 = vpack.c.bf16 %v1699, %v1699
        %v1704 = vpack.c.bf16 %v1700, %v1700
        %v1705 = vpack.c.bf16 %v1701, %v1701
        %v1706 = vpack.c.bf16 %v1702, %v1702
        %1707 = vrot.lane.b32.xlu0 %v1552, 96
        %v1708 = vpop.permute.xlu0 %1707
        %1709 = vrot.lane.b32.xlu0 %v1559, 96
        %v1710 = vpop.permute.xlu0 %1709
        %1711 = vrot.lane.b32.xlu0 %v1562, 96
        %v1712 = vpop.permute.xlu0 %1711
        %1713 = vrot.lane.b32.xlu0 %v1565, 96
        %v1714 = vpop.permute.xlu0 %1713
        %v1719 = vcombine.low %v1708, %v1712
        %v1720 = vcombine.high %v1708, %v1712
        %v1722 = vunpack.c.l.s4 1983009808
        %v1723 = vunpack.c.0.s8 %v1722
        %v1724 = vlaneseq
        %v1725 = vshrl.u32 %v1724, 7
        %v1726 = vsub.s32 %v1723, %v1725
        %v1727 = vrot.slane %v1719, %v1726
        %v1729 = vunpack.c.l.s4 1983009808
        %v1730 = vunpack.c.0.s8 %v1729
        %v1731 = vlaneseq
        %v1732 = vshrl.u32 %v1731, 7
        %v1733 = vsub.s32 %v1730, %v1732
        %v1734 = vrot.slane %v1720, %v1733
        %v1735 = vcombine.low %v1710, %v1714
        %v1736 = vcombine.high %v1710, %v1714
        %v1738 = vunpack.c.l.s4 1983009808
        %v1739 = vunpack.c.0.s8 %v1738
        %v1740 = vlaneseq
        %v1741 = vshrl.u32 %v1740, 7
        %v1742 = vsub.s32 %v1739, %v1741
        %v1743 = vrot.slane %v1735, %v1742
        %v1745 = vunpack.c.l.s4 1983009808
        %v1746 = vunpack.c.0.s8 %v1745
        %v1747 = vlaneseq
        %v1748 = vshrl.u32 %v1747, 7
        %v1749 = vsub.s32 %v1746, %v1748
        %v1750 = vrot.slane %v1736, %v1749
        %v1751 = vcombine.low %v1727, %v1743
        %v1752 = vcombine.high %v1727, %v1743
        %v1754 = vunpack.c.l.s4 1934713408
        %v1755 = vunpack.c.0.s8 %v1754
        %v1756 = vlaneseq
        %v1757 = vshrl.u32 %v1756, 7
        %v1758 = vsub.s32 %v1755, %v1757
        %v1759 = vrot.slane %v1751, %v1758
        %v1761 = vunpack.c.l.s4 1934713408
        %v1762 = vunpack.c.0.s8 %v1761
        %v1763 = vlaneseq
        %v1764 = vshrl.u32 %v1763, 7
        %v1765 = vsub.s32 %v1762, %v1764
        %v1766 = vrot.slane %v1752, %v1765
        %v1767 = vcombine.low %v1734, %v1750
        %v1768 = vcombine.high %v1734, %v1750
        %v1770 = vunpack.c.l.s4 1934713408
        %v1771 = vunpack.c.0.s8 %v1770
        %v1772 = vlaneseq
        %v1773 = vshrl.u32 %v1772, 7
        %v1774 = vsub.s32 %v1771, %v1773
        %v1775 = vrot.slane %v1767, %v1774
        %v1777 = vunpack.c.l.s4 1934713408
        %v1778 = vunpack.c.0.s8 %v1777
        %v1779 = vlaneseq
        %v1780 = vshrl.u32 %v1779, 7
        %v1781 = vsub.s32 %v1778, %v1780
        %v1782 = vrot.slane %v1768, %v1781
        %v1783 = vcombine.high %v1759, 0.0
        %v1784 = vcombine.high %v1766, 0.0
        %v1785 = vcombine.high %v1775, 0.0
        %v1786 = vcombine.high %v1782, 0.0
        %v1787 = vcombine.low %v1759, %v1766
        %v1789 = vunpack.c.l.s4 1983009808
        %v1790 = vunpack.c.0.s8 %v1789
        %v1791 = vlaneseq
        %v1792 = vshrl.u32 %v1791, 7
        %v1793 = vsub.s32 %v1790, %v1792
        %v1794 = vrot.slane %v1787, %v1793
        %v1795 = vcombine.low %v1783, %v1784
        %v1797 = vunpack.c.l.s4 1983009808
        %v1798 = vunpack.c.0.s8 %v1797
        %v1799 = vlaneseq
        %v1800 = vshrl.u32 %v1799, 7
        %v1801 = vsub.s32 %v1798, %v1800
        %v1802 = vrot.slane %v1795, %v1801
        %v1803 = vcombine.low %v1775, %v1782
        %v1805 = vunpack.c.l.s4 1983009808
        %v1806 = vunpack.c.0.s8 %v1805
        %v1807 = vlaneseq
        %v1808 = vshrl.u32 %v1807, 7
        %v1809 = vsub.s32 %v1806, %v1808
        %v1810 = vrot.slane %v1803, %v1809
        %v1811 = vcombine.low %v1785, %v1786
        %v1813 = vunpack.c.l.s4 1983009808
        %v1814 = vunpack.c.0.s8 %v1813
        %v1815 = vlaneseq
        %v1816 = vshrl.u32 %v1815, 7
        %v1817 = vsub.s32 %v1814, %v1816
        %v1818 = vrot.slane %v1811, %v1817
        %v1819 = vcombine.low %v1794, %v1802
        %v1820 = vcombine.high %v1794, %v1802
        %v1822 = vunpack.c.l.s4 1934713408
        %v1823 = vunpack.c.0.s8 %v1822
        %v1824 = vlaneseq
        %v1825 = vshrl.u32 %v1824, 7
        %v1826 = vsub.s32 %v1823, %v1825
        %v1827 = vrot.slane %v1819, %v1826
        %v1829 = vunpack.c.l.s4 1934713408
        %v1830 = vunpack.c.0.s8 %v1829
        %v1831 = vlaneseq
        %v1832 = vshrl.u32 %v1831, 7
        %v1833 = vsub.s32 %v1830, %v1832
        %v1834 = vrot.slane %v1820, %v1833
        %v1835 = vcombine.low %v1810, %v1818
        %v1836 = vcombine.high %v1810, %v1818
        %v1838 = vunpack.c.l.s4 1934713408
        %v1839 = vunpack.c.0.s8 %v1838
        %v1840 = vlaneseq
        %v1841 = vshrl.u32 %v1840, 7
        %v1842 = vsub.s32 %v1839, %v1841
        %v1843 = vrot.slane %v1835, %v1842
        %v1845 = vunpack.c.l.s4 1934713408
        %v1846 = vunpack.c.0.s8 %v1845
        %v1847 = vlaneseq
        %v1848 = vshrl.u32 %v1847, 7
        %v1849 = vsub.s32 %v1846, %v1848
        %v1850 = vrot.slane %v1836, %v1849
        %v1851 = vcombine.low %v1827, %v1843
        %v1852 = vcombine.high %v1827, %v1843
        %v1853 = vcombine.low %v1834, %v1850
        %v1854 = vcombine.high %v1834, %v1850
        %v1855 = vpack.c.bf16 %v1851, %v1851
        %v1856 = vpack.c.bf16 %v1852, %v1852
        %v1857 = vpack.c.bf16 %v1853, %v1853
        %v1858 = vpack.c.bf16 %v1854, %v1854
        %1859 = vrot.lane.b32.xlu0 %v1552, 64
        %v1860 = vpop.permute.xlu0 %1859
        %1861 = vrot.lane.b32.xlu0 %v1559, 64
        %v1862 = vpop.permute.xlu0 %1861
        %1863 = vrot.lane.b32.xlu0 %v1562, 64
        %v1864 = vpop.permute.xlu0 %1863
        %1865 = vrot.lane.b32.xlu0 %v1565, 64
        %v1866 = vpop.permute.xlu0 %1865
        %v1871 = vcombine.low %v1860, %v1864
        %v1872 = vcombine.high %v1860, %v1864
        %v1874 = vunpack.c.l.s4 1983009808
        %v1875 = vunpack.c.0.s8 %v1874
        %v1876 = vlaneseq
        %v1877 = vshrl.u32 %v1876, 7
        %v1878 = vsub.s32 %v1875, %v1877
        %v1879 = vrot.slane %v1871, %v1878
        %v1881 = vunpack.c.l.s4 1983009808
        %v1882 = vunpack.c.0.s8 %v1881
        %v1883 = vlaneseq
        %v1884 = vshrl.u32 %v1883, 7
        %v1885 = vsub.s32 %v1882, %v1884
        %v1886 = vrot.slane %v1872, %v1885
        %v1887 = vcombine.low %v1862, %v1866
        %v1888 = vcombine.high %v1862, %v1866
        %v1890 = vunpack.c.l.s4 1983009808
        %v1891 = vunpack.c.0.s8 %v1890
        %v1892 = vlaneseq
        %v1893 = vshrl.u32 %v1892, 7
        %v1894 = vsub.s32 %v1891, %v1893
        %v1895 = vrot.slane %v1887, %v1894
        %v1897 = vunpack.c.l.s4 1983009808
        %v1898 = vunpack.c.0.s8 %v1897
        %v1899 = vlaneseq
        %v1900 = vshrl.u32 %v1899, 7
        %v1901 = vsub.s32 %v1898, %v1900
        %v1902 = vrot.slane %v1888, %v1901
        %v1903 = vcombine.low %v1879, %v1895
        %v1904 = vcombine.high %v1879, %v1895
        %v1906 = vunpack.c.l.s4 1934713408
        %v1907 = vunpack.c.0.s8 %v1906
        %v1908 = vlaneseq
        %v1909 = vshrl.u32 %v1908, 7
        %v1910 = vsub.s32 %v1907, %v1909
        %v1911 = vrot.slane %v1903, %v1910
        %v1913 = vunpack.c.l.s4 1934713408
        %v1914 = vunpack.c.0.s8 %v1913
        %v1915 = vlaneseq
        %v1916 = vshrl.u32 %v1915, 7
        %v1917 = vsub.s32 %v1914, %v1916
        %v1918 = vrot.slane %v1904, %v1917
        %v1919 = vcombine.low %v1886, %v1902
        %v1920 = vcombine.high %v1886, %v1902
        %v1922 = vunpack.c.l.s4 1934713408
        %v1923 = vunpack.c.0.s8 %v1922
        %v1924 = vlaneseq
        %v1925 = vshrl.u32 %v1924, 7
        %v1926 = vsub.s32 %v1923, %v1925
        %v1927 = vrot.slane %v1919, %v1926
        %v1929 = vunpack.c.l.s4 1934713408
        %v1930 = vunpack.c.0.s8 %v1929
        %v1931 = vlaneseq
        %v1932 = vshrl.u32 %v1931, 7
        %v1933 = vsub.s32 %v1930, %v1932
        %v1934 = vrot.slane %v1920, %v1933
        %v1935 = vcombine.high %v1911, 0.0
        %v1936 = vcombine.high %v1918, 0.0
        %v1937 = vcombine.high %v1927, 0.0
        %v1938 = vcombine.high %v1934, 0.0
        %v1939 = vcombine.low %v1911, %v1918
        %v1941 = vunpack.c.l.s4 1983009808
        %v1942 = vunpack.c.0.s8 %v1941
        %v1943 = vlaneseq
        %v1944 = vshrl.u32 %v1943, 7
        %v1945 = vsub.s32 %v1942, %v1944
        %v1946 = vrot.slane %v1939, %v1945
        %v1947 = vcombine.low %v1935, %v1936
        %v1949 = vunpack.c.l.s4 1983009808
        %v1950 = vunpack.c.0.s8 %v1949
        %v1951 = vlaneseq
        %v1952 = vshrl.u32 %v1951, 7
        %v1953 = vsub.s32 %v1950, %v1952
        %v1954 = vrot.slane %v1947, %v1953
        %v1955 = vcombine.low %v1927, %v1934
        %v1957 = vunpack.c.l.s4 1983009808
        %v1958 = vunpack.c.0.s8 %v1957
        %v1959 = vlaneseq
        %v1960 = vshrl.u32 %v1959, 7
        %v1961 = vsub.s32 %v1958, %v1960
        %v1962 = vrot.slane %v1955, %v1961
        %v1963 = vcombine.low %v1937, %v1938
        %v1965 = vunpack.c.l.s4 1983009808
        %v1966 = vunpack.c.0.s8 %v1965
        %v1967 = vlaneseq
        %v1968 = vshrl.u32 %v1967, 7
        %v1969 = vsub.s32 %v1966, %v1968
        %v1970 = vrot.slane %v1963, %v1969
        %v1971 = vcombine.low %v1946, %v1954
        %v1972 = vcombine.high %v1946, %v1954
        %v1974 = vunpack.c.l.s4 1934713408
        %v1975 = vunpack.c.0.s8 %v1974
        %v1976 = vlaneseq
        %v1977 = vshrl.u32 %v1976, 7
        %v1978 = vsub.s32 %v1975, %v1977
        %v1979 = vrot.slane %v1971, %v1978
        %v1981 = vunpack.c.l.s4 1934713408
        %v1982 = vunpack.c.0.s8 %v1981
        %v1983 = vlaneseq
        %v1984 = vshrl.u32 %v1983, 7
        %v1985 = vsub.s32 %v1982, %v1984
        %v1986 = vrot.slane %v1972, %v1985
        %v1987 = vcombine.low %v1962, %v1970
        %v1988 = vcombine.high %v1962, %v1970
        %v1990 = vunpack.c.l.s4 1934713408
        %v1991 = vunpack.c.0.s8 %v1990
        %v1992 = vlaneseq
        %v1993 = vshrl.u32 %v1992, 7
        %v1994 = vsub.s32 %v1991, %v1993
        %v1995 = vrot.slane %v1987, %v1994
        %v1997 = vunpack.c.l.s4 1934713408
        %v1998 = vunpack.c.0.s8 %v1997
        %v1999 = vlaneseq
        %v2000 = vshrl.u32 %v1999, 7
        %v2001 = vsub.s32 %v1998, %v2000
        %v2002 = vrot.slane %v1988, %v2001
        %v2003 = vcombine.low %v1979, %v1995
        %v2004 = vcombine.high %v1979, %v1995
        %v2005 = vcombine.low %v1986, %v2002
        %v2006 = vcombine.high %v1986, %v2002
        %v2007 = vpack.c.bf16 %v2003, %v2003
        %v2008 = vpack.c.bf16 %v2004, %v2004
        %v2009 = vpack.c.bf16 %v2005, %v2005
        %v2010 = vpack.c.bf16 %v2006, %v2006
        %vm2011 = vcmask 64512
        %v2013 = vsel %vm2011, %v1703, 0
        %v2016 = vsel %vm2011, %v1855, 0
        %2018 = vmatprep.subr.bf16.mxu0 0
        %2019 = vmatpush1.bf16.xpose.msra.mxu0 %v2016
        %2020 = vmatprep.subr.bf16.mxu0 0
        %2021 = vmatpush1.bf16.xpose.msra.mxu0 0
        %2022 = vmatprep.subr.bf16.mxu0 0
        %2023 = vmatpush1.bf16.xpose.msra.mxu0 0
        %2024 = vmatprep.subr.bf16.mxu0 0
        %2025 = vmatpush1.bf16.xpose.msra.mxu0 0
        %2026 = vmatprep.subr.bf16.mxu0 0
        %2027 = vmatpush1.bf16.xpose.msra.mxu0 0
        %2028 = vmatprep.subr.bf16.mxu0 0
        %2029 = vmatpush1.bf16.xpose.msra.mxu0 0
        %2030 = vmatprep.subr.bf16.mxu0 0
        %2031 = vmatpush1.bf16.xpose.msra.mxu0 0
        %2032 = vmatprep.subr.bf16.mxu0 0
        %2033 = vmatpush1.bf16.xpose.msra.mxu0 0
        %2034 = vmatprep.subr.bf16.mxu0 0
        %2035 = vmatpush1.bf16.xpose.msra.mxu0 0
        %2036 = vmatprep.subr.bf16.mxu0 0
        %2037 = vmatpush1.bf16.xpose.msra.mxu0 0
        %2038 = vmatprep.subr.bf16.mxu0 0
        %2039 = vmatpush1.bf16.xpose.msra.mxu0 0
        %2040 = vmatprep.subr.bf16.mxu0 0
        %2041 = vmatpush1.bf16.xpose.msra.mxu0 0
        %2042 = vmatprep.subr.bf16.mxu0 0
        %2043 = vmatpush1.bf16.xpose.msra.mxu0 0
        %2044 = vmatprep.subr.bf16.mxu0 0
        %2045 = vmatpush1.bf16.xpose.msra.mxu0 0
        %2046 = vmatprep.subr.bf16.mxu0 0
        %2047 = vmatpush1.bf16.xpose.msra.mxu0 0
        %2048 = vmatprep.subr.bf16.mxu0 0
        %2049 = vmatpush1.bf16.xpose.msra.mxu0 0
        %2050 = vmatprep.mubr.bf16.mxu0 0
        %2051 = vmatmul.mubr.bf16.gmra.mrb[0].mxu0 %v2013
        %v2052 = vpop.f32.mrb[0].mxu0
        %v2053 = vadd.f32 0.0, %v2052
        %v2054 = vpop.f32.mrb[0].mxu0
        %v2055 = vpop.f32.mrb[0].mxu0
        %v2056 = vpop.f32.mrb[0].mxu0
        %2057 = vdwg.mxu0
        %v2059 = vsel %vm2011, %v1704, 0
        %v2062 = vsel %vm2011, %v1856, 0
        %2064 = vmatprep.subr.bf16.mxu0 0
        %2065 = vmatpush1.bf16.xpose.msra.mxu0 %v2062
        %2066 = vmatprep.subr.bf16.mxu0 0
        %2067 = vmatpush1.bf16.xpose.msra.mxu0 0
        %2068 = vmatprep.subr.bf16.mxu0 0
        %2069 = vmatpush1.bf16.xpose.msra.mxu0 0
        %2070 = vmatprep.subr.bf16.mxu0 0
        %2071 = vmatpush1.bf16.xpose.msra.mxu0 0
        %2072 = vmatprep.subr.bf16.mxu0 0
        %2073 = vmatpush1.bf16.xpose.msra.mxu0 0
        %2074 = vmatprep.subr.bf16.mxu0 0
        %2075 = vmatpush1.bf16.xpose.msra.mxu0 0
        %2076 = vmatprep.subr.bf16.mxu0 0
        %2077 = vmatpush1.bf16.xpose.msra.mxu0 0
        %2078 = vmatprep.subr.bf16.mxu0 0
        %2079 = vmatpush1.bf16.xpose.msra.mxu0 0
        %2080 = vmatprep.subr.bf16.mxu0 0
        %2081 = vmatpush1.bf16.xpose.msra.mxu0 0
        %2082 = vmatprep.subr.bf16.mxu0 0
        %2083 = vmatpush1.bf16.xpose.msra.mxu0 0
        %2084 = vmatprep.subr.bf16.mxu0 0
        %2085 = vmatpush1.bf16.xpose.msra.mxu0 0
        %2086 = vmatprep.subr.bf16.mxu0 0
        %2087 = vmatpush1.bf16.xpose.msra.mxu0 0
        %2088 = vmatprep.subr.bf16.mxu0 0
        %2089 = vmatpush1.bf16.xpose.msra.mxu0 0
        %2090 = vmatprep.subr.bf16.mxu0 0
        %2091 = vmatpush1.bf16.xpose.msra.mxu0 0
        %2092 = vmatprep.subr.bf16.mxu0 0
        %2093 = vmatpush1.bf16.xpose.msra.mxu0 0
        %2094 = vmatprep.subr.bf16.mxu0 0
        %2095 = vmatpush1.bf16.xpose.msra.mxu0 0
        %2096 = vmatprep.mubr.bf16.mxu0 0
        %2097 = vmatmul.mubr.bf16.gmra.mrb[0].mxu0 %v2059
        %v2098 = vpop.f32.mrb[0].mxu0
        %v2099 = vadd.f32 0.0, %v2098
        %v2100 = vpop.f32.mrb[0].mxu0
        %v2101 = vpop.f32.mrb[0].mxu0
        %v2102 = vpop.f32.mrb[0].mxu0
        %2103 = vdwg.mxu0
        %v2105 = vsel %vm2011, %v1705, 0
        %v2108 = vsel %vm2011, %v1857, 0
        %2110 = vmatprep.subr.bf16.mxu0 0
        %2111 = vmatpush1.bf16.xpose.msra.mxu0 %v2108
        %2112 = vmatprep.subr.bf16.mxu0 0
        %2113 = vmatpush1.bf16.xpose.msra.mxu0 0
        %2114 = vmatprep.subr.bf16.mxu0 0
        %2115 = vmatpush1.bf16.xpose.msra.mxu0 0
        %2116 = vmatprep.subr.bf16.mxu0 0
        %2117 = vmatpush1.bf16.xpose.msra.mxu0 0
        %2118 = vmatprep.subr.bf16.mxu0 0
        %2119 = vmatpush1.bf16.xpose.msra.mxu0 0
        %2120 = vmatprep.subr.bf16.mxu0 0
        %2121 = vmatpush1.bf16.xpose.msra.mxu0 0
        %2122 = vmatprep.subr.bf16.mxu0 0
        %2123 = vmatpush1.bf16.xpose.msra.mxu0 0
        %2124 = vmatprep.subr.bf16.mxu0 0
        %2125 = vmatpush1.bf16.xpose.msra.mxu0 0
        %2126 = vmatprep.subr.bf16.mxu0 0
        %2127 = vmatpush1.bf16.xpose.msra.mxu0 0
        %2128 = vmatprep.subr.bf16.mxu0 0
        %2129 = vmatpush1.bf16.xpose.msra.mxu0 0
        %2130 = vmatprep.subr.bf16.mxu0 0
        %2131 = vmatpush1.bf16.xpose.msra.mxu0 0
        %2132 = vmatprep.subr.bf16.mxu0 0
        %2133 = vmatpush1.bf16.xpose.msra.mxu0 0
        %2134 = vmatprep.subr.bf16.mxu0 0
        %2135 = vmatpush1.bf16.xpose.msra.mxu0 0
        %2136 = vmatprep.subr.bf16.mxu0 0
        %2137 = vmatpush1.bf16.xpose.msra.mxu0 0
        %2138 = vmatprep.subr.bf16.mxu0 0
        %2139 = vmatpush1.bf16.xpose.msra.mxu0 0
        %2140 = vmatprep.subr.bf16.mxu0 0
        %2141 = vmatpush1.bf16.xpose.msra.mxu0 0
        %2142 = vmatprep.mubr.bf16.mxu0 0
        %2143 = vmatmul.mubr.bf16.gmra.mrb[0].mxu0 %v2105
        %v2144 = vpop.f32.mrb[0].mxu0
        %v2145 = vadd.f32 0.0, %v2144
        %v2146 = vpop.f32.mrb[0].mxu0
        %v2147 = vpop.f32.mrb[0].mxu0
        %v2148 = vpop.f32.mrb[0].mxu0
        %2149 = vdwg.mxu0
        %v2151 = vsel %vm2011, %v1706, 0
        %v2154 = vsel %vm2011, %v1858, 0
        %2156 = vmatprep.subr.bf16.mxu0 0
        %2157 = vmatpush1.bf16.xpose.msra.mxu0 %v2154
        %2158 = vmatprep.subr.bf16.mxu0 0
        %2159 = vmatpush1.bf16.xpose.msra.mxu0 0
        %2160 = vmatprep.subr.bf16.mxu0 0
        %2161 = vmatpush1.bf16.xpose.msra.mxu0 0
        %2162 = vmatprep.subr.bf16.mxu0 0
        %2163 = vmatpush1.bf16.xpose.msra.mxu0 0
        %2164 = vmatprep.subr.bf16.mxu0 0
        %2165 = vmatpush1.bf16.xpose.msra.mxu0 0
        %2166 = vmatprep.subr.bf16.mxu0 0
        %2167 = vmatpush1.bf16.xpose.msra.mxu0 0
        %2168 = vmatprep.subr.bf16.mxu0 0
        %2169 = vmatpush1.bf16.xpose.msra.mxu0 0
        %2170 = vmatprep.subr.bf16.mxu0 0
        %2171 = vmatpush1.bf16.xpose.msra.mxu0 0
        %2172 = vmatprep.subr.bf16.mxu0 0
        %2173 = vmatpush1.bf16.xpose.msra.mxu0 0
        %2174 = vmatprep.subr.bf16.mxu0 0
        %2175 = vmatpush1.bf16.xpose.msra.mxu0 0
        %2176 = vmatprep.subr.bf16.mxu0 0
        %2177 = vmatpush1.bf16.xpose.msra.mxu0 0
        %2178 = vmatprep.subr.bf16.mxu0 0
        %2179 = vmatpush1.bf16.xpose.msra.mxu0 0
        %2180 = vmatprep.subr.bf16.mxu0 0
        %2181 = vmatpush1.bf16.xpose.msra.mxu0 0
        %2182 = vmatprep.subr.bf16.mxu0 0
        %2183 = vmatpush1.bf16.xpose.msra.mxu0 0
        %2184 = vmatprep.subr.bf16.mxu0 0
        %2185 = vmatpush1.bf16.xpose.msra.mxu0 0
        %2186 = vmatprep.subr.bf16.mxu0 0
        %2187 = vmatpush1.bf16.xpose.msra.mxu0 0
        %2188 = vmatprep.mubr.bf16.mxu0 0
        %2189 = vmatmul.mubr.bf16.gmra.mrb[0].mxu0 %v2151
        %v2190 = vpop.f32.mrb[0].mxu0
        %v2191 = vadd.f32 0.0, %v2190
        %v2192 = vpop.f32.mrb[0].mxu0
        %v2193 = vpop.f32.mrb[0].mxu0
        %v2194 = vpop.f32.mrb[0].mxu0
        %2195 = vdwg.mxu0
        %v2196 = vmul.f32 %v2053, 0.35355338
        %v2197 = vmul.f32 %v2099, 0.35355338
        %v2198 = vmul.f32 %v2145, 0.35355338
        %v2199 = vmul.f32 %v2191, 0.35355338
        %v2200 = vadd.f32 %v2196, %v1485
        %v2201 = vadd.f32 %v2197, %v1485
        %v2202 = vadd.f32 %v2198, %v1485
        %v2203 = vadd.f32 %v2199, %v1485
        %v2204 = vsel %vm2011, %v2200, -inf
        %2205 = vmax.xlane.f32.xlu0 %v2204
        %v2206 = vpop.xlane.xlu0 %2205
        %v2207 = vsel %vm2011, %v2201, -inf
        %2208 = vmax.xlane.f32.xlu0 %v2207
        %v2209 = vpop.xlane.xlu0 %2208
        %v2210 = vsel %vm2011, %v2202, -inf
        %2211 = vmax.xlane.f32.xlu0 %v2210
        %v2212 = vpop.xlane.xlu0 %2211
        %v2213 = vsel %vm2011, %v2203, -inf
        %2214 = vmax.xlane.f32.xlu0 %v2213
        %v2215 = vpop.xlane.xlu0 %2214
        %v2216 = vsub.f32 %v2200, %v2206
        %v2217 = vsub.f32 %v2201, %v2209
        %v2218 = vsub.f32 %v2202, %v2212
        %v2219 = vsub.f32 %v2203, %v2215
        %v2220 = vmul.f32 %v2216, 1.442695
        %v2221 = vpow.pop %v2220
        %v2222 = vmul.f32 %v2217, 1.442695
        %v2223 = vpow.pop %v2222
        %v2224 = vmul.f32 %v2218, 1.442695
        %v2225 = vpow.pop %v2224
        %v2226 = vmul.f32 %v2219, 1.442695
        %v2227 = vpow.pop %v2226
        %v2228 = vsel %vm2011, %v2221, 0.0
        %2229 = vadd.xlane.f32.xlu0 %v2228
        %v2230 = vpop.xlane.xlu0 %2229
        %v2231 = vsel %vm2011, %v2223, 0.0
        %2232 = vadd.xlane.f32.xlu0 %v2231
        %v2233 = vpop.xlane.xlu0 %2232
        %v2234 = vsel %vm2011, %v2225, 0.0
        %2235 = vadd.xlane.f32.xlu0 %v2234
        %v2236 = vpop.xlane.xlu0 %2235
        %v2237 = vsel %vm2011, %v2227, 0.0
        %2238 = vadd.xlane.f32.xlu0 %v2237
        %v2239 = vpop.xlane.xlu0 %2238
        %v2240 = vrcp.pop %v2230
        %v2241 = vrcp.pop %v2233
        %v2242 = vrcp.pop %v2236
        %v2243 = vrcp.pop %v2239
        %v2244 = vmul.f32 %v2221, %v2240
        %v2245 = vmul.f32 %v2223, %v2241
        %v2246 = vmul.f32 %v2225, %v2242
        %v2247 = vmul.f32 %v2227, %v2243
        %v2248 = vpack.c.bf16 %v2244, %v2244
        %v2249 = vpack.c.bf16 %v2245, %v2245
        %v2250 = vpack.c.bf16 %v2246, %v2246
        %v2251 = vpack.c.bf16 %v2247, %v2247
        %v2253 = vsel %vm2011, %v2248, 0
        %vm2255 = vcmask 1043456
        %v2257 = vsel %vm2255, %v2007, 0
        %2259 = vmatprep.subr.bf16.mxu0 0
        %2260 = vmatpush1.bf16.msra.mxu0 %v2257
        %2261 = vmatprep.subr.bf16.mxu0 0
        %2262 = vmatpush1.bf16.msra.mxu0 0
        %2263 = vmatprep.subr.bf16.mxu0 0
        %2264 = vmatpush1.bf16.msra.mxu0 0
        %2265 = vmatprep.subr.bf16.mxu0 0
        %2266 = vmatpush1.bf16.msra.mxu0 0
        %2267 = vmatprep.subr.bf16.mxu0 0
        %2268 = vmatpush1.bf16.msra.mxu0 0
        %2269 = vmatprep.subr.bf16.mxu0 0
        %2270 = vmatpush1.bf16.msra.mxu0 0
        %2271 = vmatprep.subr.bf16.mxu0 0
        %2272 = vmatpush1.bf16.msra.mxu0 0
        %2273 = vmatprep.subr.bf16.mxu0 0
        %2274 = vmatpush1.bf16.msra.mxu0 0
        %2275 = vmatprep.subr.bf16.mxu0 0
        %2276 = vmatpush1.bf16.msra.mxu0 0
        %2277 = vmatprep.subr.bf16.mxu0 0
        %2278 = vmatpush1.bf16.msra.mxu0 0
        %2279 = vmatprep.subr.bf16.mxu0 0
        %2280 = vmatpush1.bf16.msra.mxu0 0
        %2281 = vmatprep.subr.bf16.mxu0 0
        %2282 = vmatpush1.bf16.msra.mxu0 0
        %2283 = vmatprep.subr.bf16.mxu0 0
        %2284 = vmatpush1.bf16.msra.mxu0 0
        %2285 = vmatprep.subr.bf16.mxu0 0
        %2286 = vmatpush1.bf16.msra.mxu0 0
        %2287 = vmatprep.subr.bf16.mxu0 0
        %2288 = vmatpush1.bf16.msra.mxu0 0
        %2289 = vmatprep.subr.bf16.mxu0 0
        %2290 = vmatpush1.bf16.msra.mxu0 0
        %2291 = vmatprep.mubr.bf16.mxu0 0
        %2292 = vmatmul.mubr.bf16.gmra.mrb[0].mxu0 %v2253
        %v2293 = vpop.f32.mrb[0].mxu0
        %v2294 = vadd.f32 0.0, %v2293
        %v2295 = vpop.f32.mrb[0].mxu0
        %v2296 = vpop.f32.mrb[0].mxu0
        %v2297 = vpop.f32.mrb[0].mxu0
        %2298 = vdwg.mxu0
        %v2300 = vsel %vm2011, %v2249, 0
        %v2303 = vsel %vm2255, %v2008, 0
        %2305 = vmatprep.subr.bf16.mxu0 0
        %2306 = vmatpush1.bf16.msra.mxu0 %v2303
        %2307 = vmatprep.subr.bf16.mxu0 0
        %2308 = vmatpush1.bf16.msra.mxu0 0
        %2309 = vmatprep.subr.bf16.mxu0 0
        %2310 = vmatpush1.bf16.msra.mxu0 0
        %2311 = vmatprep.subr.bf16.mxu0 0
        %2312 = vmatpush1.bf16.msra.mxu0 0
        %2313 = vmatprep.subr.bf16.mxu0 0
        %2314 = vmatpush1.bf16.msra.mxu0 0
        %2315 = vmatprep.subr.bf16.mxu0 0
        %2316 = vmatpush1.bf16.msra.mxu0 0
        %2317 = vmatprep.subr.bf16.mxu0 0
        %2318 = vmatpush1.bf16.msra.mxu0 0
        %2319 = vmatprep.subr.bf16.mxu0 0
        %2320 = vmatpush1.bf16.msra.mxu0 0
        %2321 = vmatprep.subr.bf16.mxu0 0
        %2322 = vmatpush1.bf16.msra.mxu0 0
        %2323 = vmatprep.subr.bf16.mxu0 0
        %2324 = vmatpush1.bf16.msra.mxu0 0
        %2325 = vmatprep.subr.bf16.mxu0 0
        %2326 = vmatpush1.bf16.msra.mxu0 0
        %2327 = vmatprep.subr.bf16.mxu0 0
        %2328 = vmatpush1.bf16.msra.mxu0 0
        %2329 = vmatprep.subr.bf16.mxu0 0
        %2330 = vmatpush1.bf16.msra.mxu0 0
        %2331 = vmatprep.subr.bf16.mxu0 0
        %2332 = vmatpush1.bf16.msra.mxu0 0
        %2333 = vmatprep.subr.bf16.mxu0 0
        %2334 = vmatpush1.bf16.msra.mxu0 0
        %2335 = vmatprep.subr.bf16.mxu0 0
        %2336 = vmatpush1.bf16.msra.mxu0 0
        %2337 = vmatprep.mubr.bf16.mxu0 0
        %2338 = vmatmul.mubr.bf16.gmra.mrb[0].mxu0 %v2300
        %v2339 = vpop.f32.mrb[0].mxu0
        %v2340 = vadd.f32 0.0, %v2339
        %v2341 = vpop.f32.mrb[0].mxu0
        %v2342 = vpop.f32.mrb[0].mxu0
        %v2343 = vpop.f32.mrb[0].mxu0
        %2344 = vdwg.mxu0
        %v2346 = vsel %vm2011, %v2250, 0
        %v2349 = vsel %vm2255, %v2009, 0
        %2351 = vmatprep.subr.bf16.mxu0 0
        %2352 = vmatpush1.bf16.msra.mxu0 %v2349
        %2353 = vmatprep.subr.bf16.mxu0 0
        %2354 = vmatpush1.bf16.msra.mxu0 0
        %2355 = vmatprep.subr.bf16.mxu0 0
        %2356 = vmatpush1.bf16.msra.mxu0 0
        %2357 = vmatprep.subr.bf16.mxu0 0
        %2358 = vmatpush1.bf16.msra.mxu0 0
        %2359 = vmatprep.subr.bf16.mxu0 0
        %2360 = vmatpush1.bf16.msra.mxu0 0
        %2361 = vmatprep.subr.bf16.mxu0 0
        %2362 = vmatpush1.bf16.msra.mxu0 0
        %2363 = vmatprep.subr.bf16.mxu0 0
        %2364 = vmatpush1.bf16.msra.mxu0 0
        %2365 = vmatprep.subr.bf16.mxu0 0
        %2366 = vmatpush1.bf16.msra.mxu0 0
        %2367 = vmatprep.subr.bf16.mxu0 0
        %2368 = vmatpush1.bf16.msra.mxu0 0
        %2369 = vmatprep.subr.bf16.mxu0 0
        %2370 = vmatpush1.bf16.msra.mxu0 0
        %2371 = vmatprep.subr.bf16.mxu0 0
        %2372 = vmatpush1.bf16.msra.mxu0 0
        %2373 = vmatprep.subr.bf16.mxu0 0
        %2374 = vmatpush1.bf16.msra.mxu0 0
        %2375 = vmatprep.subr.bf16.mxu0 0
        %2376 = vmatpush1.bf16.msra.mxu0 0
        %2377 = vmatprep.subr.bf16.mxu0 0
        %2378 = vmatpush1.bf16.msra.mxu0 0
        %2379 = vmatprep.subr.bf16.mxu0 0
        %2380 = vmatpush1.bf16.msra.mxu0 0
        %2381 = vmatprep.subr.bf16.mxu0 0
        %2382 = vmatpush1.bf16.msra.mxu0 0
        %2383 = vmatprep.mubr.bf16.mxu0 0
        %2384 = vmatmul.mubr.bf16.gmra.mrb[0].mxu0 %v2346
        %v2385 = vpop.f32.mrb[0].mxu0
        %v2386 = vadd.f32 0.0, %v2385
        %v2387 = vpop.f32.mrb[0].mxu0
        %v2388 = vpop.f32.mrb[0].mxu0
        %v2389 = vpop.f32.mrb[0].mxu0
        %2390 = vdwg.mxu0
        %v2392 = vsel %vm2011, %v2251, 0
        %v2395 = vsel %vm2255, %v2010, 0
        %2397 = vmatprep.subr.bf16.mxu0 0
        %2398 = vmatpush1.bf16.msra.mxu0 %v2395
        %2399 = vmatprep.subr.bf16.mxu0 0
        %2400 = vmatpush1.bf16.msra.mxu0 0
        %2401 = vmatprep.subr.bf16.mxu0 0
        %2402 = vmatpush1.bf16.msra.mxu0 0
        %2403 = vmatprep.subr.bf16.mxu0 0
        %2404 = vmatpush1.bf16.msra.mxu0 0
        %2405 = vmatprep.subr.bf16.mxu0 0
        %2406 = vmatpush1.bf16.msra.mxu0 0
        %2407 = vmatprep.subr.bf16.mxu0 0
        %2408 = vmatpush1.bf16.msra.mxu0 0
        %2409 = vmatprep.subr.bf16.mxu0 0
        %2410 = vmatpush1.bf16.msra.mxu0 0
        %2411 = vmatprep.subr.bf16.mxu0 0
        %2412 = vmatpush1.bf16.msra.mxu0 0
        %2413 = vmatprep.subr.bf16.mxu0 0
        %2414 = vmatpush1.bf16.msra.mxu0 0
        %2415 = vmatprep.subr.bf16.mxu0 0
        %2416 = vmatpush1.bf16.msra.mxu0 0
        %2417 = vmatprep.subr.bf16.mxu0 0
        %2418 = vmatpush1.bf16.msra.mxu0 0
        %2419 = vmatprep.subr.bf16.mxu0 0
        %2420 = vmatpush1.bf16.msra.mxu0 0
        %2421 = vmatprep.subr.bf16.mxu0 0
        %2422 = vmatpush1.bf16.msra.mxu0 0
        %2423 = vmatprep.subr.bf16.mxu0 0
        %2424 = vmatpush1.bf16.msra.mxu0 0
        %2425 = vmatprep.subr.bf16.mxu0 0
        %2426 = vmatpush1.bf16.msra.mxu0 0
        %2427 = vmatprep.subr.bf16.mxu0 0
        %2428 = vmatpush1.bf16.msra.mxu0 0
        %2429 = vmatprep.mubr.bf16.mxu0 0
        %2430 = vmatmul.mubr.bf16.gmra.mrb[0].mxu0 %v2392
        %v2431 = vpop.f32.mrb[0].mxu0
        %v2432 = vadd.f32 0.0, %v2431
        %v2433 = vpop.f32.mrb[0].mxu0
        %v2434 = vpop.f32.mrb[0].mxu0
        %v2435 = vpop.f32.mrb[0].mxu0
        %2436 = vdwg.mxu0
        %v2437 = vcombine.low %v2294, %v2386
        %v2438 = vcombine.high %v2294, %v2386
        %v2440 = vunpack.c.l.s4 1983009808
        %v2441 = vunpack.c.0.s8 %v2440
        %v2442 = vlaneseq
        %v2443 = vshrl.u32 %v2442, 7
        %v2444 = vsub.s32 %v2441, %v2443
        %v2445 = vrot.slane %v2437, %v2444
        %v2447 = vunpack.c.l.s4 1983009808
        %v2448 = vunpack.c.0.s8 %v2447
        %v2449 = vlaneseq
        %v2450 = vshrl.u32 %v2449, 7
        %v2451 = vsub.s32 %v2448, %v2450
        %v2452 = vrot.slane %v2438, %v2451
        %v2453 = vcombine.low %v2340, %v2432
        %v2454 = vcombine.high %v2340, %v2432
        %v2456 = vunpack.c.l.s4 1983009808
        %v2457 = vunpack.c.0.s8 %v2456
        %v2458 = vlaneseq
        %v2459 = vshrl.u32 %v2458, 7
        %v2460 = vsub.s32 %v2457, %v2459
        %v2461 = vrot.slane %v2453, %v2460
        %v2463 = vunpack.c.l.s4 1983009808
        %v2464 = vunpack.c.0.s8 %v2463
        %v2465 = vlaneseq
        %v2466 = vshrl.u32 %v2465, 7
        %v2467 = vsub.s32 %v2464, %v2466
        %v2468 = vrot.slane %v2454, %v2467
        %v2469 = vcombine.low %v2445, %v2461
        %v2470 = vcombine.high %v2445, %v2461
        %v2472 = vunpack.c.l.s4 1934713408
        %v2473 = vunpack.c.0.s8 %v2472
        %v2474 = vlaneseq
        %v2475 = vshrl.u32 %v2474, 7
        %v2476 = vsub.s32 %v2473, %v2475
        %v2477 = vrot.slane %v2469, %v2476
        %v2479 = vunpack.c.l.s4 1934713408
        %v2480 = vunpack.c.0.s8 %v2479
        %v2481 = vlaneseq
        %v2482 = vshrl.u32 %v2481, 7
        %v2483 = vsub.s32 %v2480, %v2482
        %v2484 = vrot.slane %v2470, %v2483
        %v2485 = vcombine.low %v2452, %v2468
        %v2486 = vcombine.high %v2452, %v2468
        %v2488 = vunpack.c.l.s4 1934713408
        %v2489 = vunpack.c.0.s8 %v2488
        %v2490 = vlaneseq
        %v2491 = vshrl.u32 %v2490, 7
        %v2492 = vsub.s32 %v2489, %v2491
        %v2493 = vrot.slane %v2485, %v2492
        %v2495 = vunpack.c.l.s4 1934713408
        %v2496 = vunpack.c.0.s8 %v2495
        %v2497 = vlaneseq
        %v2498 = vshrl.u32 %v2497, 7
        %v2499 = vsub.s32 %v2496, %v2498
        %v2500 = vrot.slane %v2486, %v2499
        %v2501 = vcombine.high %v2477, 0.0
        %v2502 = vcombine.high %v2484, 0.0
        %v2503 = vcombine.high %v2493, 0.0
        %v2504 = vcombine.high %v2500, 0.0
        %v2505 = vcombine.low %v2477, %v2484
        %v2507 = vunpack.c.l.s4 1983009808
        %v2508 = vunpack.c.0.s8 %v2507
        %v2509 = vlaneseq
        %v2510 = vshrl.u32 %v2509, 7
        %v2511 = vsub.s32 %v2508, %v2510
        %v2512 = vrot.slane %v2505, %v2511
        %v2513 = vcombine.low %v2501, %v2502
        %v2515 = vunpack.c.l.s4 1983009808
        %v2516 = vunpack.c.0.s8 %v2515
        %v2517 = vlaneseq
        %v2518 = vshrl.u32 %v2517, 7
        %v2519 = vsub.s32 %v2516, %v2518
        %v2520 = vrot.slane %v2513, %v2519
        %v2521 = vcombine.low %v2493, %v2500
        %v2523 = vunpack.c.l.s4 1983009808
        %v2524 = vunpack.c.0.s8 %v2523
        %v2525 = vlaneseq
        %v2526 = vshrl.u32 %v2525, 7
        %v2527 = vsub.s32 %v2524, %v2526
        %v2528 = vrot.slane %v2521, %v2527
        %v2529 = vcombine.low %v2503, %v2504
        %v2531 = vunpack.c.l.s4 1983009808
        %v2532 = vunpack.c.0.s8 %v2531
        %v2533 = vlaneseq
        %v2534 = vshrl.u32 %v2533, 7
        %v2535 = vsub.s32 %v2532, %v2534
        %v2536 = vrot.slane %v2529, %v2535
        %v2537 = vcombine.low %v2512, %v2520
        %v2538 = vcombine.high %v2512, %v2520
        %v2540 = vunpack.c.l.s4 1934713408
        %v2541 = vunpack.c.0.s8 %v2540
        %v2542 = vlaneseq
        %v2543 = vshrl.u32 %v2542, 7
        %v2544 = vsub.s32 %v2541, %v2543
        %v2545 = vrot.slane %v2537, %v2544
        %v2547 = vunpack.c.l.s4 1934713408
        %v2548 = vunpack.c.0.s8 %v2547
        %v2549 = vlaneseq
        %v2550 = vshrl.u32 %v2549, 7
        %v2551 = vsub.s32 %v2548, %v2550
        %v2552 = vrot.slane %v2538, %v2551
        %v2553 = vcombine.low %v2528, %v2536
        %v2554 = vcombine.high %v2528, %v2536
        %v2556 = vunpack.c.l.s4 1934713408
        %v2557 = vunpack.c.0.s8 %v2556
        %v2558 = vlaneseq
        %v2559 = vshrl.u32 %v2558, 7
        %v2560 = vsub.s32 %v2557, %v2559
        %v2561 = vrot.slane %v2553, %v2560
        %v2563 = vunpack.c.l.s4 1934713408
        %v2564 = vunpack.c.0.s8 %v2563
        %v2565 = vlaneseq
        %v2566 = vshrl.u32 %v2565, 7
        %v2567 = vsub.s32 %v2564, %v2566
        %v2568 = vrot.slane %v2554, %v2567
        %v2569 = vcombine.low %v2545, %v2561
        %v2570 = vcombine.high %v2545, %v2561
        %v2571 = vcombine.low %v2552, %v2568
        %v2572 = vcombine.high %v2552, %v2568
        %2574 = vrot.lane.b32.xlu0 %v2570, 8
        %v2575 = vpop.permute.xlu0 %2574
        %2578 = vrot.lane.b32.xlu0 %v2571, 16
        %v2579 = vpop.permute.xlu0 %2578
        %2582 = vrot.lane.b32.xlu0 %v2572, 24
        %v2583 = vpop.permute.xlu0 %2582
        %v2585 = vsel %vm2011, %v2569, %v2575
        %vm2586 = vcmask 130048
        %v2587 = vsel %vm2586, %v2585, %v2579
        %vm2588 = vcmask 195584
        %v2589 = vsel %vm2588, %v2587, %v2583
        %2590 = vst.msk [vmem:[%s1428] sm:$0xff] %vm2011, %v2244
        %2591 = vst.msk [vmem:[%s1428 + $0x8] sm:$0xff] %vm2011, %v2245
        %2592 = vst.msk [vmem:[%s1428 + $0x10] sm:$0xff] %vm2011, %v2246
        %2593 = vst.msk [vmem:[%s1428 + $0x18] sm:$0xff] %vm2011, %v2247
        %v2594 = vpack.c.bf16 %v2589, %v2589
        %v2595 = vld [vmem:[%s1445] sm:$0xf]
        %v2596 = vld [vmem:[%s1445 + $0x4] sm:$0xf]
        %v2597 = vld [vmem:[%s1445 + $0x8] sm:$0xf]
        %v2598 = vld [vmem:[%s1445 + $0xc] sm:$0xf]
        %v2599 = vld [vmem:[%s1185] sm:$0x1]
        %v2601 = vlaneseq
        %v2602 = vshrl.u32 %v2601, 7
        %v2603 = vsub.s32 0, %v2602
        %v2604 = vrot.slane %v2599, %v2603
        %v2610 = vunpack.c.l.b16 %v2595
        %v2611 = vunpack.c.l.b16 %v2596
        %v2612 = vunpack.c.l.b16 %v2597
        %v2613 = vunpack.c.l.b16 %v2598
        %v2614 = vpack.c.b16 %v2611, %v2610
        %v2615 = vpack.c.b16 %v2613, %v2612
        %v2619 = vsel %vm1513, %v2594, 0
        %2621 = vmatprep.subr.bf16.mxu0 0
        %2622 = vmatpush1.bf16.msra.mxu0 %v2614
        %2623 = vmatprep.subr.bf16.mxu0 0
        %2624 = vmatpush1.bf16.msra.mxu0 %v2615
        %2625 = vmatprep.subr.bf16.mxu0 0
        %2626 = vmatpush1.bf16.msra.mxu0 0
        %2627 = vmatprep.subr.bf16.mxu0 0
        %2628 = vmatpush1.bf16.msra.mxu0 0
        %2629 = vmatprep.subr.bf16.mxu0 0
        %2630 = vmatpush1.bf16.msra.mxu0 0
        %2631 = vmatprep.subr.bf16.mxu0 0
        %2632 = vmatpush1.bf16.msra.mxu0 0
        %2633 = vmatprep.subr.bf16.mxu0 0
        %2634 = vmatpush1.bf16.msra.mxu0 0
        %2635 = vmatprep.subr.bf16.mxu0 0
        %2636 = vmatpush1.bf16.msra.mxu0 0
        %2637 = vmatprep.subr.bf16.mxu0 0
        %2638 = vmatpush1.bf16.msra.mxu0 0
        %2639 = vmatprep.subr.bf16.mxu0 0
        %2640 = vmatpush1.bf16.msra.mxu0 0
        %2641 = vmatprep.subr.bf16.mxu0 0
        %2642 = vmatpush1.bf16.msra.mxu0 0
        %2643 = vmatprep.subr.bf16.mxu0 0
        %2644 = vmatpush1.bf16.msra.mxu0 0
        %2645 = vmatprep.subr.bf16.mxu0 0
        %2646 = vmatpush1.bf16.msra.mxu0 0
        %2647 = vmatprep.subr.bf16.mxu0 0
        %2648 = vmatpush1.bf16.msra.mxu0 0
        %2649 = vmatprep.subr.bf16.mxu0 0
        %2650 = vmatpush1.bf16.msra.mxu0 0
        %2651 = vmatprep.subr.bf16.mxu0 0
        %2652 = vmatpush1.bf16.msra.mxu0 0
        %2653 = vmatprep.mubr.bf16.mxu0 0
        %2654 = vmatmul.mubr.bf16.gmra.mrb[0].mxu0 %v2619
        %v2655 = vpop.f32.mrb[0].mxu0
        %v2656 = vadd.f32 %v2604, %v2655
        %v2657 = vpop.f32.mrb[0].mxu0
        %v2658 = vpop.f32.mrb[0].mxu0
        %v2659 = vpop.f32.mrb[0].mxu0
        %2660 = vdwg.mxu0
        %v2661 = vadd.f32 %v1481, %v2656
        %v2662 = vsel %vm1513, %v2661, 0.0
        %2663 = vadd.xlane.f32.xlu0 %v2662
        %v2664 = vpop.xlane.xlu0 %2663
        %v2665 = vrcp.pop 32.0
        %v2666 = vmul.f32 %v2664, %v2665
        %v2667 = vsub.f32 %v2661, %v2666
        %v2668 = vmul.f32 %v2667, %v2667
        %v2669 = vsel %vm1513, %v2668, 0.0
        %2670 = vadd.xlane.f32.xlu0 %v2669
        %v2671 = vpop.xlane.xlu0 %2670
        %v2672 = vmul.f32 %v2671, %v2665
        %v2673 = vadd.f32 %v2672, 1e-05
        %v2674 = vrsqrt.pop %v2673
        %v2675 = vmul.f32 %v2667, %v2674
        %v2676 = vld [vmem:[%s1193] sm:$0x1]
        %v2678 = vlaneseq
        %v2679 = vshrl.u32 %v2678, 7
        %v2680 = vsub.s32 0, %v2679
        %v2681 = vrot.slane %v2676, %v2680
        %v2683 = vmul.f32 %v2675, %v2681
        %v2684 = vld [vmem:[%s1201] sm:$0x1]
        %v2686 = vlaneseq
        %v2687 = vshrl.u32 %v2686, 7
        %v2688 = vsub.s32 0, %v2687
        %v2689 = vrot.slane %v2684, %v2688
        %v2691 = vadd.f32 %v2683, %v2689
        %v2692 = vpack.c.bf16 %v2691, %v2691
        %v2693 = vld [vmem:[%s1450] sm:$0xf]
        %v2694 = vld [vmem:[%s1450 + $0x4] sm:$0xf]
        %v2695 = vld [vmem:[%s1450 + $0x8] sm:$0xf]
        %v2696 = vld [vmem:[%s1450 + $0xc] sm:$0xf]
        %v2697 = vld [vmem:[%s1209] sm:$0x1]
        %v2699 = vlaneseq
        %v2700 = vshrl.u32 %v2699, 7
        %v2701 = vsub.s32 0, %v2700
        %v2702 = vrot.slane %v2697, %v2701
        %v2708 = vunpack.c.l.b16 %v2693
        %v2709 = vunpack.c.l.b16 %v2694
        %v2710 = vunpack.c.l.b16 %v2695
        %v2711 = vunpack.c.l.b16 %v2696
        %v2712 = vpack.c.b16 %v2709, %v2708
        %v2713 = vpack.c.b16 %v2711, %v2710
        %v2717 = vsel %vm1513, %v2692, 0
        %2719 = vmatprep.subr.bf16.mxu0 0
        %2720 = vmatpush1.bf16.msra.mxu0 %v2712
        %2721 = vmatprep.subr.bf16.mxu0 0
        %2722 = vmatpush1.bf16.msra.mxu0 %v2713
        %2723 = vmatprep.subr.bf16.mxu0 0
        %2724 = vmatpush1.bf16.msra.mxu0 0
        %2725 = vmatprep.subr.bf16.mxu0 0
        %2726 = vmatpush1.bf16.msra.mxu0 0
        %2727 = vmatprep.subr.bf16.mxu0 0
        %2728 = vmatpush1.bf16.msra.mxu0 0
        %2729 = vmatprep.subr.bf16.mxu0 0
        %2730 = vmatpush1.bf16.msra.mxu0 0
        %2731 = vmatprep.subr.bf16.mxu0 0
        %2732 = vmatpush1.bf16.msra.mxu0 0
        %2733 = vmatprep.subr.bf16.mxu0 0
        %2734 = vmatpush1.bf16.msra.mxu0 0
        %2735 = vmatprep.subr.bf16.mxu0 0
        %2736 = vmatpush1.bf16.msra.mxu0 0
        %2737 = vmatprep.subr.bf16.mxu0 0
        %2738 = vmatpush1.bf16.msra.mxu0 0
        %2739 = vmatprep.subr.bf16.mxu0 0
        %2740 = vmatpush1.bf16.msra.mxu0 0
        %2741 = vmatprep.subr.bf16.mxu0 0
        %2742 = vmatpush1.bf16.msra.mxu0 0
        %2743 = vmatprep.subr.bf16.mxu0 0
        %2744 = vmatpush1.bf16.msra.mxu0 0
        %2745 = vmatprep.subr.bf16.mxu0 0
        %2746 = vmatpush1.bf16.msra.mxu0 0
        %2747 = vmatprep.subr.bf16.mxu0 0
        %2748 = vmatpush1.bf16.msra.mxu0 0
        %2749 = vmatprep.subr.bf16.mxu0 0
        %2750 = vmatpush1.bf16.msra.mxu0 0
        %2751 = vmatprep.mubr.bf16.mxu0 0
        %2752 = vmatmul.mubr.bf16.gmra.mrb[0].mxu0 %v2717
        %v2753 = vpop.f32.mrb[0].mxu0
        %v2754 = vadd.f32 %v2702, %v2753
        %v2755 = vpop.f32.mrb[0].mxu0
        %v2756 = vpop.f32.mrb[0].mxu0
        %v2757 = vpop.f32.mrb[0].mxu0
        %2758 = vdwg.mxu0
        %v2759 = vpack.c.bf16 %v1482, %v1482
        %v2760 = vld [vmem:[%s1455] sm:$0xf]
        %v2761 = vld [vmem:[%s1455 + $0x4] sm:$0xf]
        %v2762 = vld [vmem:[%s1455 + $0x8] sm:$0xf]
        %v2763 = vld [vmem:[%s1455 + $0xc] sm:$0xf]
        %v2764 = vld [vmem:[%s1217] sm:$0x1]
        %v2766 = vlaneseq
        %v2767 = vshrl.u32 %v2766, 7
        %v2768 = vsub.s32 0, %v2767
        %v2769 = vrot.slane %v2764, %v2768
        %v2775 = vunpack.c.l.b16 %v2760
        %v2776 = vunpack.c.l.b16 %v2761
        %v2777 = vunpack.c.l.b16 %v2762
        %v2778 = vunpack.c.l.b16 %v2763
        %v2779 = vpack.c.b16 %v2776, %v2775
        %v2780 = vpack.c.b16 %v2778, %v2777
        %v2784 = vsel %vm1513, %v2759, 0
        %2786 = vmatprep.subr.bf16.mxu0 0
        %2787 = vmatpush1.bf16.msra.mxu0 %v2779
        %2788 = vmatprep.subr.bf16.mxu0 0
        %2789 = vmatpush1.bf16.msra.mxu0 %v2780
        %2790 = vmatprep.subr.bf16.mxu0 0
        %2791 = vmatpush1.bf16.msra.mxu0 0
        %2792 = vmatprep.subr.bf16.mxu0 0
        %2793 = vmatpush1.bf16.msra.mxu0 0
        %2794 = vmatprep.subr.bf16.mxu0 0
        %2795 = vmatpush1.bf16.msra.mxu0 0
        %2796 = vmatprep.subr.bf16.mxu0 0
        %2797 = vmatpush1.bf16.msra.mxu0 0
        %2798 = vmatprep.subr.bf16.mxu0 0
        %2799 = vmatpush1.bf16.msra.mxu0 0
        %2800 = vmatprep.subr.bf16.mxu0 0
        %2801 = vmatpush1.bf16.msra.mxu0 0
        %2802 = vmatprep.subr.bf16.mxu0 0
        %2803 = vmatpush1.bf16.msra.mxu0 0
        %2804 = vmatprep.subr.bf16.mxu0 0
        %2805 = vmatpush1.bf16.msra.mxu0 0
        %2806 = vmatprep.subr.bf16.mxu0 0
        %2807 = vmatpush1.bf16.msra.mxu0 0
        %2808 = vmatprep.subr.bf16.mxu0 0
        %2809 = vmatpush1.bf16.msra.mxu0 0
        %2810 = vmatprep.subr.bf16.mxu0 0
        %2811 = vmatpush1.bf16.msra.mxu0 0
        %2812 = vmatprep.subr.bf16.mxu0 0
        %2813 = vmatpush1.bf16.msra.mxu0 0
        %2814 = vmatprep.subr.bf16.mxu0 0
        %2815 = vmatpush1.bf16.msra.mxu0 0
        %2816 = vmatprep.subr.bf16.mxu0 0
        %2817 = vmatpush1.bf16.msra.mxu0 0
        %2818 = vmatprep.mubr.bf16.mxu0 0
        %2819 = vmatmul.mubr.bf16.gmra.mrb[0].mxu0 %v2784
        %v2820 = vpop.f32.mrb[0].mxu0
        %v2821 = vadd.f32 %v2769, %v2820
        %v2822 = vpop.f32.mrb[0].mxu0
        %v2823 = vpop.f32.mrb[0].mxu0
        %v2824 = vpop.f32.mrb[0].mxu0
        %2825 = vdwg.mxu0
        %2827 = vrot.lane.b32.xlu0 %v2754, 120
        %v2828 = vpop.permute.xlu0 %2827
        %2830 = vrot.lane.b32.xlu0 %v2754, 112
        %v2831 = vpop.permute.xlu0 %2830
        %2833 = vrot.lane.b32.xlu0 %v2754, 104
        %v2834 = vpop.permute.xlu0 %2833
        %v2836 = vcombine.low %v2754, %v2831
        %v2837 = vcombine.high %v2754, %v2831
        %v2839 = vunpack.c.l.s4 1983009808
        %v2840 = vunpack.c.0.s8 %v2839
        %v2841 = vlaneseq
        %v2842 = vshrl.u32 %v2841, 7
        %v2843 = vsub.s32 %v2840, %v2842
        %v2844 = vrot.slane %v2836, %v2843
        %v2846 = vunpack.c.l.s4 1983009808
        %v2847 = vunpack.c.0.s8 %v2846
        %v2848 = vlaneseq
        %v2849 = vshrl.u32 %v2848, 7
        %v2850 = vsub.s32 %v2847, %v2849
        %v2851 = vrot.slane %v2837, %v2850
        %v2852 = vcombine.low %v2828, %v2834
        %v2853 = vcombine.high %v2828, %v2834
        %v2855 = vunpack.c.l.s4 1983009808
        %v2856 = vunpack.c.0.s8 %v2855
        %v2857 = vlaneseq
        %v2858 = vshrl.u32 %v2857, 7
        %v2859 = vsub.s32 %v2856, %v2858
        %v2860 = vrot.slane %v2852, %v2859
        %v2862 = vunpack.c.l.s4 1983009808
        %v2863 = vunpack.c.0.s8 %v2862
        %v2864 = vlaneseq
        %v2865 = vshrl.u32 %v2864, 7
        %v2866 = vsub.s32 %v2863, %v2865
        %v2867 = vrot.slane %v2853, %v2866
        %v2868 = vcombine.low %v2844, %v2860
        %v2869 = vcombine.high %v2844, %v2860
        %v2871 = vunpack.c.l.s4 1934713408
        %v2872 = vunpack.c.0.s8 %v2871
        %v2873 = vlaneseq
        %v2874 = vshrl.u32 %v2873, 7
        %v2875 = vsub.s32 %v2872, %v2874
        %v2876 = vrot.slane %v2868, %v2875
        %v2878 = vunpack.c.l.s4 1934713408
        %v2879 = vunpack.c.0.s8 %v2878
        %v2880 = vlaneseq
        %v2881 = vshrl.u32 %v2880, 7
        %v2882 = vsub.s32 %v2879, %v2881
        %v2883 = vrot.slane %v2869, %v2882
        %v2884 = vcombine.low %v2851, %v2867
        %v2885 = vcombine.high %v2851, %v2867
        %v2887 = vunpack.c.l.s4 1934713408
        %v2888 = vunpack.c.0.s8 %v2887
        %v2889 = vlaneseq
        %v2890 = vshrl.u32 %v2889, 7
        %v2891 = vsub.s32 %v2888, %v2890
        %v2892 = vrot.slane %v2884, %v2891
        %v2894 = vunpack.c.l.s4 1934713408
        %v2895 = vunpack.c.0.s8 %v2894
        %v2896 = vlaneseq
        %v2897 = vshrl.u32 %v2896, 7
        %v2898 = vsub.s32 %v2895, %v2897
        %v2899 = vrot.slane %v2885, %v2898
        %v2900 = vcombine.high %v2876, 0.0
        %v2901 = vcombine.high %v2883, 0.0
        %v2902 = vcombine.high %v2892, 0.0
        %v2903 = vcombine.high %v2899, 0.0
        %v2904 = vcombine.low %v2876, %v2883
        %v2906 = vunpack.c.l.s4 1983009808
        %v2907 = vunpack.c.0.s8 %v2906
        %v2908 = vlaneseq
        %v2909 = vshrl.u32 %v2908, 7
        %v2910 = vsub.s32 %v2907, %v2909
        %v2911 = vrot.slane %v2904, %v2910
        %v2912 = vcombine.low %v2900, %v2901
        %v2914 = vunpack.c.l.s4 1983009808
        %v2915 = vunpack.c.0.s8 %v2914
        %v2916 = vlaneseq
        %v2917 = vshrl.u32 %v2916, 7
        %v2918 = vsub.s32 %v2915, %v2917
        %v2919 = vrot.slane %v2912, %v2918
        %v2920 = vcombine.low %v2892, %v2899
        %v2922 = vunpack.c.l.s4 1983009808
        %v2923 = vunpack.c.0.s8 %v2922
        %v2924 = vlaneseq
        %v2925 = vshrl.u32 %v2924, 7
        %v2926 = vsub.s32 %v2923, %v2925
        %v2927 = vrot.slane %v2920, %v2926
        %v2928 = vcombine.low %v2902, %v2903
        %v2930 = vunpack.c.l.s4 1983009808
        %v2931 = vunpack.c.0.s8 %v2930
        %v2932 = vlaneseq
        %v2933 = vshrl.u32 %v2932, 7
        %v2934 = vsub.s32 %v2931, %v2933
        %v2935 = vrot.slane %v2928, %v2934
        %v2936 = vcombine.low %v2911, %v2919
        %v2937 = vcombine.high %v2911, %v2919
        %v2939 = vunpack.c.l.s4 1934713408
        %v2940 = vunpack.c.0.s8 %v2939
        %v2941 = vlaneseq
        %v2942 = vshrl.u32 %v2941, 7
        %v2943 = vsub.s32 %v2940, %v2942
        %v2944 = vrot.slane %v2936, %v2943
        %v2946 = vunpack.c.l.s4 1934713408
        %v2947 = vunpack.c.0.s8 %v2946
        %v2948 = vlaneseq
        %v2949 = vshrl.u32 %v2948, 7
        %v2950 = vsub.s32 %v2947, %v2949
        %v2951 = vrot.slane %v2937, %v2950
        %v2952 = vcombine.low %v2927, %v2935
        %v2953 = vcombine.high %v2927, %v2935
        %v2955 = vunpack.c.l.s4 1934713408
        %v2956 = vunpack.c.0.s8 %v2955
        %v2957 = vlaneseq
        %v2958 = vshrl.u32 %v2957, 7
        %v2959 = vsub.s32 %v2956, %v2958
        %v2960 = vrot.slane %v2952, %v2959
        %v2962 = vunpack.c.l.s4 1934713408
        %v2963 = vunpack.c.0.s8 %v2962
        %v2964 = vlaneseq
        %v2965 = vshrl.u32 %v2964, 7
        %v2966 = vsub.s32 %v2963, %v2965
        %v2967 = vrot.slane %v2953, %v2966
        %v2968 = vcombine.low %v2944, %v2960
        %v2969 = vcombine.high %v2944, %v2960
        %v2970 = vcombine.low %v2951, %v2967
        %v2971 = vcombine.high %v2951, %v2967
        %v2972 = vpack.c.bf16 %v2968, %v2968
        %v2973 = vpack.c.bf16 %v2969, %v2969
        %v2974 = vpack.c.bf16 %v2970, %v2970
        %v2975 = vpack.c.bf16 %v2971, %v2971
        %2977 = vrot.lane.b32.xlu0 %v2821, 120
        %v2978 = vpop.permute.xlu0 %2977
        %2980 = vrot.lane.b32.xlu0 %v2821, 112
        %v2981 = vpop.permute.xlu0 %2980
        %2983 = vrot.lane.b32.xlu0 %v2821, 104
        %v2984 = vpop.permute.xlu0 %2983
        %v2986 = vcombine.low %v2821, %v2981
        %v2987 = vcombine.high %v2821, %v2981
        %v2989 = vunpack.c.l.s4 1983009808
        %v2990 = vunpack.c.0.s8 %v2989
        %v2991 = vlaneseq
        %v2992 = vshrl.u32 %v2991, 7
        %v2993 = vsub.s32 %v2990, %v2992
        %v2994 = vrot.slane %v2986, %v2993
        %v2996 = vunpack.c.l.s4 1983009808
        %v2997 = vunpack.c.0.s8 %v2996
        %v2998 = vlaneseq
        %v2999 = vshrl.u32 %v2998, 7
        %v3000 = vsub.s32 %v2997, %v2999
        %v3001 = vrot.slane %v2987, %v3000
        %v3002 = vcombine.low %v2978, %v2984
        %v3003 = vcombine.high %v2978, %v2984
        %v3005 = vunpack.c.l.s4 1983009808
        %v3006 = vunpack.c.0.s8 %v3005
        %v3007 = vlaneseq
        %v3008 = vshrl.u32 %v3007, 7
        %v3009 = vsub.s32 %v3006, %v3008
        %v3010 = vrot.slane %v3002, %v3009
        %v3012 = vunpack.c.l.s4 1983009808
        %v3013 = vunpack.c.0.s8 %v3012
        %v3014 = vlaneseq
        %v3015 = vshrl.u32 %v3014, 7
        %v3016 = vsub.s32 %v3013, %v3015
        %v3017 = vrot.slane %v3003, %v3016
        %v3018 = vcombine.low %v2994, %v3010
        %v3019 = vcombine.high %v2994, %v3010
        %v3021 = vunpack.c.l.s4 1934713408
        %v3022 = vunpack.c.0.s8 %v3021
        %v3023 = vlaneseq
        %v3024 = vshrl.u32 %v3023, 7
        %v3025 = vsub.s32 %v3022, %v3024
        %v3026 = vrot.slane %v3018, %v3025
        %v3028 = vunpack.c.l.s4 1934713408
        %v3029 = vunpack.c.0.s8 %v3028
        %v3030 = vlaneseq
        %v3031 = vshrl.u32 %v3030, 7
        %v3032 = vsub.s32 %v3029, %v3031
        %v3033 = vrot.slane %v3019, %v3032
        %v3034 = vcombine.low %v3001, %v3017
        %v3035 = vcombine.high %v3001, %v3017
        %v3037 = vunpack.c.l.s4 1934713408
        %v3038 = vunpack.c.0.s8 %v3037
        %v3039 = vlaneseq
        %v3040 = vshrl.u32 %v3039, 7
        %v3041 = vsub.s32 %v3038, %v3040
        %v3042 = vrot.slane %v3034, %v3041
        %v3044 = vunpack.c.l.s4 1934713408
        %v3045 = vunpack.c.0.s8 %v3044
        %v3046 = vlaneseq
        %v3047 = vshrl.u32 %v3046, 7
        %v3048 = vsub.s32 %v3045, %v3047
        %v3049 = vrot.slane %v3035, %v3048
        %v3050 = vcombine.high %v3026, 0.0
        %v3051 = vcombine.high %v3033, 0.0
        %v3052 = vcombine.high %v3042, 0.0
        %v3053 = vcombine.high %v3049, 0.0
        %v3054 = vcombine.low %v3026, %v3033
        %v3056 = vunpack.c.l.s4 1983009808
        %v3057 = vunpack.c.0.s8 %v3056
        %v3058 = vlaneseq
        %v3059 = vshrl.u32 %v3058, 7
        %v3060 = vsub.s32 %v3057, %v3059
        %v3061 = vrot.slane %v3054, %v3060
        %v3062 = vcombine.low %v3050, %v3051
        %v3064 = vunpack.c.l.s4 1983009808
        %v3065 = vunpack.c.0.s8 %v3064
        %v3066 = vlaneseq
        %v3067 = vshrl.u32 %v3066, 7
        %v3068 = vsub.s32 %v3065, %v3067
        %v3069 = vrot.slane %v3062, %v3068
        %v3070 = vcombine.low %v3042, %v3049
        %v3072 = vunpack.c.l.s4 1983009808
        %v3073 = vunpack.c.0.s8 %v3072
        %v3074 = vlaneseq
        %v3075 = vshrl.u32 %v3074, 7
        %v3076 = vsub.s32 %v3073, %v3075
        %v3077 = vrot.slane %v3070, %v3076
        %v3078 = vcombine.low %v3052, %v3053
        %v3080 = vunpack.c.l.s4 1983009808
        %v3081 = vunpack.c.0.s8 %v3080
        %v3082 = vlaneseq
        %v3083 = vshrl.u32 %v3082, 7
        %v3084 = vsub.s32 %v3081, %v3083
        %v3085 = vrot.slane %v3078, %v3084
        %v3086 = vcombine.low %v3061, %v3069
        %v3087 = vcombine.high %v3061, %v3069
        %v3089 = vunpack.c.l.s4 1934713408
        %v3090 = vunpack.c.0.s8 %v3089
        %v3091 = vlaneseq
        %v3092 = vshrl.u32 %v3091, 7
        %v3093 = vsub.s32 %v3090, %v3092
        %v3094 = vrot.slane %v3086, %v3093
        %v3096 = vunpack.c.l.s4 1934713408
        %v3097 = vunpack.c.0.s8 %v3096
        %v3098 = vlaneseq
        %v3099 = vshrl.u32 %v3098, 7
        %v3100 = vsub.s32 %v3097, %v3099
        %v3101 = vrot.slane %v3087, %v3100
        %v3102 = vcombine.low %v3077, %v3085
        %v3103 = vcombine.high %v3077, %v3085
        %v3105 = vunpack.c.l.s4 1934713408
        %v3106 = vunpack.c.0.s8 %v3105
        %v3107 = vlaneseq
        %v3108 = vshrl.u32 %v3107, 7
        %v3109 = vsub.s32 %v3106, %v3108
        %v3110 = vrot.slane %v3102, %v3109
        %v3112 = vunpack.c.l.s4 1934713408
        %v3113 = vunpack.c.0.s8 %v3112
        %v3114 = vlaneseq
        %v3115 = vshrl.u32 %v3114, 7
        %v3116 = vsub.s32 %v3113, %v3115
        %v3117 = vrot.slane %v3103, %v3116
        %v3118 = vcombine.low %v3094, %v3110
        %v3119 = vcombine.high %v3094, %v3110
        %v3120 = vcombine.low %v3101, %v3117
        %v3121 = vcombine.high %v3101, %v3117
        %v3122 = vpack.c.bf16 %v3118, %v3118
        %v3123 = vpack.c.bf16 %v3119, %v3119
        %v3124 = vpack.c.bf16 %v3120, %v3120
        %v3125 = vpack.c.bf16 %v3121, %v3121
        %3126 = vrot.lane.b32.xlu0 %v2821, 96
        %v3127 = vpop.permute.xlu0 %3126
        %3128 = vrot.lane.b32.xlu0 %v2978, 96
        %v3129 = vpop.permute.xlu0 %3128
        %3130 = vrot.lane.b32.xlu0 %v2981, 96
        %v3131 = vpop.permute.xlu0 %3130
        %3132 = vrot.lane.b32.xlu0 %v2984, 96
        %v3133 = vpop.permute.xlu0 %3132
        %v3138 = vcombine.low %v3127, %v3131
        %v3139 = vcombine.high %v3127, %v3131
        %v3141 = vunpack.c.l.s4 1983009808
        %v3142 = vunpack.c.0.s8 %v3141
        %v3143 = vlaneseq
        %v3144 = vshrl.u32 %v3143, 7
        %v3145 = vsub.s32 %v3142, %v3144
        %v3146 = vrot.slane %v3138, %v3145
        %v3148 = vunpack.c.l.s4 1983009808
        %v3149 = vunpack.c.0.s8 %v3148
        %v3150 = vlaneseq
        %v3151 = vshrl.u32 %v3150, 7
        %v3152 = vsub.s32 %v3149, %v3151
        %v3153 = vrot.slane %v3139, %v3152
        %v3154 = vcombine.low %v3129, %v3133
        %v3155 = vcombine.high %v3129, %v3133
        %v3157 = vunpack.c.l.s4 1983009808
        %v3158 = vunpack.c.0.s8 %v3157
        %v3159 = vlaneseq
        %v3160 = vshrl.u32 %v3159, 7
        %v3161 = vsub.s32 %v3158, %v3160
        %v3162 = vrot.slane %v3154, %v3161
        %v3164 = vunpack.c.l.s4 1983009808
        %v3165 = vunpack.c.0.s8 %v3164
        %v3166 = vlaneseq
        %v3167 = vshrl.u32 %v3166, 7
        %v3168 = vsub.s32 %v3165, %v3167
        %v3169 = vrot.slane %v3155, %v3168
        %v3170 = vcombine.low %v3146, %v3162
        %v3171 = vcombine.high %v3146, %v3162
        %v3173 = vunpack.c.l.s4 1934713408
        %v3174 = vunpack.c.0.s8 %v3173
        %v3175 = vlaneseq
        %v3176 = vshrl.u32 %v3175, 7
        %v3177 = vsub.s32 %v3174, %v3176
        %v3178 = vrot.slane %v3170, %v3177
        %v3180 = vunpack.c.l.s4 1934713408
        %v3181 = vunpack.c.0.s8 %v3180
        %v3182 = vlaneseq
        %v3183 = vshrl.u32 %v3182, 7
        %v3184 = vsub.s32 %v3181, %v3183
        %v3185 = vrot.slane %v3171, %v3184
        %v3186 = vcombine.low %v3153, %v3169
        %v3187 = vcombine.high %v3153, %v3169
        %v3189 = vunpack.c.l.s4 1934713408
        %v3190 = vunpack.c.0.s8 %v3189
        %v3191 = vlaneseq
        %v3192 = vshrl.u32 %v3191, 7
        %v3193 = vsub.s32 %v3190, %v3192
        %v3194 = vrot.slane %v3186, %v3193
        %v3196 = vunpack.c.l.s4 1934713408
        %v3197 = vunpack.c.0.s8 %v3196
        %v3198 = vlaneseq
        %v3199 = vshrl.u32 %v3198, 7
        %v3200 = vsub.s32 %v3197, %v3199
        %v3201 = vrot.slane %v3187, %v3200
        %v3202 = vcombine.high %v3178, 0.0
        %v3203 = vcombine.high %v3185, 0.0
        %v3204 = vcombine.high %v3194, 0.0
        %v3205 = vcombine.high %v3201, 0.0
        %v3206 = vcombine.low %v3178, %v3185
        %v3208 = vunpack.c.l.s4 1983009808
        %v3209 = vunpack.c.0.s8 %v3208
        %v3210 = vlaneseq
        %v3211 = vshrl.u32 %v3210, 7
        %v3212 = vsub.s32 %v3209, %v3211
        %v3213 = vrot.slane %v3206, %v3212
        %v3214 = vcombine.low %v3202, %v3203
        %v3216 = vunpack.c.l.s4 1983009808
        %v3217 = vunpack.c.0.s8 %v3216
        %v3218 = vlaneseq
        %v3219 = vshrl.u32 %v3218, 7
        %v3220 = vsub.s32 %v3217, %v3219
        %v3221 = vrot.slane %v3214, %v3220
        %v3222 = vcombine.low %v3194, %v3201
        %v3224 = vunpack.c.l.s4 1983009808
        %v3225 = vunpack.c.0.s8 %v3224
        %v3226 = vlaneseq
        %v3227 = vshrl.u32 %v3226, 7
        %v3228 = vsub.s32 %v3225, %v3227
        %v3229 = vrot.slane %v3222, %v3228
        %v3230 = vcombine.low %v3204, %v3205
        %v3232 = vunpack.c.l.s4 1983009808
        %v3233 = vunpack.c.0.s8 %v3232
        %v3234 = vlaneseq
        %v3235 = vshrl.u32 %v3234, 7
        %v3236 = vsub.s32 %v3233, %v3235
        %v3237 = vrot.slane %v3230, %v3236
        %v3238 = vcombine.low %v3213, %v3221
        %v3239 = vcombine.high %v3213, %v3221
        %v3241 = vunpack.c.l.s4 1934713408
        %v3242 = vunpack.c.0.s8 %v3241
        %v3243 = vlaneseq
        %v3244 = vshrl.u32 %v3243, 7
        %v3245 = vsub.s32 %v3242, %v3244
        %v3246 = vrot.slane %v3238, %v3245
        %v3248 = vunpack.c.l.s4 1934713408
        %v3249 = vunpack.c.0.s8 %v3248
        %v3250 = vlaneseq
        %v3251 = vshrl.u32 %v3250, 7
        %v3252 = vsub.s32 %v3249, %v3251
        %v3253 = vrot.slane %v3239, %v3252
        %v3254 = vcombine.low %v3229, %v3237
        %v3255 = vcombine.high %v3229, %v3237
        %v3257 = vunpack.c.l.s4 1934713408
        %v3258 = vunpack.c.0.s8 %v3257
        %v3259 = vlaneseq
        %v3260 = vshrl.u32 %v3259, 7
        %v3261 = vsub.s32 %v3258, %v3260
        %v3262 = vrot.slane %v3254, %v3261
        %v3264 = vunpack.c.l.s4 1934713408
        %v3265 = vunpack.c.0.s8 %v3264
        %v3266 = vlaneseq
        %v3267 = vshrl.u32 %v3266, 7
        %v3268 = vsub.s32 %v3265, %v3267
        %v3269 = vrot.slane %v3255, %v3268
        %v3270 = vcombine.low %v3246, %v3262
        %v3271 = vcombine.high %v3246, %v3262
        %v3272 = vcombine.low %v3253, %v3269
        %v3273 = vcombine.high %v3253, %v3269
        %v3274 = vpack.c.bf16 %v3270, %v3270
        %v3275 = vpack.c.bf16 %v3271, %v3271
        %v3276 = vpack.c.bf16 %v3272, %v3272
        %v3277 = vpack.c.bf16 %v3273, %v3273
        %v3279 = vsel %vm2011, %v2972, 0
        %v3282 = vsel %vm2011, %v3122, 0
        %3284 = vmatprep.subr.bf16.mxu0 0
        %3285 = vmatpush1.bf16.xpose.msra.mxu0 %v3282
        %3286 = vmatprep.subr.bf16.mxu0 0
        %3287 = vmatpush1.bf16.xpose.msra.mxu0 0
        %3288 = vmatprep.subr.bf16.mxu0 0
        %3289 = vmatpush1.bf16.xpose.msra.mxu0 0
        %3290 = vmatprep.subr.bf16.mxu0 0
        %3291 = vmatpush1.bf16.xpose.msra.mxu0 0
        %3292 = vmatprep.subr.bf16.mxu0 0
        %3293 = vmatpush1.bf16.xpose.msra.mxu0 0
        %3294 = vmatprep.subr.bf16.mxu0 0
        %3295 = vmatpush1.bf16.xpose.msra.mxu0 0
        %3296 = vmatprep.subr.bf16.mxu0 0
        %3297 = vmatpush1.bf16.xpose.msra.mxu0 0
        %3298 = vmatprep.subr.bf16.mxu0 0
        %3299 = vmatpush1.bf16.xpose.msra.mxu0 0
        %3300 = vmatprep.subr.bf16.mxu0 0
        %3301 = vmatpush1.bf16.xpose.msra.mxu0 0
        %3302 = vmatprep.subr.bf16.mxu0 0
        %3303 = vmatpush1.bf16.xpose.msra.mxu0 0
        %3304 = vmatprep.subr.bf16.mxu0 0
        %3305 = vmatpush1.bf16.xpose.msra.mxu0 0
        %3306 = vmatprep.subr.bf16.mxu0 0
        %3307 = vmatpush1.bf16.xpose.msra.mxu0 0
        %3308 = vmatprep.subr.bf16.mxu0 0
        %3309 = vmatpush1.bf16.xpose.msra.mxu0 0
        %3310 = vmatprep.subr.bf16.mxu0 0
        %3311 = vmatpush1.bf16.xpose.msra.mxu0 0
        %3312 = vmatprep.subr.bf16.mxu0 0
        %3313 = vmatpush1.bf16.xpose.msra.mxu0 0
        %3314 = vmatprep.subr.bf16.mxu0 0
        %3315 = vmatpush1.bf16.xpose.msra.mxu0 0
        %3316 = vmatprep.mubr.bf16.mxu0 0
        %3317 = vmatmul.mubr.bf16.gmra.mrb[0].mxu0 %v3279
        %v3318 = vpop.f32.mrb[0].mxu0
        %v3319 = vadd.f32 0.0, %v3318
        %v3320 = vpop.f32.mrb[0].mxu0
        %v3321 = vpop.f32.mrb[0].mxu0
        %v3322 = vpop.f32.mrb[0].mxu0
        %3323 = vdwg.mxu0
        %v3325 = vsel %vm2011, %v2973, 0
        %v3328 = vsel %vm2011, %v3123, 0
        %3330 = vmatprep.subr.bf16.mxu0 0
        %3331 = vmatpush1.bf16.xpose.msra.mxu0 %v3328
        %3332 = vmatprep.subr.bf16.mxu0 0
        %3333 = vmatpush1.bf16.xpose.msra.mxu0 0
        %3334 = vmatprep.subr.bf16.mxu0 0
        %3335 = vmatpush1.bf16.xpose.msra.mxu0 0
        %3336 = vmatprep.subr.bf16.mxu0 0
        %3337 = vmatpush1.bf16.xpose.msra.mxu0 0
        %3338 = vmatprep.subr.bf16.mxu0 0
        %3339 = vmatpush1.bf16.xpose.msra.mxu0 0
        %3340 = vmatprep.subr.bf16.mxu0 0
        %3341 = vmatpush1.bf16.xpose.msra.mxu0 0
        %3342 = vmatprep.subr.bf16.mxu0 0
        %3343 = vmatpush1.bf16.xpose.msra.mxu0 0
        %3344 = vmatprep.subr.bf16.mxu0 0
        %3345 = vmatpush1.bf16.xpose.msra.mxu0 0
        %3346 = vmatprep.subr.bf16.mxu0 0
        %3347 = vmatpush1.bf16.xpose.msra.mxu0 0
        %3348 = vmatprep.subr.bf16.mxu0 0
        %3349 = vmatpush1.bf16.xpose.msra.mxu0 0
        %3350 = vmatprep.subr.bf16.mxu0 0
        %3351 = vmatpush1.bf16.xpose.msra.mxu0 0
        %3352 = vmatprep.subr.bf16.mxu0 0
        %3353 = vmatpush1.bf16.xpose.msra.mxu0 0
        %3354 = vmatprep.subr.bf16.mxu0 0
        %3355 = vmatpush1.bf16.xpose.msra.mxu0 0
        %3356 = vmatprep.subr.bf16.mxu0 0
        %3357 = vmatpush1.bf16.xpose.msra.mxu0 0
        %3358 = vmatprep.subr.bf16.mxu0 0
        %3359 = vmatpush1.bf16.xpose.msra.mxu0 0
        %3360 = vmatprep.subr.bf16.mxu0 0
        %3361 = vmatpush1.bf16.xpose.msra.mxu0 0
        %3362 = vmatprep.mubr.bf16.mxu0 0
        %3363 = vmatmul.mubr.bf16.gmra.mrb[0].mxu0 %v3325
        %v3364 = vpop.f32.mrb[0].mxu0
        %v3365 = vadd.f32 0.0, %v3364
        %v3366 = vpop.f32.mrb[0].mxu0
        %v3367 = vpop.f32.mrb[0].mxu0
        %v3368 = vpop.f32.mrb[0].mxu0
        %3369 = vdwg.mxu0
        %v3371 = vsel %vm2011, %v2974, 0
        %v3374 = vsel %vm2011, %v3124, 0
        %3376 = vmatprep.subr.bf16.mxu0 0
        %3377 = vmatpush1.bf16.xpose.msra.mxu0 %v3374
        %3378 = vmatprep.subr.bf16.mxu0 0
        %3379 = vmatpush1.bf16.xpose.msra.mxu0 0
        %3380 = vmatprep.subr.bf16.mxu0 0
        %3381 = vmatpush1.bf16.xpose.msra.mxu0 0
        %3382 = vmatprep.subr.bf16.mxu0 0
        %3383 = vmatpush1.bf16.xpose.msra.mxu0 0
        %3384 = vmatprep.subr.bf16.mxu0 0
        %3385 = vmatpush1.bf16.xpose.msra.mxu0 0
        %3386 = vmatprep.subr.bf16.mxu0 0
        %3387 = vmatpush1.bf16.xpose.msra.mxu0 0
        %3388 = vmatprep.subr.bf16.mxu0 0
        %3389 = vmatpush1.bf16.xpose.msra.mxu0 0
        %3390 = vmatprep.subr.bf16.mxu0 0
        %3391 = vmatpush1.bf16.xpose.msra.mxu0 0
        %3392 = vmatprep.subr.bf16.mxu0 0
        %3393 = vmatpush1.bf16.xpose.msra.mxu0 0
        %3394 = vmatprep.subr.bf16.mxu0 0
        %3395 = vmatpush1.bf16.xpose.msra.mxu0 0
        %3396 = vmatprep.subr.bf16.mxu0 0
        %3397 = vmatpush1.bf16.xpose.msra.mxu0 0
        %3398 = vmatprep.subr.bf16.mxu0 0
        %3399 = vmatpush1.bf16.xpose.msra.mxu0 0
        %3400 = vmatprep.subr.bf16.mxu0 0
        %3401 = vmatpush1.bf16.xpose.msra.mxu0 0
        %3402 = vmatprep.subr.bf16.mxu0 0
        %3403 = vmatpush1.bf16.xpose.msra.mxu0 0
        %3404 = vmatprep.subr.bf16.mxu0 0
        %3405 = vmatpush1.bf16.xpose.msra.mxu0 0
        %3406 = vmatprep.subr.bf16.mxu0 0
        %3407 = vmatpush1.bf16.xpose.msra.mxu0 0
        %3408 = vmatprep.mubr.bf16.mxu0 0
        %3409 = vmatmul.mubr.bf16.gmra.mrb[0].mxu0 %v3371
        %v3410 = vpop.f32.mrb[0].mxu0
        %v3411 = vadd.f32 0.0, %v3410
        %v3412 = vpop.f32.mrb[0].mxu0
        %v3413 = vpop.f32.mrb[0].mxu0
        %v3414 = vpop.f32.mrb[0].mxu0
        %3415 = vdwg.mxu0
        %v3417 = vsel %vm2011, %v2975, 0
        %v3420 = vsel %vm2011, %v3125, 0
        %3422 = vmatprep.subr.bf16.mxu0 0
        %3423 = vmatpush1.bf16.xpose.msra.mxu0 %v3420
        %3424 = vmatprep.subr.bf16.mxu0 0
        %3425 = vmatpush1.bf16.xpose.msra.mxu0 0
        %3426 = vmatprep.subr.bf16.mxu0 0
        %3427 = vmatpush1.bf16.xpose.msra.mxu0 0
        %3428 = vmatprep.subr.bf16.mxu0 0
        %3429 = vmatpush1.bf16.xpose.msra.mxu0 0
        %3430 = vmatprep.subr.bf16.mxu0 0
        %3431 = vmatpush1.bf16.xpose.msra.mxu0 0
        %3432 = vmatprep.subr.bf16.mxu0 0
        %3433 = vmatpush1.bf16.xpose.msra.mxu0 0
        %3434 = vmatprep.subr.bf16.mxu0 0
        %3435 = vmatpush1.bf16.xpose.msra.mxu0 0
        %3436 = vmatprep.subr.bf16.mxu0 0
        %3437 = vmatpush1.bf16.xpose.msra.mxu0 0
        %3438 = vmatprep.subr.bf16.mxu0 0
        %3439 = vmatpush1.bf16.xpose.msra.mxu0 0
        %3440 = vmatprep.subr.bf16.mxu0 0
        %3441 = vmatpush1.bf16.xpose.msra.mxu0 0
        %3442 = vmatprep.subr.bf16.mxu0 0
        %3443 = vmatpush1.bf16.xpose.msra.mxu0 0
        %3444 = vmatprep.subr.bf16.mxu0 0
        %3445 = vmatpush1.bf16.xpose.msra.mxu0 0
        %3446 = vmatprep.subr.bf16.mxu0 0
        %3447 = vmatpush1.bf16.xpose.msra.mxu0 0
        %3448 = vmatprep.subr.bf16.mxu0 0
        %3449 = vmatpush1.bf16.xpose.msra.mxu0 0
        %3450 = vmatprep.subr.bf16.mxu0 0
        %3451 = vmatpush1.bf16.xpose.msra.mxu0 0
        %3452 = vmatprep.subr.bf16.mxu0 0
        %3453 = vmatpush1.bf16.xpose.msra.mxu0 0
        %3454 = vmatprep.mubr.bf16.mxu0 0
        %3455 = vmatmul.mubr.bf16.gmra.mrb[0].mxu0 %v3417
        %v3456 = vpop.f32.mrb[0].mxu0
        %v3457 = vadd.f32 0.0, %v3456
        %v3458 = vpop.f32.mrb[0].mxu0
        %v3459 = vpop.f32.mrb[0].mxu0
        %v3460 = vpop.f32.mrb[0].mxu0
        %3461 = vdwg.mxu0
        %v3462 = vmul.f32 %v3319, 0.35355338
        %v3463 = vmul.f32 %v3365, 0.35355338
        %v3464 = vmul.f32 %v3411, 0.35355338
        %v3465 = vmul.f32 %v3457, 0.35355338
        %v3466 = vadd.f32 %v3462, %v1488
        %v3467 = vadd.f32 %v3463, %v1488
        %v3468 = vadd.f32 %v3464, %v1488
        %v3469 = vadd.f32 %v3465, %v1488
        %v3470 = vsel %vm2011, %v3466, -inf
        %3471 = vmax.xlane.f32.xlu0 %v3470
        %v3472 = vpop.xlane.xlu0 %3471
        %v3473 = vsel %vm2011, %v3467, -inf
        %3474 = vmax.xlane.f32.xlu0 %v3473
        %v3475 = vpop.xlane.xlu0 %3474
        %v3476 = vsel %vm2011, %v3468, -inf
        %3477 = vmax.xlane.f32.xlu0 %v3476
        %v3478 = vpop.xlane.xlu0 %3477
        %v3479 = vsel %vm2011, %v3469, -inf
        %3480 = vmax.xlane.f32.xlu0 %v3479
        %v3481 = vpop.xlane.xlu0 %3480
        %v3482 = vsub.f32 %v3466, %v3472
        %v3483 = vsub.f32 %v3467, %v3475
        %v3484 = vsub.f32 %v3468, %v3478
        %v3485 = vsub.f32 %v3469, %v3481
        %v3486 = vmul.f32 %v3482, 1.442695
        %v3487 = vpow.pop %v3486
        %v3488 = vmul.f32 %v3483, 1.442695
        %v3489 = vpow.pop %v3488
        %v3490 = vmul.f32 %v3484, 1.442695
        %v3491 = vpow.pop %v3490
        %v3492 = vmul.f32 %v3485, 1.442695
        %v3493 = vpow.pop %v3492
        %v3494 = vsel %vm2011, %v3487, 0.0
        %3495 = vadd.xlane.f32.xlu0 %v3494
        %v3496 = vpop.xlane.xlu0 %3495
        %v3497 = vsel %vm2011, %v3489, 0.0
        %3498 = vadd.xlane.f32.xlu0 %v3497
        %v3499 = vpop.xlane.xlu0 %3498
        %v3500 = vsel %vm2011, %v3491, 0.0
        %3501 = vadd.xlane.f32.xlu0 %v3500
        %v3502 = vpop.xlane.xlu0 %3501
        %v3503 = vsel %vm2011, %v3493, 0.0
        %3504 = vadd.xlane.f32.xlu0 %v3503
        %v3505 = vpop.xlane.xlu0 %3504
        %v3506 = vrcp.pop %v3496
        %v3507 = vrcp.pop %v3499
        %v3508 = vrcp.pop %v3502
        %v3509 = vrcp.pop %v3505
        %v3510 = vmul.f32 %v3487, %v3506
        %v3511 = vmul.f32 %v3489, %v3507
        %v3512 = vmul.f32 %v3491, %v3508
        %v3513 = vmul.f32 %v3493, %v3509
        %v3514 = vpack.c.bf16 %v3510, %v3510
        %v3515 = vpack.c.bf16 %v3511, %v3511
        %v3516 = vpack.c.bf16 %v3512, %v3512
        %v3517 = vpack.c.bf16 %v3513, %v3513
        %v3519 = vsel %vm2011, %v3514, 0
        %v3522 = vsel %vm2255, %v3274, 0
        %3524 = vmatprep.subr.bf16.mxu0 0
        %3525 = vmatpush1.bf16.msra.mxu0 %v3522
        %3526 = vmatprep.subr.bf16.mxu0 0
        %3527 = vmatpush1.bf16.msra.mxu0 0
        %3528 = vmatprep.subr.bf16.mxu0 0
        %3529 = vmatpush1.bf16.msra.mxu0 0
        %3530 = vmatprep.subr.bf16.mxu0 0
        %3531 = vmatpush1.bf16.msra.mxu0 0
        %3532 = vmatprep.subr.bf16.mxu0 0
        %3533 = vmatpush1.bf16.msra.mxu0 0
        %3534 = vmatprep.subr.bf16.mxu0 0
        %3535 = vmatpush1.bf16.msra.mxu0 0
        %3536 = vmatprep.subr.bf16.mxu0 0
        %3537 = vmatpush1.bf16.msra.mxu0 0
        %3538 = vmatprep.subr.bf16.mxu0 0
        %3539 = vmatpush1.bf16.msra.mxu0 0
        %3540 = vmatprep.subr.bf16.mxu0 0
        %3541 = vmatpush1.bf16.msra.mxu0 0
        %3542 = vmatprep.subr.bf16.mxu0 0
        %3543 = vmatpush1.bf16.msra.mxu0 0
        %3544 = vmatprep.subr.bf16.mxu0 0
        %3545 = vmatpush1.bf16.msra.mxu0 0
        %3546 = vmatprep.subr.bf16.mxu0 0
        %3547 = vmatpush1.bf16.msra.mxu0 0
        %3548 = vmatprep.subr.bf16.mxu0 0
        %3549 = vmatpush1.bf16.msra.mxu0 0
        %3550 = vmatprep.subr.bf16.mxu0 0
        %3551 = vmatpush1.bf16.msra.mxu0 0
        %3552 = vmatprep.subr.bf16.mxu0 0
        %3553 = vmatpush1.bf16.msra.mxu0 0
        %3554 = vmatprep.subr.bf16.mxu0 0
        %3555 = vmatpush1.bf16.msra.mxu0 0
        %3556 = vmatprep.mubr.bf16.mxu0 0
        %3557 = vmatmul.mubr.bf16.gmra.mrb[0].mxu0 %v3519
        %v3558 = vpop.f32.mrb[0].mxu0
        %v3559 = vadd.f32 0.0, %v3558
        %v3560 = vpop.f32.mrb[0].mxu0
        %v3561 = vpop.f32.mrb[0].mxu0
        %v3562 = vpop.f32.mrb[0].mxu0
        %3563 = vdwg.mxu0
        %v3565 = vsel %vm2011, %v3515, 0
        %v3568 = vsel %vm2255, %v3275, 0
        %3570 = vmatprep.subr.bf16.mxu0 0
        %3571 = vmatpush1.bf16.msra.mxu0 %v3568
        %3572 = vmatprep.subr.bf16.mxu0 0
        %3573 = vmatpush1.bf16.msra.mxu0 0
        %3574 = vmatprep.subr.bf16.mxu0 0
        %3575 = vmatpush1.bf16.msra.mxu0 0
        %3576 = vmatprep.subr.bf16.mxu0 0
        %3577 = vmatpush1.bf16.msra.mxu0 0
        %3578 = vmatprep.subr.bf16.mxu0 0
        %3579 = vmatpush1.bf16.msra.mxu0 0
        %3580 = vmatprep.subr.bf16.mxu0 0
        %3581 = vmatpush1.bf16.msra.mxu0 0
        %3582 = vmatprep.subr.bf16.mxu0 0
        %3583 = vmatpush1.bf16.msra.mxu0 0
        %3584 = vmatprep.subr.bf16.mxu0 0
        %3585 = vmatpush1.bf16.msra.mxu0 0
        %3586 = vmatprep.subr.bf16.mxu0 0
        %3587 = vmatpush1.bf16.msra.mxu0 0
        %3588 = vmatprep.subr.bf16.mxu0 0
        %3589 = vmatpush1.bf16.msra.mxu0 0
        %3590 = vmatprep.subr.bf16.mxu0 0
        %3591 = vmatpush1.bf16.msra.mxu0 0
        %3592 = vmatprep.subr.bf16.mxu0 0
        %3593 = vmatpush1.bf16.msra.mxu0 0
        %3594 = vmatprep.subr.bf16.mxu0 0
        %3595 = vmatpush1.bf16.msra.mxu0 0
        %3596 = vmatprep.subr.bf16.mxu0 0
        %3597 = vmatpush1.bf16.msra.mxu0 0
        %3598 = vmatprep.subr.bf16.mxu0 0
        %3599 = vmatpush1.bf16.msra.mxu0 0
        %3600 = vmatprep.subr.bf16.mxu0 0
        %3601 = vmatpush1.bf16.msra.mxu0 0
        %3602 = vmatprep.mubr.bf16.mxu0 0
        %3603 = vmatmul.mubr.bf16.gmra.mrb[0].mxu0 %v3565
        %v3604 = vpop.f32.mrb[0].mxu0
        %v3605 = vadd.f32 0.0, %v3604
        %v3606 = vpop.f32.mrb[0].mxu0
        %v3607 = vpop.f32.mrb[0].mxu0
        %v3608 = vpop.f32.mrb[0].mxu0
        %3609 = vdwg.mxu0
        %v3611 = vsel %vm2011, %v3516, 0
        %v3614 = vsel %vm2255, %v3276, 0
        %3616 = vmatprep.subr.bf16.mxu0 0
        %3617 = vmatpush1.bf16.msra.mxu0 %v3614
        %3618 = vmatprep.subr.bf16.mxu0 0
        %3619 = vmatpush1.bf16.msra.mxu0 0
        %3620 = vmatprep.subr.bf16.mxu0 0
        %3621 = vmatpush1.bf16.msra.mxu0 0
        %3622 = vmatprep.subr.bf16.mxu0 0
        %3623 = vmatpush1.bf16.msra.mxu0 0
        %3624 = vmatprep.subr.bf16.mxu0 0
        %3625 = vmatpush1.bf16.msra.mxu0 0
        %3626 = vmatprep.subr.bf16.mxu0 0
        %3627 = vmatpush1.bf16.msra.mxu0 0
        %3628 = vmatprep.subr.bf16.mxu0 0
        %3629 = vmatpush1.bf16.msra.mxu0 0
        %3630 = vmatprep.subr.bf16.mxu0 0
        %3631 = vmatpush1.bf16.msra.mxu0 0
        %3632 = vmatprep.subr.bf16.mxu0 0
        %3633 = vmatpush1.bf16.msra.mxu0 0
        %3634 = vmatprep.subr.bf16.mxu0 0
        %3635 = vmatpush1.bf16.msra.mxu0 0
        %3636 = vmatprep.subr.bf16.mxu0 0
        %3637 = vmatpush1.bf16.msra.mxu0 0
        %3638 = vmatprep.subr.bf16.mxu0 0
        %3639 = vmatpush1.bf16.msra.mxu0 0
        %3640 = vmatprep.subr.bf16.mxu0 0
        %3641 = vmatpush1.bf16.msra.mxu0 0
        %3642 = vmatprep.subr.bf16.mxu0 0
        %3643 = vmatpush1.bf16.msra.mxu0 0
        %3644 = vmatprep.subr.bf16.mxu0 0
        %3645 = vmatpush1.bf16.msra.mxu0 0
        %3646 = vmatprep.subr.bf16.mxu0 0
        %3647 = vmatpush1.bf16.msra.mxu0 0
        %3648 = vmatprep.mubr.bf16.mxu0 0
        %3649 = vmatmul.mubr.bf16.gmra.mrb[0].mxu0 %v3611
        %v3650 = vpop.f32.mrb[0].mxu0
        %v3651 = vadd.f32 0.0, %v3650
        %v3652 = vpop.f32.mrb[0].mxu0
        %v3653 = vpop.f32.mrb[0].mxu0
        %v3654 = vpop.f32.mrb[0].mxu0
        %3655 = vdwg.mxu0
        %v3657 = vsel %vm2011, %v3517, 0
        %v3660 = vsel %vm2255, %v3277, 0
        %3662 = vmatprep.subr.bf16.mxu0 0
        %3663 = vmatpush1.bf16.msra.mxu0 %v3660
        %3664 = vmatprep.subr.bf16.mxu0 0
        %3665 = vmatpush1.bf16.msra.mxu0 0
        %3666 = vmatprep.subr.bf16.mxu0 0
        %3667 = vmatpush1.bf16.msra.mxu0 0
        %3668 = vmatprep.subr.bf16.mxu0 0
        %3669 = vmatpush1.bf16.msra.mxu0 0
        %3670 = vmatprep.subr.bf16.mxu0 0
        %3671 = vmatpush1.bf16.msra.mxu0 0
        %3672 = vmatprep.subr.bf16.mxu0 0
        %3673 = vmatpush1.bf16.msra.mxu0 0
        %3674 = vmatprep.subr.bf16.mxu0 0
        %3675 = vmatpush1.bf16.msra.mxu0 0
        %3676 = vmatprep.subr.bf16.mxu0 0
        %3677 = vmatpush1.bf16.msra.mxu0 0
        %3678 = vmatprep.subr.bf16.mxu0 0
        %3679 = vmatpush1.bf16.msra.mxu0 0
        %3680 = vmatprep.subr.bf16.mxu0 0
        %3681 = vmatpush1.bf16.msra.mxu0 0
        %3682 = vmatprep.subr.bf16.mxu0 0
        %3683 = vmatpush1.bf16.msra.mxu0 0
        %3684 = vmatprep.subr.bf16.mxu0 0
        %3685 = vmatpush1.bf16.msra.mxu0 0
        %3686 = vmatprep.subr.bf16.mxu0 0
        %3687 = vmatpush1.bf16.msra.mxu0 0
        %3688 = vmatprep.subr.bf16.mxu0 0
        %3689 = vmatpush1.bf16.msra.mxu0 0
        %3690 = vmatprep.subr.bf16.mxu0 0
        %3691 = vmatpush1.bf16.msra.mxu0 0
        %3692 = vmatprep.subr.bf16.mxu0 0
        %3693 = vmatpush1.bf16.msra.mxu0 0
        %3694 = vmatprep.mubr.bf16.mxu0 0
        %3695 = vmatmul.mubr.bf16.gmra.mrb[0].mxu0 %v3657
        %v3696 = vpop.f32.mrb[0].mxu0
        %v3697 = vadd.f32 0.0, %v3696
        %v3698 = vpop.f32.mrb[0].mxu0
        %v3699 = vpop.f32.mrb[0].mxu0
        %v3700 = vpop.f32.mrb[0].mxu0
        %3701 = vdwg.mxu0
        %v3702 = vcombine.low %v3559, %v3651
        %v3703 = vcombine.high %v3559, %v3651
        %v3705 = vunpack.c.l.s4 1983009808
        %v3706 = vunpack.c.0.s8 %v3705
        %v3707 = vlaneseq
        %v3708 = vshrl.u32 %v3707, 7
        %v3709 = vsub.s32 %v3706, %v3708
        %v3710 = vrot.slane %v3702, %v3709
        %v3712 = vunpack.c.l.s4 1983009808
        %v3713 = vunpack.c.0.s8 %v3712
        %v3714 = vlaneseq
        %v3715 = vshrl.u32 %v3714, 7
        %v3716 = vsub.s32 %v3713, %v3715
        %v3717 = vrot.slane %v3703, %v3716
        %v3718 = vcombine.low %v3605, %v3697
        %v3719 = vcombine.high %v3605, %v3697
        %v3721 = vunpack.c.l.s4 1983009808
        %v3722 = vunpack.c.0.s8 %v3721
        %v3723 = vlaneseq
        %v3724 = vshrl.u32 %v3723, 7
        %v3725 = vsub.s32 %v3722, %v3724
        %v3726 = vrot.slane %v3718, %v3725
        %v3728 = vunpack.c.l.s4 1983009808
        %v3729 = vunpack.c.0.s8 %v3728
        %v3730 = vlaneseq
        %v3731 = vshrl.u32 %v3730, 7
        %v3732 = vsub.s32 %v3729, %v3731
        %v3733 = vrot.slane %v3719, %v3732
        %v3734 = vcombine.low %v3710, %v3726
        %v3735 = vcombine.high %v3710, %v3726
        %v3737 = vunpack.c.l.s4 1934713408
        %v3738 = vunpack.c.0.s8 %v3737
        %v3739 = vlaneseq
        %v3740 = vshrl.u32 %v3739, 7
        %v3741 = vsub.s32 %v3738, %v3740
        %v3742 = vrot.slane %v3734, %v3741
        %v3744 = vunpack.c.l.s4 1934713408
        %v3745 = vunpack.c.0.s8 %v3744
        %v3746 = vlaneseq
        %v3747 = vshrl.u32 %v3746, 7
        %v3748 = vsub.s32 %v3745, %v3747
        %v3749 = vrot.slane %v3735, %v3748
        %v3750 = vcombine.low %v3717, %v3733
        %v3751 = vcombine.high %v3717, %v3733
        %v3753 = vunpack.c.l.s4 1934713408
        %v3754 = vunpack.c.0.s8 %v3753
        %v3755 = vlaneseq
        %v3756 = vshrl.u32 %v3755, 7
        %v3757 = vsub.s32 %v3754, %v3756
        %v3758 = vrot.slane %v3750, %v3757
        %v3760 = vunpack.c.l.s4 1934713408
        %v3761 = vunpack.c.0.s8 %v3760
        %v3762 = vlaneseq
        %v3763 = vshrl.u32 %v3762, 7
        %v3764 = vsub.s32 %v3761, %v3763
        %v3765 = vrot.slane %v3751, %v3764
        %v3766 = vcombine.high %v3742, 0.0
        %v3767 = vcombine.high %v3749, 0.0
        %v3768 = vcombine.high %v3758, 0.0
        %v3769 = vcombine.high %v3765, 0.0
        %v3770 = vcombine.low %v3742, %v3749
        %v3772 = vunpack.c.l.s4 1983009808
        %v3773 = vunpack.c.0.s8 %v3772
        %v3774 = vlaneseq
        %v3775 = vshrl.u32 %v3774, 7
        %v3776 = vsub.s32 %v3773, %v3775
        %v3777 = vrot.slane %v3770, %v3776
        %v3778 = vcombine.low %v3766, %v3767
        %v3780 = vunpack.c.l.s4 1983009808
        %v3781 = vunpack.c.0.s8 %v3780
        %v3782 = vlaneseq
        %v3783 = vshrl.u32 %v3782, 7
        %v3784 = vsub.s32 %v3781, %v3783
        %v3785 = vrot.slane %v3778, %v3784
        %v3786 = vcombine.low %v3758, %v3765
        %v3788 = vunpack.c.l.s4 1983009808
        %v3789 = vunpack.c.0.s8 %v3788
        %v3790 = vlaneseq
        %v3791 = vshrl.u32 %v3790, 7
        %v3792 = vsub.s32 %v3789, %v3791
        %v3793 = vrot.slane %v3786, %v3792
        %v3794 = vcombine.low %v3768, %v3769
        %v3796 = vunpack.c.l.s4 1983009808
        %v3797 = vunpack.c.0.s8 %v3796
        %v3798 = vlaneseq
        %v3799 = vshrl.u32 %v3798, 7
        %v3800 = vsub.s32 %v3797, %v3799
        %v3801 = vrot.slane %v3794, %v3800
        %v3802 = vcombine.low %v3777, %v3785
        %v3803 = vcombine.high %v3777, %v3785
        %v3805 = vunpack.c.l.s4 1934713408
        %v3806 = vunpack.c.0.s8 %v3805
        %v3807 = vlaneseq
        %v3808 = vshrl.u32 %v3807, 7
        %v3809 = vsub.s32 %v3806, %v3808
        %v3810 = vrot.slane %v3802, %v3809
        %v3812 = vunpack.c.l.s4 1934713408
        %v3813 = vunpack.c.0.s8 %v3812
        %v3814 = vlaneseq
        %v3815 = vshrl.u32 %v3814, 7
        %v3816 = vsub.s32 %v3813, %v3815
        %v3817 = vrot.slane %v3803, %v3816
        %v3818 = vcombine.low %v3793, %v3801
        %v3819 = vcombine.high %v3793, %v3801
        %v3821 = vunpack.c.l.s4 1934713408
        %v3822 = vunpack.c.0.s8 %v3821
        %v3823 = vlaneseq
        %v3824 = vshrl.u32 %v3823, 7
        %v3825 = vsub.s32 %v3822, %v3824
        %v3826 = vrot.slane %v3818, %v3825
        %v3828 = vunpack.c.l.s4 1934713408
        %v3829 = vunpack.c.0.s8 %v3828
        %v3830 = vlaneseq
        %v3831 = vshrl.u32 %v3830, 7
        %v3832 = vsub.s32 %v3829, %v3831
        %v3833 = vrot.slane %v3819, %v3832
        %v3834 = vcombine.low %v3810, %v3826
        %v3835 = vcombine.high %v3810, %v3826
        %v3836 = vcombine.low %v3817, %v3833
        %v3837 = vcombine.high %v3817, %v3833
        %3839 = vrot.lane.b32.xlu0 %v3835, 8
        %v3840 = vpop.permute.xlu0 %3839
        %3843 = vrot.lane.b32.xlu0 %v3836, 16
        %v3844 = vpop.permute.xlu0 %3843
        %3847 = vrot.lane.b32.xlu0 %v3837, 24
        %v3848 = vpop.permute.xlu0 %3847
        %v3850 = vsel %vm2011, %v3834, %v3840
        %v3851 = vsel %vm2586, %v3850, %v3844
        %v3852 = vsel %vm2588, %v3851, %v3848
        %3853 = vst.msk [vmem:[%s1435] sm:$0xff] %vm2011, %v3510
        %3854 = vst.msk [vmem:[%s1435 + $0x8] sm:$0xff] %vm2011, %v3511
        %3855 = vst.msk [vmem:[%s1435 + $0x10] sm:$0xff] %vm2011, %v3512
        %3856 = vst.msk [vmem:[%s1435 + $0x18] sm:$0xff] %vm2011, %v3513
        %v3857 = vpack.c.bf16 %v3852, %v3852
        %v3858 = vld [vmem:[%s1226] sm:$0xf]
        %v3859 = vld [vmem:[%s1226 + $0x4] sm:$0xf]
        %v3860 = vld [vmem:[%s1226 + $0x8] sm:$0xf]
        %v3861 = vld [vmem:[%s1226 + $0xc] sm:$0xf]
        %v3862 = vld [vmem:[%s1234] sm:$0x1]
        %v3864 = vlaneseq
        %v3865 = vshrl.u32 %v3864, 7
        %v3866 = vsub.s32 0, %v3865
        %v3867 = vrot.slane %v3862, %v3866
        %v3873 = vunpack.c.l.b16 %v3858
        %v3874 = vunpack.c.l.b16 %v3859
        %v3875 = vunpack.c.l.b16 %v3860
        %v3876 = vunpack.c.l.b16 %v3861
        %v3877 = vpack.c.b16 %v3874, %v3873
        %v3878 = vpack.c.b16 %v3876, %v3875
        %v3882 = vsel %vm1513, %v3857, 0
        %3884 = vmatprep.subr.bf16.mxu0 0
        %3885 = vmatpush1.bf16.msra.mxu0 %v3877
        %3886 = vmatprep.subr.bf16.mxu0 0
        %3887 = vmatpush1.bf16.msra.mxu0 %v3878
        %3888 = vmatprep.subr.bf16.mxu0 0
        %3889 = vmatpush1.bf16.msra.mxu0 0
        %3890 = vmatprep.subr.bf16.mxu0 0
        %3891 = vmatpush1.bf16.msra.mxu0 0
        %3892 = vmatprep.subr.bf16.mxu0 0
        %3893 = vmatpush1.bf16.msra.mxu0 0
        %3894 = vmatprep.subr.bf16.mxu0 0
        %3895 = vmatpush1.bf16.msra.mxu0 0
        %3896 = vmatprep.subr.bf16.mxu0 0
        %3897 = vmatpush1.bf16.msra.mxu0 0
        %3898 = vmatprep.subr.bf16.mxu0 0
        %3899 = vmatpush1.bf16.msra.mxu0 0
        %3900 = vmatprep.subr.bf16.mxu0 0
        %3901 = vmatpush1.bf16.msra.mxu0 0
        %3902 = vmatprep.subr.bf16.mxu0 0
        %3903 = vmatpush1.bf16.msra.mxu0 0
        %3904 = vmatprep.subr.bf16.mxu0 0
        %3905 = vmatpush1.bf16.msra.mxu0 0
        %3906 = vmatprep.subr.bf16.mxu0 0
        %3907 = vmatpush1.bf16.msra.mxu0 0
        %3908 = vmatprep.subr.bf16.mxu0 0
        %3909 = vmatpush1.bf16.msra.mxu0 0
        %3910 = vmatprep.subr.bf16.mxu0 0
        %3911 = vmatpush1.bf16.msra.mxu0 0
        %3912 = vmatprep.subr.bf16.mxu0 0
        %3913 = vmatpush1.bf16.msra.mxu0 0
        %3914 = vmatprep.subr.bf16.mxu0 0
        %3915 = vmatpush1.bf16.msra.mxu0 0
        %3916 = vmatprep.mubr.bf16.mxu0 0
        %3917 = vmatmul.mubr.bf16.gmra.mrb[0].mxu0 %v3882
        %v3918 = vpop.f32.mrb[0].mxu0
        %v3919 = vadd.f32 %v3867, %v3918
        %v3920 = vpop.f32.mrb[0].mxu0
        %v3921 = vpop.f32.mrb[0].mxu0
        %v3922 = vpop.f32.mrb[0].mxu0
        %3923 = vdwg.mxu0
        %v3924 = vadd.f32 %v2691, %v3919
        %v3925 = vsel %vm1513, %v3924, 0.0
        %3926 = vadd.xlane.f32.xlu0 %v3925
        %v3927 = vpop.xlane.xlu0 %3926
        %v3928 = vmul.f32 %v3927, %v2665
        %v3929 = vsub.f32 %v3924, %v3928
        %v3930 = vmul.f32 %v3929, %v3929
        %v3931 = vsel %vm1513, %v3930, 0.0
        %3932 = vadd.xlane.f32.xlu0 %v3931
        %v3933 = vpop.xlane.xlu0 %3932
        %v3934 = vmul.f32 %v3933, %v2665
        %v3935 = vadd.f32 %v3934, 1e-05
        %v3936 = vrsqrt.pop %v3935
        %v3937 = vmul.f32 %v3929, %v3936
        %v3938 = vld [vmem:[%s1242] sm:$0x1]
        %v3940 = vlaneseq
        %v3941 = vshrl.u32 %v3940, 7
        %v3942 = vsub.s32 0, %v3941
        %v3943 = vrot.slane %v3938, %v3942
        %v3945 = vmul.f32 %v3937, %v3943
        %v3946 = vld [vmem:[%s1250] sm:$0x1]
        %v3948 = vlaneseq
        %v3949 = vshrl.u32 %v3948, 7
        %v3950 = vsub.s32 0, %v3949
        %v3951 = vrot.slane %v3946, %v3950
        %v3953 = vadd.f32 %v3945, %v3951
        %v3954 = vpack.c.bf16 %v3953, %v3953
        %v3955 = vld [vmem:[%s1259] sm:$0xf]
        %v3956 = vld [vmem:[%s1259 + $0x4] sm:$0xf]
        %v3957 = vld [vmem:[%s1259 + $0x8] sm:$0xf]
        %v3958 = vld [vmem:[%s1259 + $0xc] sm:$0xf]
        %v3959 = vld [vmem:[%s1458] sm:$0x1]
        %v3961 = vlaneseq
        %v3962 = vshrl.u32 %v3961, 7
        %v3963 = vsub.s32 0, %v3962
        %v3964 = vrot.slane %v3959, %v3963
        %v3970 = vunpack.c.l.b16 %v3955
        %v3971 = vunpack.c.l.b16 %v3956
        %v3972 = vunpack.c.l.b16 %v3957
        %v3973 = vunpack.c.l.b16 %v3958
        %v3974 = vpack.c.b16 %v3971, %v3970
        %v3975 = vpack.c.b16 %v3973, %v3972
        %v3979 = vsel %vm1513, %v3954, 0
        %3981 = vmatprep.subr.bf16.mxu0 0
        %3982 = vmatpush1.bf16.msra.mxu0 %v3974
        %3983 = vmatprep.subr.bf16.mxu0 0
        %3984 = vmatpush1.bf16.msra.mxu0 %v3975
        %3985 = vmatprep.subr.bf16.mxu0 0
        %3986 = vmatpush1.bf16.msra.mxu0 0
        %3987 = vmatprep.subr.bf16.mxu0 0
        %3988 = vmatpush1.bf16.msra.mxu0 0
        %3989 = vmatprep.subr.bf16.mxu0 0
        %3990 = vmatpush1.bf16.msra.mxu0 0
        %3991 = vmatprep.subr.bf16.mxu0 0
        %3992 = vmatpush1.bf16.msra.mxu0 0
        %3993 = vmatprep.subr.bf16.mxu0 0
        %3994 = vmatpush1.bf16.msra.mxu0 0
        %3995 = vmatprep.subr.bf16.mxu0 0
        %3996 = vmatpush1.bf16.msra.mxu0 0
        %3997 = vmatprep.subr.bf16.mxu0 0
        %3998 = vmatpush1.bf16.msra.mxu0 0
        %3999 = vmatprep.subr.bf16.mxu0 0
        %4000 = vmatpush1.bf16.msra.mxu0 0
        %4001 = vmatprep.subr.bf16.mxu0 0
        %4002 = vmatpush1.bf16.msra.mxu0 0
        %4003 = vmatprep.subr.bf16.mxu0 0
        %4004 = vmatpush1.bf16.msra.mxu0 0
        %4005 = vmatprep.subr.bf16.mxu0 0
        %4006 = vmatpush1.bf16.msra.mxu0 0
        %4007 = vmatprep.subr.bf16.mxu0 0
        %4008 = vmatpush1.bf16.msra.mxu0 0
        %4009 = vmatprep.subr.bf16.mxu0 0
        %4010 = vmatpush1.bf16.msra.mxu0 0
        %4011 = vmatprep.subr.bf16.mxu0 0
        %4012 = vmatpush1.bf16.msra.mxu0 0
        %4013 = vmatprep.mubr.bf16.mxu0 0
        %4014 = vmatmul.mubr.bf16.gmra.mrb[0].mxu0 %v3979
        %v4015 = vpop.f32.mrb[0].mxu0
        %v4016 = vadd.f32 %v3964, %v4015
        %v4017 = vpop.f32.mrb[0].mxu0
        %v4018 = vpop.f32.mrb[0].mxu0
        %v4019 = vpop.f32.mrb[0].mxu0
        %4020 = vdwg.mxu0
        %v4021 = vmax.f32 %v4016, 0.0
        %v4022 = vpack.c.bf16 %v4021, %v4021
        %v4023 = vld [vmem:[%s1463] sm:$0xf]
        %v4024 = vld [vmem:[%s1463 + $0x4] sm:$0xf]
        %v4025 = vld [vmem:[%s1463 + $0x8] sm:$0xf]
        %v4026 = vld [vmem:[%s1463 + $0xc] sm:$0xf]
        %v4027 = vld [vmem:[%s1463 + $0x10] sm:$0xf]
        %v4028 = vld [vmem:[%s1463 + $0x14] sm:$0xf]
        %v4029 = vld [vmem:[%s1463 + $0x18] sm:$0xf]
        %v4030 = vld [vmem:[%s1463 + $0x1c] sm:$0xf]
        %v4031 = vld [vmem:[%s1466] sm:$0x1]
        %v4033 = vlaneseq
        %v4034 = vshrl.u32 %v4033, 7
        %v4035 = vsub.s32 0, %v4034
        %v4036 = vrot.slane %v4031, %v4035
        %v4046 = vunpack.c.l.b16 %v4023
        %v4047 = vunpack.c.l.b16 %v4024
        %v4048 = vunpack.c.l.b16 %v4025
        %v4049 = vunpack.c.l.b16 %v4026
        %v4050 = vunpack.c.l.b16 %v4027
        %v4051 = vunpack.c.l.b16 %v4028
        %v4052 = vunpack.c.l.b16 %v4029
        %v4053 = vunpack.c.l.b16 %v4030
        %v4054 = vpack.c.b16 %v4047, %v4046
        %v4055 = vpack.c.b16 %v4049, %v4048
        %v4056 = vpack.c.b16 %v4051, %v4050
        %v4057 = vpack.c.b16 %v4053, %v4052
        %vm4062 = vcmask 523264
        %v4064 = vsel %vm4062, %v4022, 0
        %4066 = vmatprep.subr.bf16.mxu0 0
        %4067 = vmatpush1.bf16.msra.mxu0 %v4054
        %4068 = vmatprep.subr.bf16.mxu0 0
        %4069 = vmatpush1.bf16.msra.mxu0 %v4055
        %4070 = vmatprep.subr.bf16.mxu0 0
        %4071 = vmatpush1.bf16.msra.mxu0 %v4056
        %4072 = vmatprep.subr.bf16.mxu0 0
        %4073 = vmatpush1.bf16.msra.mxu0 %v4057
        %4074 = vmatprep.subr.bf16.mxu0 0
        %4075 = vmatpush1.bf16.msra.mxu0 0
        %4076 = vmatprep.subr.bf16.mxu0 0
        %4077 = vmatpush1.bf16.msra.mxu0 0
        %4078 = vmatprep.subr.bf16.mxu0 0
        %4079 = vmatpush1.bf16.msra.mxu0 0
        %4080 = vmatprep.subr.bf16.mxu0 0
        %4081 = vmatpush1.bf16.msra.mxu0 0
        %4082 = vmatprep.subr.bf16.mxu0 0
        %4083 = vmatpush1.bf16.msra.mxu0 0
        %4084 = vmatprep.subr.bf16.mxu0 0
        %4085 = vmatpush1.bf16.msra.mxu0 0
        %4086 = vmatprep.subr.bf16.mxu0 0
        %4087 = vmatpush1.bf16.msra.mxu0 0
        %4088 = vmatprep.subr.bf16.mxu0 0
        %4089 = vmatpush1.bf16.msra.mxu0 0
        %4090 = vmatprep.subr.bf16.mxu0 0
        %4091 = vmatpush1.bf16.msra.mxu0 0
        %4092 = vmatprep.subr.bf16.mxu0 0
        %4093 = vmatpush1.bf16.msra.mxu0 0
        %4094 = vmatprep.subr.bf16.mxu0 0
        %4095 = vmatpush1.bf16.msra.mxu0 0
        %4096 = vmatprep.subr.bf16.mxu0 0
        %4097 = vmatpush1.bf16.msra.mxu0 0
        %4098 = vmatprep.mubr.bf16.mxu0 0
        %4099 = vmatmul.mubr.bf16.gmra.mrb[0].mxu0 %v4064
        %v4100 = vpop.f32.mrb[0].mxu0
        %v4101 = vadd.f32 %v4036, %v4100
        %v4102 = vpop.f32.mrb[0].mxu0
        %v4103 = vpop.f32.mrb[0].mxu0
        %v4104 = vpop.f32.mrb[0].mxu0
        %4105 = vdwg.mxu0
        %v4106 = vadd.f32 %v3953, %v4101
        %v4107 = vsel %vm1513, %v4106, 0.0
        %4108 = vadd.xlane.f32.xlu0 %v4107
        %v4109 = vpop.xlane.xlu0 %4108
        %v4110 = vmul.f32 %v4109, %v2665
        %v4111 = vsub.f32 %v4106, %v4110
        %v4112 = vmul.f32 %v4111, %v4111
        %v4113 = vsel %vm1513, %v4112, 0.0
        %4114 = vadd.xlane.f32.xlu0 %v4113
        %v4115 = vpop.xlane.xlu0 %4114
        %v4116 = vmul.f32 %v4115, %v2665
        %v4117 = vadd.f32 %v4116, 1e-05
        %v4118 = vrsqrt.pop %v4117
        %v4119 = vmul.f32 %v4111, %v4118
        %v4120 = vld [vmem:[%s1469] sm:$0x1]
        %v4122 = vlaneseq
        %v4123 = vshrl.u32 %v4122, 7
        %v4124 = vsub.s32 0, %v4123
        %v4125 = vrot.slane %v4120, %v4124
        %v4127 = vmul.f32 %v4119, %v4125
        %v4128 = vld [vmem:[%s1472] sm:$0x1]
        %v4130 = vlaneseq
        %v4131 = vshrl.u32 %v4130, 7
        %v4132 = vsub.s32 0, %v4131
        %v4133 = vrot.slane %v4128, %v4132
        %v4135 = vadd.f32 %v4127, %v4133
        %4136 = vst.msk [vmem:[#allocation2] sm:$0xff] %vm1513, %v4135
        %p4137 = scmp.eq.s32.totalorder %s73, 1
        // Predicated region
        $region181: #{tpu_custom_call.1} parent=115 // pred_check
          %p4138 = pneg %p4137
        $region182: #{tpu_custom_call.1} parent=115 // pred_check_branch
          %4140 = sbr.rel (%p4138) target = $region184
        $region183: #{tpu_custom_call.1} parent=115 // pred_region
          %4141 = vst.msk [vmem:[%s1421] sm:$0xff] %vm1513, %v4135
        $region184: #{tpu_custom_call.1} parent=115 // pred_fallthru
          _
        %s4142 = sand.u32 %s712, 1
        %s4143 = scalar_lea.sflag [#allocation5], %s4142
        %s4144 = sand.u32 %s712, 1
        %s4145 = smul.addr %s4144, 8
        %s4146 = scalar_lea.vmem [#allocation27], %s4145
        %s4147 = sand.u32 %s68, 1
        %s4148 = scalar_lea.sflag [#allocation29], %s4147
        %s4149 = sand.u32 %s740, 1
        %s4150 = smul.addr %s4149, 32
        %s4151 = scalar_lea.vmem [#allocation28], %s4150
        %s4152 = sand.u32 %s68, 1
        %s4153 = scalar_lea.sflag [#allocation29], %s4152
        %s4154 = sand.u32 %s768, 1
        %s4155 = smul.addr %s4154, 32
        %s4156 = scalar_lea.vmem [#allocation30], %s4155
        // Predicated region
        $region185: #{tpu_custom_call.1} parent=115 // pred_check
          %p4157 = pneg %p722
        $region186: #{tpu_custom_call.1} parent=115 // pred_check_branch
          %4159 = sbr.rel (%p4157) target = $region188
        $region187: #{tpu_custom_call.1} parent=115 // pred_region
          %s4161 = ssub.s32 128, 128
          %4162 = vsyncadd %s4143, %s4161
          %s4163 = smul.addr %s72, 128
          %s4164 = scalar_lea.hbm %s24, %s4163
          %s4166 = sshll.u32 %s4146, 4
          %s4167 = int_to_ptr.vmem [resolvable:$true] %s4166
          %4169 = dma.vmem_to_hbm [thread:$0]  %s4167, 128, %s4164, %s4143
        $region188: #{tpu_custom_call.1} parent=115 // pred_fallthru
          _
        // Predicated region
        $region189: #{tpu_custom_call.1} parent=115 // pred_check
          %p4170 = pneg %p750
        $region190: #{tpu_custom_call.1} parent=115 // pred_check_branch
          %4172 = sbr.rel (%p4170) target = $region192
        $region191: #{tpu_custom_call.1} parent=115 // pred_region
          %s4174 = ssub.s32 512, 512
          %4175 = vsyncadd %s4148, %s4174
          %s4176 = smul.addr %s72, 4
          %s4177 = smul.addr %s73, 8
          %s4178 = sadd.s32 %s4176, %s4177
          %s4179 = smul.addr %s4178, 128
          %s4180 = scalar_lea.hbm %s25, %s4179
          %s4181 = sshll.u32 %s4151, 4
          %s4182 = int_to_ptr.vmem [resolvable:$true] %s4181
          %4187 = dma.vmem_to_hbm [thread:$0]  %s4182, 512, %s4180, %s4148, 128, 128, 8
        $region192: #{tpu_custom_call.1} parent=115 // pred_fallthru
          _
        // Predicated region
        $region193: #{tpu_custom_call.1} parent=115 // pred_check
          %p4188 = pneg %p778
        $region194: #{tpu_custom_call.1} parent=115 // pred_check_branch
          %4190 = sbr.rel (%p4188) target = $region196
        $region195: #{tpu_custom_call.1} parent=115 // pred_region
          %s4192 = ssub.s32 512, 512
          %4193 = vsyncadd %s4153, %s4192
          %s4194 = smul.addr %s72, 4
          %s4195 = smul.addr %s73, 8
          %s4196 = sadd.s32 %s4194, %s4195
          %s4197 = smul.addr %s4196, 128
          %s4198 = scalar_lea.hbm %s26, %s4197
          %s4199 = sshll.u32 %s4156, 4
          %s4200 = int_to_ptr.vmem [resolvable:$true] %s4199
          %4205 = dma.vmem_to_hbm [thread:$0]  %s4200, 512, %s4198, %s4153, 128, 128, 8
        $region196: #{tpu_custom_call.1} parent=115 // pred_fallthru
          _
      $region116: #{tpu_custom_call.1} parent=5 // pred_fallthru
        _
      %p4206 = scmp.le.s32.totalorder 2, %s63
      // Predicated region
      $region197: #{tpu_custom_call.1} parent=5 // pred_check
        %p4207 = pneg %p4206
      $region198: #{tpu_custom_call.1} parent=5 // pred_check_branch
        %4209 = sbr.rel (%p4207) target = $region200
      $region199: #{tpu_custom_call.1} parent=5 // pred_region
        %s4210 = ssub.s32 %s63, 2
        // Predicated region
        $region201: #{tpu_custom_call.1} parent=199 // pred_check
          %p4211 = pneg %p728
        $region202: #{tpu_custom_call.1} parent=199 // pred_check_branch
          %4213 = sbr.rel (%p4211) target = $region204
        $region203: #{tpu_custom_call.1} parent=199 // pred_region
          %s4214 = sand.u32 %s713, 1
          %s4215 = scalar_lea.sflag [#allocation5], %s4214
          %s4216 = sand.u32 %s713, 1
          %s4217 = smul.addr %s4216, 8
          %s4218 = scalar_lea.vmem [#allocation27], %s4217
          %4219 = dma.done %s4215, 128
        $region204: #{tpu_custom_call.1} parent=199 // pred_fallthru
          _
        // Predicated region
        $region205: #{tpu_custom_call.1} parent=199 // pred_check
          %p4220 = pneg %p756
        $region206: #{tpu_custom_call.1} parent=199 // pred_check_branch
          %4222 = sbr.rel (%p4220) target = $region208
        $region207: #{tpu_custom_call.1} parent=199 // pred_region
          %s4223 = sand.u32 %s69, 1
          %s4224 = scalar_lea.sflag [#allocation29], %s4223
          %s4225 = sand.u32 %s741, 1
          %s4226 = smul.addr %s4225, 32
          %s4227 = scalar_lea.vmem [#allocation28], %s4226
          %4228 = dma.done %s4224, 512
        $region208: #{tpu_custom_call.1} parent=199 // pred_fallthru
          _
        // Predicated region
        $region209: #{tpu_custom_call.1} parent=199 // pred_check
          %p4229 = pneg %p784
        $region210: #{tpu_custom_call.1} parent=199 // pred_check_branch
          %4231 = sbr.rel (%p4229) target = $region212
        $region211: #{tpu_custom_call.1} parent=199 // pred_region
          %s4232 = sand.u32 %s69, 1
          %s4233 = scalar_lea.sflag [#allocation29], %s4232
          %s4234 = sand.u32 %s769, 1
          %s4235 = smul.addr %s4234, 32
          %s4236 = scalar_lea.vmem [#allocation30], %s4235
          %4237 = dma.done %s4233, 512
        $region212: #{tpu_custom_call.1} parent=199 // pred_fallthru
          _
      $region200: #{tpu_custom_call.1} parent=5 // pred_fallthru
        _
    $region6: #{tpu_custom_call.1} parent=1 // loop_footer
      %s67 = sadd.s32 1, %s63
    $region7: #{tpu_custom_call.1} parent=1 // loop_footer_branch
      %62 = sbr.rel target = $region3
    $region8: #{tpu_custom_call.1} parent=1 // loop_exit
      _
    %4238 = vsyncpa [#allocation4], 1
    %s4239 = scalar_lea.sflag [#allocation4], 1
    %4240 = vsyncpa %s4239, 1
    %4241 = vsyncpa [#allocation7], 1
    %s4242 = scalar_lea.sflag [#allocation7], 1
    %4243 = vsyncpa %s4242, 1
    %4244 = vsyncpa [#allocation10], 1
    %s4245 = scalar_lea.sflag [#allocation10], 1
    %4246 = vsyncpa %s4245, 1
    %4247 = vsyncpa [#allocation13], 1
    %s4248 = scalar_lea.sflag [#allocation13], 1
    %4249 = vsyncpa %s4248, 1
    %4250 = vsyncpa [#allocation16], 1
    %s4251 = scalar_lea.sflag [#allocation16], 1
    %4252 = vsyncpa %s4251, 1
    %4253 = vsyncpa [#allocation19], 1
    %s4254 = scalar_lea.sflag [#allocation19], 1
    %4255 = vsyncpa %s4254, 1
    %4256 = vsyncpa [#allocation22], 1
    %s4257 = scalar_lea.sflag [#allocation22], 1
    %4258 = vsyncpa %s4257, 1
    %4259 = vsyncpa [#allocation25], 1
    %s4260 = scalar_lea.sflag [#allocation25], 1
    %4261 = vsyncpa %s4260, 1
    %4262 = vsyncpa [#allocation5], 1
    %s4263 = scalar_lea.sflag [#allocation5], 1
    %4264 = vsyncpa %s4263, 1
    %4265 = vsyncpa [#allocation29], 1
    %s4266 = scalar_lea.sflag [#allocation29], 1
    %4267 = vsyncpa %s4266, 1

</llo_original>
